<compile_context>
chip_gen: v6e
topology: v6e:2x2x1
jax: 0.10.0
libtpu: 0.0.40
codegen_flags: <defaults>
</compile_context>

<pallas_src>
import jax
import jax.numpy as jnp
from jax import lax
from jax.experimental import pallas as pl
from jax.experimental.pallas import tpu as pltpu

KSIZE = 7
PAD = 3  # padding = 3 for kernel_size = 7


def _conv7x7_as_dense(wconv, H, W):
    """Precompute the (2, H*W, H*W) dense operator of the 2-in/1-out 'same' conv.

    out_flat[o] = sum_ic sum_i maps_flat[ic, i] * M[ic, i, o]
    reproduces PyTorch nn.Conv2d(2, 1, 7, padding=3, bias=False) exactly
    (cross-correlation, zero padding).  Pure parameter setup in plain JAX.
    """
    k = wconv.shape[-1]
    pad = (k - 1) // 2
    dy = jnp.arange(H)[:, None] - jnp.arange(H)[None, :] + pad      # (H_in, H_out)
    dx = jnp.arange(W)[:, None] - jnp.arange(W)[None, :] + pad      # (W_in, W_out)
    vy = (dy >= 0) & (dy < k)
    vx = (dx >= 0) & (dx < k)
    dyc = jnp.clip(dy, 0, k - 1)
    dxc = jnp.clip(dx, 0, k - 1)
    w = wconv[0].astype(jnp.float32)                                 # (2, k, k)
    m = w[:, dyc[:, None, :, None], dxc[None, :, None, :]]           # (2,H,W,H,W)
    valid = (vy[:, None, :, None] & vx[None, :, None, :])[None]
    m = jnp.where(valid, m, 0.0)
    return m.reshape(2, H * W, H * W)


def cbam_kernel(x_ref, w1_ref, w2_ref, cm_ref, o_ref):
    # x_ref : (Bt, C, HW) VMEM, lane axis = HW (multiple of 128 -> unmasked vst)
    # w1_ref: (Cr, C)     VMEM  (SE fc1 weight, PyTorch (out, in) layout, f32)
    # w2_ref: (C, Cr)     VMEM  (SE fc2 weight, f32)
    # cm_ref: (2*HW, HW)  VMEM  (fused dense operator of the 7x7 'same' conv)
    # o_ref : (Bt, C, HW) VMEM
    _, c, hw = x_ref.shape
    cr = w1_ref.shape[0]

    # ---------------- Channel attention (SEBlock) ----------------
    # f32-accumulated global average pool straight from the input block (no
    # separate full-size f32 copy of x kept live alongside x_ca).
    ch_avg = jnp.sum(x_ref[...].astype(jnp.float32), axis=-1) * (1.0 / hw)   # (Bt, C)
    w1 = w1_ref[...]                                      # (Cr, C)
    w2 = w2_ref[...]                                      # (C, Cr)
    if c >= 128 and cr >= 8:
        # Production-sized SE: two tiny MXU matmuls (NT contraction on the
        # weights' "in" axis, so no wrapper-side transpose needed).
        nt = (((1,), (1,)), ((), ()))
        h = jnp.maximum(
            lax.dot_general(ch_avg, w1, nt, preferred_element_type=jnp.float32,
                            precision=lax.Precision.HIGHEST), 0.0)           # (Bt, Cr)
        yc = jax.nn.sigmoid(
            lax.dot_general(h, w2, nt, preferred_element_type=jnp.float32,
                            precision=lax.Precision.HIGHEST))                # (Bt, C)
    else:
        # Tiny-Cr SE (e.g. Cr=2): exact-f32 VPU weighted sums; avoids MXU
        # push/pop latency and heavily masked Cr-wide lane vregs.
        h = jnp.maximum(jnp.sum(ch_avg[:, None, :] * w1[None, :, :], axis=-1), 0.0)
        yc = jax.nn.sigmoid(jnp.sum(h[:, None, :] * w2[None, :, :], axis=-1))

    # The only full-size f32 temporary: channel-attended activations.
    x_ca = x_ref[...].astype(jnp.float32) * yc[:, :, None]            # (Bt, C, HW)

    # ---------------- Spatial attention ----------------
    # TODO(synk): for large C, stream x in C-chunks (running sum / running max)
    # instead of holding the full (Bt, C, HW) x_ca live.
    avg_c = jnp.mean(x_ca, axis=1)                                    # (Bt, HW)
    max_c = jnp.max(x_ca, axis=1)                                     # (Bt, HW)
    pooled = jnp.concatenate([avg_c, max_c], axis=-1)                 # (Bt, 2*HW)
    # Single fused MXU matmul for the 7x7 'same' conv over both pooled maps.
    att = jax.nn.sigmoid(
        jnp.dot(pooled, cm_ref[...], preferred_element_type=jnp.float32,
                precision=lax.Precision.HIGHEST))                     # (Bt, HW)

    o_ref[...] = (x_ca * att[:, None, :]).astype(o_ref.dtype)


def _chip_profile():
    """Returns (vmem_budget_bytes, has_two_tensorcores) with safe fallbacks."""
    kind = ""
    try:
        kind = jax.devices()[0].device_kind.lower()
    except Exception:
        pass
    is_v7 = "v7" in kind
    if is_v7:
        budget = 40 << 20      # v7x: 64 MiB physical per TC -> leave headroom
    elif kind:
        budget = 64 << 20      # v5e/v6e: 128 MiB physical; scoped default is
                               # only 16/32 MiB, so raise the limit explicitly
    else:
        budget = 32 << 20      # unknown backend: stay conservative
    return budget, is_v7


def cbam_pallas(x, w1, w2, wconv, bt=None):
    """x: (B, C, H, W); w1: (Cr, C); w2: (C, Cr); wconv: (1, 2, 7, 7)."""
    B, C, H, W = x.shape
    HW = H * W
    Cr = w1.shape[0]
    budget, two_cores = _chip_profile()

    cm_bytes = 2 * HW * HW * 4                # fused (2*HW, HW) f32 operator
    # TODO(synk): for large H*W the dense operator (16*HW^2 bytes, double-
    # buffered) dominates VMEM and does HW/49x redundant MACs; switch to a
    # banded per-row-offset matmul or 49x pltpu.roll+mask FMAs instead.
    if 2 * cm_bytes > budget // 2:
        raise NotImplementedError(
            f"dense 7x7 conv operator too large for VMEM at H*W={HW}; "
            "needs the banded/roll spatial-conv formulation")

    def footprint(bt_):
        blk = bt_ * C * HW
        f = 2 * blk * x.dtype.itemsize        # double-buffered input block
        f += 2 * blk * x.dtype.itemsize       # double-buffered output block
        f += blk * 4                          # in-kernel f32 x_ca temporary
        f += 2 * cm_bytes                     # conv operator (double-buffered)
        f += 2 * (w1.size + w2.size) * 4      # SE weights
        return f + (2 << 20)                  # pipeline / temporary slack

    if bt is None:
        divisors = [d for d in range(1, B + 1) if B % d == 0]
        fitting = [d for d in divisors if footprint(d) <= budget] or [1]
        if two_cores:
            # v7x has 2 TensorCores: keep >= 2 "parallel" grid steps if we can.
            multi = [d for d in fitting if B // d >= 2]
            bt = max(multi) if multi else max(fitting)
        else:
            # v5e/v6e: single TensorCore -> grid is a serial loop; take the
            # largest tile that fits (fewer steps, less per-step overhead).
            bt = max(fitting)
    assert B % bt == 0

    cm = _conv7x7_as_dense(wconv, H, W).reshape(2 * HW, HW)   # fused operator
    x2 = x.reshape(B, C, HW)                                  # lane-dense layout

    vmem_limit = int(min(budget, max(footprint(bt), 32 << 20)))

    out = pl.pallas_call(
        cbam_kernel,
        out_shape=jax.ShapeDtypeStruct((B, C, HW), x.dtype),
        grid=(B // bt,),
        in_specs=[
            pl.BlockSpec((bt, C, HW), lambda b: (b, 0, 0)),   # x (lane-dense)
            # Grid-invariant operands: constant index maps, so Pallas DMAs them
            # only once across the whole grid.
            pl.BlockSpec((Cr, C), lambda b: (0, 0)),          # SE fc1 weight
            pl.BlockSpec((C, Cr), lambda b: (0, 0)),          # SE fc2 weight
            pl.BlockSpec((2 * HW, HW), lambda b: (0, 0)),     # fused conv operator
        ],
        out_specs=pl.BlockSpec((bt, C, HW), lambda b: (b, 0, 0)),
        compiler_params=pltpu.CompilerParams(
            dimension_semantics=("parallel",),
            vmem_limit_bytes=vmem_limit),
    )(x2, w1.astype(jnp.float32), w2.astype(jnp.float32), cm)
    return out.reshape(B, C, H, W)


def cbam_ref(x, w1, w2, wconv):
    """Pure-JAX reference matching the PyTorch forward exactly."""
    x = x.astype(jnp.float32)
    avg = jnp.mean(x, axis=(2, 3))                                        # (B, C)
    h = jnp.maximum(jnp.dot(avg, w1.T, precision=lax.Precision.HIGHEST), 0.0)
    y = jax.nn.sigmoid(jnp.dot(h, w2.T, precision=lax.Precision.HIGHEST))
    x_ca = x * y[:, :, None, None]
    avg_c = jnp.mean(x_ca, axis=1, keepdims=True)
    max_c = jnp.max(x_ca, axis=1, keepdims=True)
    cat = jnp.concatenate([avg_c, max_c], axis=1)                         # (B, 2, H, W)
    att = lax.conv_general_dilated(
        cat, wconv, window_strides=(1, 1), padding=[(PAD, PAD), (PAD, PAD)],
        dimension_numbers=("NCHW", "OIHW", "NCHW"),
        precision=lax.Precision.HIGHEST)
    att = jax.nn.sigmoid(att)
    return x_ca * att


if __name__ == "__main__":
    # channels must be >= reduction so that channels // reduction >= 1
    B, C, H, W = 2, 32, 16, 16
    reduction = 16
    Cr = C // reduction

    key = jax.random.PRNGKey(0)
    kx, k1, k2, kc = jax.random.split(key, 4)
    x = jax.random.normal(kx, (B, C, H, W), jnp.float32)
    w1 = 0.2 * jax.random.normal(k1, (Cr, C), jnp.float32)          # Linear(C, C//r).weight
    w2 = 0.2 * jax.random.normal(k2, (C, Cr), jnp.float32)          # Linear(C//r, C).weight
    wconv = 0.1 * jax.random.normal(kc, (1, 2, KSIZE, KSIZE), jnp.float32)  # Conv2d(2,1,7).weight

    out = jax.block_until_ready(cbam_pallas(x, w1, w2, wconv))
    ref = cbam_ref(x, w1, w2, wconv)

    assert out.shape == x.shape and out.dtype == x.dtype
    max_err = float(jnp.max(jnp.abs(out - ref)))
    assert jnp.allclose(out, ref, atol=1e-4, rtol=1e-4), f"max_err={max_err}"
    print("KERNEL_OK")
</pallas_src>

<mosaic_0001>
module attributes {stable_mosaic.version = 11 : i64} {
  func.func @cbam_kernel(%arg0: i32, %arg1: memref<2x32x256xf32, #tpu.memory_space<vmem>>, %arg2: memref<2x32xf32, #tpu.memory_space<vmem>>, %arg3: memref<32x2xf32, #tpu.memory_space<vmem>>, %arg4: memref<512x256xf32, #tpu.memory_space<vmem>>, %arg5: memref<2x32x256xf32, #tpu.memory_space<vmem>>) attributes {dimension_semantics = [#tpu.dimension_semantics<parallel>], iteration_bounds = array<i64: 1>, scalar_prefetch = 0 : i64, scratch_operands = 0 : i64, tpu.core_type = #tpu.core_type<tc>, window_params = [{transform_indices = @transform_0, window_bounds = array<i64: 2, 32, 256>}, {pipeline_mode = #tpu.pipeline_mode<synchronous>, transform_indices = @transform_1, window_bounds = array<i64: 2, 32>}, {pipeline_mode = #tpu.pipeline_mode<synchronous>, transform_indices = @transform_2, window_bounds = array<i64: 32, 2>}, {pipeline_mode = #tpu.pipeline_mode<synchronous>, transform_indices = @transform_3, window_bounds = array<i64: 512, 256>}, {transform_indices = @transform_4, window_bounds = array<i64: 2, 32, 256>}]} {
    %c0 = arith.constant 0 : index
    %c0_0 = arith.constant 0 : index
    %c0_1 = arith.constant 0 : index
    %0 = vector.load %arg1[%c0, %c0_0, %c0_1] : memref<2x32x256xf32, #tpu.memory_space<vmem>>, vector<2x32x256xf32>
    %cst = arith.constant dense<0.000000e+00> : vector<2x32xf32>
    %1 = vector.multi_reduction <add>, %0, %cst [2] : vector<2x32x256xf32> to vector<2x32xf32>
    %cst_2 = arith.constant 3.906250e-03 : f32
    %2 = vector.broadcast %cst_2 : f32 to vector<2x32xf32>
    %3 = arith.mulf %1, %2 : vector<2x32xf32>
    %c0_3 = arith.constant 0 : index
    %c0_4 = arith.constant 0 : index
    %4 = vector.load %arg2[%c0_3, %c0_4] : memref<2x32xf32, #tpu.memory_space<vmem>>, vector<2x32xf32>
    %c0_5 = arith.constant 0 : index
    %c0_6 = arith.constant 0 : index
    %5 = vector.load %arg3[%c0_5, %c0_6] : memref<32x2xf32, #tpu.memory_space<vmem>>, vector<32x2xf32>
    %6 = vector.shape_cast %3 : vector<2x32xf32> to vector<2x1x32xf32>
    %7 = vector.shape_cast %4 : vector<2x32xf32> to vector<1x2x32xf32>
    %8 = vector.broadcast %6 : vector<2x1x32xf32> to vector<2x2x32xf32>
    %9 = vector.broadcast %7 : vector<1x2x32xf32> to vector<2x2x32xf32>
    %10 = arith.mulf %8, %9 : vector<2x2x32xf32>
    %cst_7 = arith.constant dense<0.000000e+00> : vector<2x2xf32>
    %11 = vector.multi_reduction <add>, %10, %cst_7 [2] : vector<2x2x32xf32> to vector<2x2xf32>
    %cst_8 = arith.constant 0.000000e+00 : f32
    %12 = vector.broadcast %cst_8 : f32 to vector<2x2xf32>
    %13 = arith.maximumf %11, %12 : vector<2x2xf32>
    %14 = vector.shape_cast %13 : vector<2x2xf32> to vector<2x1x2xf32>
    %15 = vector.shape_cast %5 : vector<32x2xf32> to vector<1x32x2xf32>
    %16 = vector.broadcast %14 : vector<2x1x2xf32> to vector<2x32x2xf32>
    %17 = vector.broadcast %15 : vector<1x32x2xf32> to vector<2x32x2xf32>
    %18 = arith.mulf %16, %17 : vector<2x32x2xf32>
    %cst_9 = arith.constant dense<0.000000e+00> : vector<2x32xf32>
    %19 = vector.multi_reduction <add>, %18, %cst_9 [2] : vector<2x32x2xf32> to vector<2x32xf32>
    %20 = arith.negf %19 : vector<2x32xf32>
    %21 = math.exp %20 : vector<2x32xf32>
    %cst_10 = arith.constant 1.000000e+00 : f32
    %22 = vector.broadcast %cst_10 : f32 to vector<2x32xf32>
    %23 = arith.addf %22, %21 : vector<2x32xf32>
    %24 = arith.divf %22, %23 : vector<2x32xf32>
    %c0_11 = arith.constant 0 : index
    %c0_12 = arith.constant 0 : index
    %c0_13 = arith.constant 0 : index
    %25 = vector.load %arg1[%c0_11, %c0_12, %c0_13] : memref<2x32x256xf32, #tpu.memory_space<vmem>>, vector<2x32x256xf32>
    %26 = vector.shape_cast %24 : vector<2x32xf32> to vector<2x32x1xf32>
    %27 = vector.broadcast %26 : vector<2x32x1xf32> to vector<2x32x256xf32>
    %28 = arith.mulf %25, %27 : vector<2x32x256xf32>
    %cst_14 = arith.constant dense<0.000000e+00> : vector<2x256xf32>
    %29 = vector.multi_reduction <add>, %28, %cst_14 [1] : vector<2x32x256xf32> to vector<2x256xf32>
    %cst_15 = arith.constant 3.200000e+01 : f32
    %30 = vector.broadcast %cst_15 : f32 to vector<2x256xf32>
    %31 = arith.divf %29, %30 : vector<2x256xf32>
    %cst_16 = arith.constant dense<0xFF800000> : vector<2x256xf32>
    %32 = vector.multi_reduction <maximumf>, %28, %cst_16 [1] : vector<2x32x256xf32> to vector<2x256xf32>
    %33 = tpu.concatenate %31, %32 in 1 : vector<2x256xf32>, vector<2x256xf32> -> vector<2x512xf32>
    %c0_17 = arith.constant 0 : index
    %c0_18 = arith.constant 0 : index
    %34 = vector.load %arg4[%c0_17, %c0_18] : memref<512x256xf32, #tpu.memory_space<vmem>>, vector<512x256xf32>
    %cst_19 = arith.constant dense<0.000000e+00> : vector<2x256xf32>
    %35 = tpu.matmul %33, %34, %cst_19 {dimension_numbers = #tpu.dot_dimension_numbers<[1], [0], [0], [1], [0, 0, 1, 1], [], []>, precision = #tpu.contract_precision<fp32>} : vector<2x512xf32>, vector<512x256xf32>, vector<2x256xf32> -> vector<2x256xf32>
    %36 = arith.negf %35 : vector<2x256xf32>
    %37 = math.exp %36 : vector<2x256xf32>
    %cst_20 = arith.constant 1.000000e+00 : f32
    %38 = vector.broadcast %cst_20 : f32 to vector<2x256xf32>
    %39 = arith.addf %38, %37 : vector<2x256xf32>
    %40 = arith.divf %38, %39 : vector<2x256xf32>
    %41 = vector.shape_cast %40 : vector<2x256xf32> to vector<2x1x256xf32>
    %42 = vector.broadcast %41 : vector<2x1x256xf32> to vector<2x32x256xf32>
    %43 = arith.mulf %28, %42 : vector<2x32x256xf32>
    %c0_21 = arith.constant 0 : index
    %c0_22 = arith.constant 0 : index
    %c0_23 = arith.constant 0 : index
    %44 = vector.load %arg5[%c0_21, %c0_22, %c0_23] : memref<2x32x256xf32, #tpu.memory_space<vmem>>, vector<2x32x256xf32>
    tpu.vector_store %arg5[%c0_21, %c0_22, %c0_23], %43 {strides = array<i32>} : memref<2x32x256xf32, #tpu.memory_space<vmem>>, vector<2x32x256xf32>,
    return
  }
  func.func @transform_0(%arg0: i32) -> (i32, i32, i32) {
    %c0_i32 = arith.constant 0 : i32
    %c0_i32_0 = arith.constant 0 : i32
    %c0_i32_1 = arith.constant 0 : i32
    return %arg0, %c0_i32, %c0_i32_0 : i32, i32, i32
  }
  func.func @transform_1(%arg0: i32) -> (i32, i32) {
    %c0_i32 = arith.constant 0 : i32
    %c0_i32_0 = arith.constant 0 : i32
    %c0_i32_1 = arith.constant 0 : i32
    return %c0_i32, %c0_i32_0 : i32, i32
  }
  func.func @transform_2(%arg0: i32) -> (i32, i32) {
    %c0_i32 = arith.constant 0 : i32
    %c0_i32_0 = arith.constant 0 : i32
    %c0_i32_1 = arith.constant 0 : i32
    return %c0_i32, %c0_i32_0 : i32, i32
  }
  func.func @transform_3(%arg0: i32) -> (i32, i32) {
    %c0_i32 = arith.constant 0 : i32
    %c0_i32_0 = arith.constant 0 : i32
    %c0_i32_1 = arith.constant 0 : i32
    return %c0_i32, %c0_i32_0 : i32, i32
  }
  func.func @transform_4(%arg0: i32) -> (i32, i32, i32) {
    %c0_i32 = arith.constant 0 : i32
    %c0_i32_0 = arith.constant 0 : i32
    %c0_i32_1 = arith.constant 0 : i32
    return %arg0, %c0_i32, %c0_i32_0 : i32, i32, i32
  }
}

</mosaic_0001>

<llo_original>
// kernel: tpu_custom_call.1
$region0: #{tpu_custom_call.1}
  #allocation0 [shape = 'u32[]', space=smem, size = 0x4, offset = 0x4, fixed_abs, tag = 'smem constant byte address 0x4 - core index']
  #allocation1 [shape = 'u32[144,128]{1,0:T(1,128)}', space=vmem, size = 0x12000, scoped, tag = 'internal scratch']
  %s0 = inlined_call_operand.hbm [shape: f32[2,32,256], index: 0, kind: input, shape index: {}]
  %s1 = inlined_call_operand.vmem [shape: f32[2,32], index: 1, kind: input, shape index: {}]
  %s2 = inlined_call_operand.vmem [shape: f32[32,2], index: 2, kind: input, shape index: {}]
  %s3 = inlined_call_operand.hbm [shape: f32[512,256], index: 3, kind: input, shape index: {}]
  %s4 = inlined_call_operand.hbm [shape: f32[2,32,256], index: 4, kind: output, shape index: {}]
  %s5 = sld [smem:[#allocation0]]
  $region34: #{tpu_custom_call.1} parent=0
    _
  %s7 = ssub.s32 1, %s5
  %s8 = scalar_select 0, %s7, %s5
  $region1: #{tpu_custom_call.1} parent=0
    #allocation2 [shape = 'u8[65536]{0}', space=vmem, size = 0x10000, scoped, tag = 'input window, operand 0, single buffered']
    #allocation3 [shape = 's32[1]{0}', space=sflag, size = 0x4, scoped, tag = 'scoped memory for tpu_custom_call.1']
    #allocation4 [shape = 's32[1]{0}', space=sflag, size = 0x4, scoped, tag = 'scoped memory for tpu_custom_call.1']
    #allocation5 [shape = 'u8[524288]{0}', space=vmem, size = 0x80000, scoped, tag = 'input window, operand 3, single buffered']
    #allocation6 [shape = 's32[1]{0}', space=sflag, size = 0x4, scoped, tag = 'scoped memory for tpu_custom_call.1']
    #allocation7 [shape = 'u8[65536]{0}', space=vmem, size = 0x10000, scoped, tag = 'output window, operand 0, single buffered']
    %9 = vsyncpa [#allocation3], 0
    %10 = vsyncpa [#allocation6], 0
    %11 = vsyncpa [#allocation4], 0
    // Predicated region
    $region2: #{tpu_custom_call.1} parent=1 // pred_check
      _
    $region3: #{tpu_custom_call.1} parent=1 // pred_check_branch
      %13 = sbr.rel (0) target = $region5
    $region4: #{tpu_custom_call.1} parent=1 // pred_region
      %s15 = ssub.s32 2048, 2048
      %16 = vsyncadd [#allocation3], %s15
      %s17 = sshll.u32 [#allocation2], 4
      %s18 = int_to_ptr.vmem [resolvable:$true] %s17
      %23 = dma.hbm_to_vmem [thread:$0]  %s0, 2048, %s18, [#allocation3], 256, 256, 16
    $region5: #{tpu_custom_call.1} parent=1 // pred_fallthru
      _
    // Predicated region
    $region6: #{tpu_custom_call.1} parent=1 // pred_check
      _
    $region7: #{tpu_custom_call.1} parent=1 // pred_check_branch
      %25 = sbr.rel (0) target = $region9
    $region8: #{tpu_custom_call.1} parent=1 // pred_region
      _
    $region9: #{tpu_custom_call.1} parent=1 // pred_fallthru
      _
    // Predicated region
    $region10: #{tpu_custom_call.1} parent=1 // pred_check
      _
    $region11: #{tpu_custom_call.1} parent=1 // pred_check_branch
      %27 = sbr.rel (0) target = $region13
    $region12: #{tpu_custom_call.1} parent=1 // pred_region
      _
    $region13: #{tpu_custom_call.1} parent=1 // pred_fallthru
      _
    // Predicated region
    $region14: #{tpu_custom_call.1} parent=1 // pred_check
      _
    $region15: #{tpu_custom_call.1} parent=1 // pred_check_branch
      %29 = sbr.rel (0) target = $region17
    $region16: #{tpu_custom_call.1} parent=1 // pred_region
      %s31 = ssub.s32 16384, 16384
      %32 = vsyncadd [#allocation6], %s31
      %s33 = sshll.u32 [#allocation5], 4
      %s34 = int_to_ptr.vmem [resolvable:$true] %s33
      %39 = dma.hbm_to_vmem [thread:$0]  %s3, 16384, %s34, [#allocation6], 256, 256, 16
    $region17: #{tpu_custom_call.1} parent=1 // pred_fallthru
      _
    // Predicated region
    $region18: #{tpu_custom_call.1} parent=1 // pred_check
      _
    $region19: #{tpu_custom_call.1} parent=1 // pred_check_branch
      %41 = sbr.rel (0) target = $region21
    $region20: #{tpu_custom_call.1} parent=1 // pred_region
      %42 = dma.done [#allocation3], 2048
    $region21: #{tpu_custom_call.1} parent=1 // pred_fallthru
      _
    // Predicated region
    $region22: #{tpu_custom_call.1} parent=1 // pred_check
      _
    $region23: #{tpu_custom_call.1} parent=1 // pred_check_branch
      %44 = sbr.rel (0) target = $region25
    $region24: #{tpu_custom_call.1} parent=1 // pred_region
      %45 = dma.done [#allocation6], 16384
    $region25: #{tpu_custom_call.1} parent=1 // pred_fallthru
      _
    %v46 = vld [vmem:[#allocation2] sm:$0xff]
    %v47 = vld [vmem:[#allocation2 + $0x8] sm:$0xff]
    %v48 = vld [vmem:[#allocation2 + $0x10] sm:$0xff]
    %v49 = vld [vmem:[#allocation2 + $0x18] sm:$0xff]
    %v50 = vld [vmem:[#allocation2 + $0x20] sm:$0xff]
    %v51 = vld [vmem:[#allocation2 + $0x28] sm:$0xff]
    %v52 = vld [vmem:[#allocation2 + $0x30] sm:$0xff]
    %v53 = vld [vmem:[#allocation2 + $0x38] sm:$0xff]
    %v54 = vld [vmem:[#allocation2 + $0x40] sm:$0xff]
    %v55 = vld [vmem:[#allocation2 + $0x48] sm:$0xff]
    %v56 = vld [vmem:[#allocation2 + $0x50] sm:$0xff]
    %v57 = vld [vmem:[#allocation2 + $0x58] sm:$0xff]
    %v58 = vld [vmem:[#allocation2 + $0x60] sm:$0xff]
    %v59 = vld [vmem:[#allocation2 + $0x68] sm:$0xff]
    %v60 = vld [vmem:[#allocation2 + $0x70] sm:$0xff]
    %v61 = vld [vmem:[#allocation2 + $0x78] sm:$0xff]
    %v62 = vadd.f32 %v46, %v47
    %63 = vadd.xlane.f32.xlu0 %v62
    %v64 = vpop.xlane.xlu0 %63
    %v65 = vadd.f32 %v48, %v49
    %66 = vadd.xlane.f32.xlu0 %v65
    %v67 = vpop.xlane.xlu0 %66
    %v68 = vadd.f32 %v50, %v51
    %69 = vadd.xlane.f32.xlu0 %v68
    %v70 = vpop.xlane.xlu0 %69
    %v71 = vadd.f32 %v52, %v53
    %72 = vadd.xlane.f32.xlu0 %v71
    %v73 = vpop.xlane.xlu0 %72
    %v74 = vadd.f32 %v54, %v55
    %75 = vadd.xlane.f32.xlu0 %v74
    %v76 = vpop.xlane.xlu0 %75
    %v77 = vadd.f32 %v56, %v57
    %78 = vadd.xlane.f32.xlu0 %v77
    %v79 = vpop.xlane.xlu0 %78
    %v80 = vadd.f32 %v58, %v59
    %81 = vadd.xlane.f32.xlu0 %v80
    %v82 = vpop.xlane.xlu0 %81
    %v83 = vadd.f32 %v60, %v61
    %84 = vadd.xlane.f32.xlu0 %v83
    %v85 = vpop.xlane.xlu0 %84
    %v86 = vmul.f32 %v64, 0.00390625
    %v87 = vmul.f32 %v67, 0.00390625
    %v88 = vmul.f32 %v70, 0.00390625
    %v89 = vmul.f32 %v73, 0.00390625
    %v90 = vmul.f32 %v76, 0.00390625
    %v91 = vmul.f32 %v79, 0.00390625
    %v92 = vmul.f32 %v82, 0.00390625
    %v93 = vmul.f32 %v85, 0.00390625
    %v94 = vld [vmem:[%s1] sm:$0x3]
    %v95 = vld [vmem:[%s2] sm:$0xff]
    %v96 = vld [vmem:[%s2 + $0x8] sm:$0xff]
    %v97 = vld [vmem:[%s2 + $0x10] sm:$0xff]
    %v98 = vld [vmem:[%s2 + $0x18] sm:$0xff]
    %v100 = vlaneseq
    %v101 = vshrl.u32 %v100, 7
    %v102 = vsub.s32 0, %v101
    %v103 = vrot.slane %v94, %v102
    %105 = vbcast.lane.b32.xlu0 %v103, 256
    %v106 = vpop.permute.xlu0 %105
    %s108 = sor.u32 256, 8
    %109 = vbcast.lane.b32.xlu0 %v103, %s108
    %v110 = vpop.permute.xlu0 %109
    %s112 = sor.u32 256, 16
    %113 = vbcast.lane.b32.xlu0 %v103, %s112
    %v114 = vpop.permute.xlu0 %113
    %s116 = sor.u32 256, 24
    %117 = vbcast.lane.b32.xlu0 %v103, %s116
    %v118 = vpop.permute.xlu0 %117
    %v119 = vlaneseq
    %v120 = vshrl.u32 %v119, 7
    %v121 = vsub.s32 1, %v120
    %v122 = vrot.slane %v94, %v121
    %124 = vbcast.lane.b32.xlu0 %v122, 256
    %v125 = vpop.permute.xlu0 %124
    %s127 = sor.u32 256, 8
    %128 = vbcast.lane.b32.xlu0 %v122, %s127
    %v129 = vpop.permute.xlu0 %128
    %s131 = sor.u32 256, 16
    %132 = vbcast.lane.b32.xlu0 %v122, %s131
    %v133 = vpop.permute.xlu0 %132
    %s135 = sor.u32 256, 24
    %136 = vbcast.lane.b32.xlu0 %v122, %s135
    %v137 = vpop.permute.xlu0 %136
    %v146 = vmul.f32 %v86, %v106
    %v147 = vmul.f32 %v87, %v110
    %v148 = vmul.f32 %v88, %v114
    %v149 = vmul.f32 %v89, %v118
    %v150 = vmul.f32 %v86, %v125
    %v151 = vmul.f32 %v87, %v129
    %v152 = vmul.f32 %v88, %v133
    %v153 = vmul.f32 %v89, %v137
    %v154 = vmul.f32 %v90, %v106
    %v155 = vmul.f32 %v91, %v110
    %v156 = vmul.f32 %v92, %v114
    %v157 = vmul.f32 %v93, %v118
    %v158 = vmul.f32 %v90, %v125
    %v159 = vmul.f32 %v91, %v129
    %v160 = vmul.f32 %v92, %v133
    %v161 = vmul.f32 %v93, %v137
    %178 = vset.pattern.permute.xlu0 0
    %179 = vperm.xlu0 %178, %v146
    %v180 = vpop.permute.xlu0 %179
    %181 = vset.pattern.permute.xlu0 0
    %182 = vperm.xlu0 %181, %v147
    %v183 = vpop.permute.xlu0 %182
    %184 = vset.pattern.permute.xlu0 0
    %185 = vperm.xlu0 %184, %v148
    %v186 = vpop.permute.xlu0 %185
    %187 = vset.pattern.permute.xlu0 0
    %188 = vperm.xlu0 %187, %v149
    %v189 = vpop.permute.xlu0 %188
    %190 = vset.pattern.permute.xlu0 0
    %191 = vperm.xlu0 %190, %v150
    %v192 = vpop.permute.xlu0 %191
    %193 = vset.pattern.permute.xlu0 0
    %194 = vperm.xlu0 %193, %v151
    %v195 = vpop.permute.xlu0 %194
    %196 = vset.pattern.permute.xlu0 0
    %197 = vperm.xlu0 %196, %v152
    %v198 = vpop.permute.xlu0 %197
    %199 = vset.pattern.permute.xlu0 0
    %200 = vperm.xlu0 %199, %v153
    %v201 = vpop.permute.xlu0 %200
    %202 = vset.pattern.permute.xlu0 0
    %203 = vperm.xlu0 %202, %v154
    %v204 = vpop.permute.xlu0 %203
    %205 = vset.pattern.permute.xlu0 0
    %206 = vperm.xlu0 %205, %v155
    %v207 = vpop.permute.xlu0 %206
    %208 = vset.pattern.permute.xlu0 0
    %209 = vperm.xlu0 %208, %v156
    %v210 = vpop.permute.xlu0 %209
    %211 = vset.pattern.permute.xlu0 0
    %212 = vperm.xlu0 %211, %v157
    %v213 = vpop.permute.xlu0 %212
    %214 = vset.pattern.permute.xlu0 0
    %215 = vperm.xlu0 %214, %v158
    %v216 = vpop.permute.xlu0 %215
    %217 = vset.pattern.permute.xlu0 0
    %218 = vperm.xlu0 %217, %v159
    %v219 = vpop.permute.xlu0 %218
    %220 = vset.pattern.permute.xlu0 0
    %221 = vperm.xlu0 %220, %v160
    %v222 = vpop.permute.xlu0 %221
    %223 = vset.pattern.permute.xlu0 0
    %224 = vperm.xlu0 %223, %v161
    %v225 = vpop.permute.xlu0 %224
    %v226 = vlaneseq
    %v227 = vand.u32 %v226, 127
    %v228 = vlaneseq
    %v229 = vshrl.u32 %v228, 7
    %v230 = vsub.s32 %v227, %v229
    %v231 = vrot.slane %v180, %v230
    %v232 = vadd.s32 %v227, 4294967288
    %v233 = vlaneseq
    %v234 = vshrl.u32 %v233, 7
    %v235 = vsub.s32 %v232, %v234
    %v236 = vrot.slane %v183, %v235
    %vm237 = vcmask 130112
    %v238 = vsel %vm237, %v236, %v231
    %v239 = vadd.s32 %v227, 4294967280
    %v240 = vlaneseq
    %v241 = vshrl.u32 %v240, 7
    %v242 = vsub.s32 %v239, %v241
    %v243 = vrot.slane %v186, %v242
    %vm244 = vcmask 195712
    %v245 = vsel %vm244, %v243, %v238
    %v246 = vadd.s32 %v227, 4294967272
    %v247 = vlaneseq
    %v248 = vshrl.u32 %v247, 7
    %v249 = vsub.s32 %v246, %v248
    %v250 = vrot.slane %v189, %v249
    %vm251 = vcmask 261312
    %v252 = vsel %vm251, %v250, %v245
    %v253 = vlaneseq
    %v254 = vshrl.u32 %v253, 7
    %v255 = vsub.s32 %v227, %v254
    %v256 = vrot.slane %v192, %v255
    %v257 = vlaneseq
    %v258 = vshrl.u32 %v257, 7
    %v259 = vsub.s32 %v232, %v258
    %v260 = vrot.slane %v195, %v259
    %v261 = vsel %vm237, %v260, %v256
    %v262 = vlaneseq
    %v263 = vshrl.u32 %v262, 7
    %v264 = vsub.s32 %v239, %v263
    %v265 = vrot.slane %v198, %v264
    %v266 = vsel %vm244, %v265, %v261
    %v267 = vlaneseq
    %v268 = vshrl.u32 %v267, 7
    %v269 = vsub.s32 %v246, %v268
    %v270 = vrot.slane %v201, %v269
    %v271 = vsel %vm251, %v270, %v266
    %v272 = vlaneseq
    %v273 = vshrl.u32 %v272, 7
    %v274 = vsub.s32 %v227, %v273
    %v275 = vrot.slane %v204, %v274
    %v276 = vlaneseq
    %v277 = vshrl.u32 %v276, 7
    %v278 = vsub.s32 %v232, %v277
    %v279 = vrot.slane %v207, %v278
    %v280 = vsel %vm237, %v279, %v275
    %v281 = vlaneseq
    %v282 = vshrl.u32 %v281, 7
    %v283 = vsub.s32 %v239, %v282
    %v284 = vrot.slane %v210, %v283
    %v285 = vsel %vm244, %v284, %v280
    %v286 = vlaneseq
    %v287 = vshrl.u32 %v286, 7
    %v288 = vsub.s32 %v246, %v287
    %v289 = vrot.slane %v213, %v288
    %v290 = vsel %vm251, %v289, %v285
    %v291 = vlaneseq
    %v292 = vshrl.u32 %v291, 7
    %v293 = vsub.s32 %v227, %v292
    %v294 = vrot.slane %v216, %v293
    %v295 = vlaneseq
    %v296 = vshrl.u32 %v295, 7
    %v297 = vsub.s32 %v232, %v296
    %v298 = vrot.slane %v219, %v297
    %v299 = vsel %vm237, %v298, %v294
    %v300 = vlaneseq
    %v301 = vshrl.u32 %v300, 7
    %v302 = vsub.s32 %v239, %v301
    %v303 = vrot.slane %v222, %v302
    %v304 = vsel %vm244, %v303, %v299
    %v305 = vlaneseq
    %v306 = vshrl.u32 %v305, 7
    %v307 = vsub.s32 %v246, %v306
    %v308 = vrot.slane %v225, %v307
    %v309 = vsel %vm251, %v308, %v304
    %vm310 = vcmask 1041409
    %v311 = vsel %vm310, %v271, %v252
    %v312 = vsel %vm310, %v309, %v290
    %vm315 = vcmask 254976
    %v316 = vsel %vm315, %v311, 0.0
    %317 = vadd.xlane.f32.xlu0 %v316
    %v318 = vpop.xlane.xlu0 %317
    %v319 = vsel %vm315, %v312, 0.0
    %320 = vadd.xlane.f32.xlu0 %v319
    %v321 = vpop.xlane.xlu0 %320
    %v322 = vmax.f32 %v318, 0.0
    %v323 = vmax.f32 %v321, 0.0
    %v328 = vlaneseq
    %v329 = vshrl.u32 %v328, 7
    %v330 = vsub.s32 0, %v329
    %v331 = vrot.slane %v95, %v330
    %333 = vbcast.lane.b32.xlu0 %v331, 256
    %v334 = vpop.permute.xlu0 %333
    %v335 = vlaneseq
    %v336 = vshrl.u32 %v335, 7
    %v337 = vsub.s32 1, %v336
    %v338 = vrot.slane %v95, %v337
    %340 = vbcast.lane.b32.xlu0 %v338, 256
    %v341 = vpop.permute.xlu0 %340
    %v342 = vlaneseq
    %v343 = vshrl.u32 %v342, 7
    %v344 = vsub.s32 2, %v343
    %v345 = vrot.slane %v95, %v344
    %347 = vbcast.lane.b32.xlu0 %v345, 256
    %v348 = vpop.permute.xlu0 %347
    %v349 = vlaneseq
    %v350 = vshrl.u32 %v349, 7
    %v351 = vsub.s32 3, %v350
    %v352 = vrot.slane %v95, %v351
    %354 = vbcast.lane.b32.xlu0 %v352, 256
    %v355 = vpop.permute.xlu0 %354
    %v356 = vlaneseq
    %v357 = vshrl.u32 %v356, 7
    %v358 = vsub.s32 4, %v357
    %v359 = vrot.slane %v95, %v358
    %361 = vbcast.lane.b32.xlu0 %v359, 256
    %v362 = vpop.permute.xlu0 %361
    %v363 = vlaneseq
    %v364 = vshrl.u32 %v363, 7
    %v365 = vsub.s32 5, %v364
    %v366 = vrot.slane %v95, %v365
    %368 = vbcast.lane.b32.xlu0 %v366, 256
    %v369 = vpop.permute.xlu0 %368
    %v370 = vlaneseq
    %v371 = vshrl.u32 %v370, 7
    %v372 = vsub.s32 6, %v371
    %v373 = vrot.slane %v95, %v372
    %375 = vbcast.lane.b32.xlu0 %v373, 256
    %v376 = vpop.permute.xlu0 %375
    %v377 = vlaneseq
    %v378 = vshrl.u32 %v377, 7
    %v379 = vsub.s32 7, %v378
    %v380 = vrot.slane %v95, %v379
    %382 = vbcast.lane.b32.xlu0 %v380, 256
    %v383 = vpop.permute.xlu0 %382
    %v384 = vlaneseq
    %v385 = vshrl.u32 %v384, 7
    %v386 = vsub.s32 0, %v385
    %v387 = vrot.slane %v96, %v386
    %389 = vbcast.lane.b32.xlu0 %v387, 256
    %v390 = vpop.permute.xlu0 %389
    %v391 = vlaneseq
    %v392 = vshrl.u32 %v391, 7
    %v393 = vsub.s32 1, %v392
    %v394 = vrot.slane %v96, %v393
    %396 = vbcast.lane.b32.xlu0 %v394, 256
    %v397 = vpop.permute.xlu0 %396
    %v398 = vlaneseq
    %v399 = vshrl.u32 %v398, 7
    %v400 = vsub.s32 2, %v399
    %v401 = vrot.slane %v96, %v400
    %403 = vbcast.lane.b32.xlu0 %v401, 256
    %v404 = vpop.permute.xlu0 %403
    %v405 = vlaneseq
    %v406 = vshrl.u32 %v405, 7
    %v407 = vsub.s32 3, %v406
    %v408 = vrot.slane %v96, %v407
    %410 = vbcast.lane.b32.xlu0 %v408, 256
    %v411 = vpop.permute.xlu0 %410
    %v412 = vlaneseq
    %v413 = vshrl.u32 %v412, 7
    %v414 = vsub.s32 4, %v413
    %v415 = vrot.slane %v96, %v414
    %417 = vbcast.lane.b32.xlu0 %v415, 256
    %v418 = vpop.permute.xlu0 %417
    %v419 = vlaneseq
    %v420 = vshrl.u32 %v419, 7
    %v421 = vsub.s32 5, %v420
    %v422 = vrot.slane %v96, %v421
    %424 = vbcast.lane.b32.xlu0 %v422, 256
    %v425 = vpop.permute.xlu0 %424
    %v426 = vlaneseq
    %v427 = vshrl.u32 %v426, 7
    %v428 = vsub.s32 6, %v427
    %v429 = vrot.slane %v96, %v428
    %431 = vbcast.lane.b32.xlu0 %v429, 256
    %v432 = vpop.permute.xlu0 %431
    %v433 = vlaneseq
    %v434 = vshrl.u32 %v433, 7
    %v435 = vsub.s32 7, %v434
    %v436 = vrot.slane %v96, %v435
    %438 = vbcast.lane.b32.xlu0 %v436, 256
    %v439 = vpop.permute.xlu0 %438
    %v440 = vlaneseq
    %v441 = vshrl.u32 %v440, 7
    %v442 = vsub.s32 0, %v441
    %v443 = vrot.slane %v97, %v442
    %445 = vbcast.lane.b32.xlu0 %v443, 256
    %v446 = vpop.permute.xlu0 %445
    %v447 = vlaneseq
    %v448 = vshrl.u32 %v447, 7
    %v449 = vsub.s32 1, %v448
    %v450 = vrot.slane %v97, %v449
    %452 = vbcast.lane.b32.xlu0 %v450, 256
    %v453 = vpop.permute.xlu0 %452
    %v454 = vlaneseq
    %v455 = vshrl.u32 %v454, 7
    %v456 = vsub.s32 2, %v455
    %v457 = vrot.slane %v97, %v456
    %459 = vbcast.lane.b32.xlu0 %v457, 256
    %v460 = vpop.permute.xlu0 %459
    %v461 = vlaneseq
    %v462 = vshrl.u32 %v461, 7
    %v463 = vsub.s32 3, %v462
    %v464 = vrot.slane %v97, %v463
    %466 = vbcast.lane.b32.xlu0 %v464, 256
    %v467 = vpop.permute.xlu0 %466
    %v468 = vlaneseq
    %v469 = vshrl.u32 %v468, 7
    %v470 = vsub.s32 4, %v469
    %v471 = vrot.slane %v97, %v470
    %473 = vbcast.lane.b32.xlu0 %v471, 256
    %v474 = vpop.permute.xlu0 %473
    %v475 = vlaneseq
    %v476 = vshrl.u32 %v475, 7
    %v477 = vsub.s32 5, %v476
    %v478 = vrot.slane %v97, %v477
    %480 = vbcast.lane.b32.xlu0 %v478, 256
    %v481 = vpop.permute.xlu0 %480
    %v482 = vlaneseq
    %v483 = vshrl.u32 %v482, 7
    %v484 = vsub.s32 6, %v483
    %v485 = vrot.slane %v97, %v484
    %487 = vbcast.lane.b32.xlu0 %v485, 256
    %v488 = vpop.permute.xlu0 %487
    %v489 = vlaneseq
    %v490 = vshrl.u32 %v489, 7
    %v491 = vsub.s32 7, %v490
    %v492 = vrot.slane %v97, %v491
    %494 = vbcast.lane.b32.xlu0 %v492, 256
    %v495 = vpop.permute.xlu0 %494
    %v496 = vlaneseq
    %v497 = vshrl.u32 %v496, 7
    %v498 = vsub.s32 0, %v497
    %v499 = vrot.slane %v98, %v498
    %501 = vbcast.lane.b32.xlu0 %v499, 256
    %v502 = vpop.permute.xlu0 %501
    %v503 = vlaneseq
    %v504 = vshrl.u32 %v503, 7
    %v505 = vsub.s32 1, %v504
    %v506 = vrot.slane %v98, %v505
    %508 = vbcast.lane.b32.xlu0 %v506, 256
    %v509 = vpop.permute.xlu0 %508
    %v510 = vlaneseq
    %v511 = vshrl.u32 %v510, 7
    %v512 = vsub.s32 2, %v511
    %v513 = vrot.slane %v98, %v512
    %515 = vbcast.lane.b32.xlu0 %v513, 256
    %v516 = vpop.permute.xlu0 %515
    %v517 = vlaneseq
    %v518 = vshrl.u32 %v517, 7
    %v519 = vsub.s32 3, %v518
    %v520 = vrot.slane %v98, %v519
    %522 = vbcast.lane.b32.xlu0 %v520, 256
    %v523 = vpop.permute.xlu0 %522
    %v524 = vlaneseq
    %v525 = vshrl.u32 %v524, 7
    %v526 = vsub.s32 4, %v525
    %v527 = vrot.slane %v98, %v526
    %529 = vbcast.lane.b32.xlu0 %v527, 256
    %v530 = vpop.permute.xlu0 %529
    %v531 = vlaneseq
    %v532 = vshrl.u32 %v531, 7
    %v533 = vsub.s32 5, %v532
    %v534 = vrot.slane %v98, %v533
    %536 = vbcast.lane.b32.xlu0 %v534, 256
    %v537 = vpop.permute.xlu0 %536
    %v538 = vlaneseq
    %v539 = vshrl.u32 %v538, 7
    %v540 = vsub.s32 6, %v539
    %v541 = vrot.slane %v98, %v540
    %543 = vbcast.lane.b32.xlu0 %v541, 256
    %v544 = vpop.permute.xlu0 %543
    %v545 = vlaneseq
    %v546 = vshrl.u32 %v545, 7
    %v547 = vsub.s32 7, %v546
    %v548 = vrot.slane %v98, %v547
    %550 = vbcast.lane.b32.xlu0 %v548, 256
    %v551 = vpop.permute.xlu0 %550
    %v584 = vmul.f32 %v322, %v334
    %v585 = vmul.f32 %v322, %v341
    %v586 = vmul.f32 %v322, %v348
    %v587 = vmul.f32 %v322, %v355
    %v588 = vmul.f32 %v322, %v362
    %v589 = vmul.f32 %v322, %v369
    %v590 = vmul.f32 %v322, %v376
    %v591 = vmul.f32 %v322, %v383
    %v592 = vmul.f32 %v322, %v390
    %v593 = vmul.f32 %v322, %v397
    %v594 = vmul.f32 %v322, %v404
    %v595 = vmul.f32 %v322, %v411
    %v596 = vmul.f32 %v322, %v418
    %v597 = vmul.f32 %v322, %v425
    %v598 = vmul.f32 %v322, %v432
    %v599 = vmul.f32 %v322, %v439
    %v600 = vmul.f32 %v322, %v446
    %v601 = vmul.f32 %v322, %v453
    %v602 = vmul.f32 %v322, %v460
    %v603 = vmul.f32 %v322, %v467
    %v604 = vmul.f32 %v322, %v474
    %v605 = vmul.f32 %v322, %v481
    %v606 = vmul.f32 %v322, %v488
    %v607 = vmul.f32 %v322, %v495
    %v608 = vmul.f32 %v322, %v502
    %v609 = vmul.f32 %v322, %v509
    %v610 = vmul.f32 %v322, %v516
    %v611 = vmul.f32 %v322, %v523
    %v612 = vmul.f32 %v322, %v530
    %v613 = vmul.f32 %v322, %v537
    %v614 = vmul.f32 %v322, %v544
    %v615 = vmul.f32 %v322, %v551
    %v616 = vmul.f32 %v323, %v334
    %v617 = vmul.f32 %v323, %v341
    %v618 = vmul.f32 %v323, %v348
    %v619 = vmul.f32 %v323, %v355
    %v620 = vmul.f32 %v323, %v362
    %v621 = vmul.f32 %v323, %v369
    %v622 = vmul.f32 %v323, %v376
    %v623 = vmul.f32 %v323, %v383
    %v624 = vmul.f32 %v323, %v390
    %v625 = vmul.f32 %v323, %v397
    %v626 = vmul.f32 %v323, %v404
    %v627 = vmul.f32 %v323, %v411
    %v628 = vmul.f32 %v323, %v418
    %v629 = vmul.f32 %v323, %v425
    %v630 = vmul.f32 %v323, %v432
    %v631 = vmul.f32 %v323, %v439
    %v632 = vmul.f32 %v323, %v446
    %v633 = vmul.f32 %v323, %v453
    %v634 = vmul.f32 %v323, %v460
    %v635 = vmul.f32 %v323, %v467
    %v636 = vmul.f32 %v323, %v474
    %v637 = vmul.f32 %v323, %v481
    %v638 = vmul.f32 %v323, %v488
    %v639 = vmul.f32 %v323, %v495
    %v640 = vmul.f32 %v323, %v502
    %v641 = vmul.f32 %v323, %v509
    %v642 = vmul.f32 %v323, %v516
    %v643 = vmul.f32 %v323, %v523
    %v644 = vmul.f32 %v323, %v530
    %v645 = vmul.f32 %v323, %v537
    %v646 = vmul.f32 %v323, %v544
    %v647 = vmul.f32 %v323, %v551
    %712 = vset.pattern.permute.xlu0 0
    %713 = vperm.xlu0 %712, %v584
    %v714 = vpop.permute.xlu0 %713
    %715 = vset.pattern.permute.xlu0 0
    %716 = vperm.xlu0 %715, %v585
    %v717 = vpop.permute.xlu0 %716
    %718 = vset.pattern.permute.xlu0 0
    %719 = vperm.xlu0 %718, %v586
    %v720 = vpop.permute.xlu0 %719
    %721 = vset.pattern.permute.xlu0 0
    %722 = vperm.xlu0 %721, %v587
    %v723 = vpop.permute.xlu0 %722
    %724 = vset.pattern.permute.xlu0 0
    %725 = vperm.xlu0 %724, %v588
    %v726 = vpop.permute.xlu0 %725
    %727 = vset.pattern.permute.xlu0 0
    %728 = vperm.xlu0 %727, %v589
    %v729 = vpop.permute.xlu0 %728
    %730 = vset.pattern.permute.xlu0 0
    %731 = vperm.xlu0 %730, %v590
    %v732 = vpop.permute.xlu0 %731
    %733 = vset.pattern.permute.xlu0 0
    %734 = vperm.xlu0 %733, %v591
    %v735 = vpop.permute.xlu0 %734
    %736 = vset.pattern.permute.xlu0 0
    %737 = vperm.xlu0 %736, %v592
    %v738 = vpop.permute.xlu0 %737
    %739 = vset.pattern.permute.xlu0 0
    %740 = vperm.xlu0 %739, %v593
    %v741 = vpop.permute.xlu0 %740
    %742 = vset.pattern.permute.xlu0 0
    %743 = vperm.xlu0 %742, %v594
    %v744 = vpop.permute.xlu0 %743
    %745 = vset.pattern.permute.xlu0 0
    %746 = vperm.xlu0 %745, %v595
    %v747 = vpop.permute.xlu0 %746
    %748 = vset.pattern.permute.xlu0 0
    %749 = vperm.xlu0 %748, %v596
    %v750 = vpop.permute.xlu0 %749
    %751 = vset.pattern.permute.xlu0 0
    %752 = vperm.xlu0 %751, %v597
    %v753 = vpop.permute.xlu0 %752
    %754 = vset.pattern.permute.xlu0 0
    %755 = vperm.xlu0 %754, %v598
    %v756 = vpop.permute.xlu0 %755
    %757 = vset.pattern.permute.xlu0 0
    %758 = vperm.xlu0 %757, %v599
    %v759 = vpop.permute.xlu0 %758
    %760 = vset.pattern.permute.xlu0 0
    %761 = vperm.xlu0 %760, %v600
    %v762 = vpop.permute.xlu0 %761
    %763 = vset.pattern.permute.xlu0 0
    %764 = vperm.xlu0 %763, %v601
    %v765 = vpop.permute.xlu0 %764
    %766 = vset.pattern.permute.xlu0 0
    %767 = vperm.xlu0 %766, %v602
    %v768 = vpop.permute.xlu0 %767
    %769 = vset.pattern.permute.xlu0 0
    %770 = vperm.xlu0 %769, %v603
    %v771 = vpop.permute.xlu0 %770
    %772 = vset.pattern.permute.xlu0 0
    %773 = vperm.xlu0 %772, %v604
    %v774 = vpop.permute.xlu0 %773
    %775 = vset.pattern.permute.xlu0 0
    %776 = vperm.xlu0 %775, %v605
    %v777 = vpop.permute.xlu0 %776
    %778 = vset.pattern.permute.xlu0 0
    %779 = vperm.xlu0 %778, %v606
    %v780 = vpop.permute.xlu0 %779
    %781 = vset.pattern.permute.xlu0 0
    %782 = vperm.xlu0 %781, %v607
    %v783 = vpop.permute.xlu0 %782
    %784 = vset.pattern.permute.xlu0 0
    %785 = vperm.xlu0 %784, %v608
    %v786 = vpop.permute.xlu0 %785
    %787 = vset.pattern.permute.xlu0 0
    %788 = vperm.xlu0 %787, %v609
    %v789 = vpop.permute.xlu0 %788
    %790 = vset.pattern.permute.xlu0 0
    %791 = vperm.xlu0 %790, %v610
    %v792 = vpop.permute.xlu0 %791
    %793 = vset.pattern.permute.xlu0 0
    %794 = vperm.xlu0 %793, %v611
    %v795 = vpop.permute.xlu0 %794
    %796 = vset.pattern.permute.xlu0 0
    %797 = vperm.xlu0 %796, %v612
    %v798 = vpop.permute.xlu0 %797
    %799 = vset.pattern.permute.xlu0 0
    %800 = vperm.xlu0 %799, %v613
    %v801 = vpop.permute.xlu0 %800
    %802 = vset.pattern.permute.xlu0 0
    %803 = vperm.xlu0 %802, %v614
    %v804 = vpop.permute.xlu0 %803
    %805 = vset.pattern.permute.xlu0 0
    %806 = vperm.xlu0 %805, %v615
    %v807 = vpop.permute.xlu0 %806
    %808 = vset.pattern.permute.xlu0 0
    %809 = vperm.xlu0 %808, %v616
    %v810 = vpop.permute.xlu0 %809
    %811 = vset.pattern.permute.xlu0 0
    %812 = vperm.xlu0 %811, %v617
    %v813 = vpop.permute.xlu0 %812
    %814 = vset.pattern.permute.xlu0 0
    %815 = vperm.xlu0 %814, %v618
    %v816 = vpop.permute.xlu0 %815
    %817 = vset.pattern.permute.xlu0 0
    %818 = vperm.xlu0 %817, %v619
    %v819 = vpop.permute.xlu0 %818
    %820 = vset.pattern.permute.xlu0 0
    %821 = vperm.xlu0 %820, %v620
    %v822 = vpop.permute.xlu0 %821
    %823 = vset.pattern.permute.xlu0 0
    %824 = vperm.xlu0 %823, %v621
    %v825 = vpop.permute.xlu0 %824
    %826 = vset.pattern.permute.xlu0 0
    %827 = vperm.xlu0 %826, %v622
    %v828 = vpop.permute.xlu0 %827
    %829 = vset.pattern.permute.xlu0 0
    %830 = vperm.xlu0 %829, %v623
    %v831 = vpop.permute.xlu0 %830
    %832 = vset.pattern.permute.xlu0 0
    %833 = vperm.xlu0 %832, %v624
    %v834 = vpop.permute.xlu0 %833
    %835 = vset.pattern.permute.xlu0 0
    %836 = vperm.xlu0 %835, %v625
    %v837 = vpop.permute.xlu0 %836
    %838 = vset.pattern.permute.xlu0 0
    %839 = vperm.xlu0 %838, %v626
    %v840 = vpop.permute.xlu0 %839
    %841 = vset.pattern.permute.xlu0 0
    %842 = vperm.xlu0 %841, %v627
    %v843 = vpop.permute.xlu0 %842
    %844 = vset.pattern.permute.xlu0 0
    %845 = vperm.xlu0 %844, %v628
    %v846 = vpop.permute.xlu0 %845
    %847 = vset.pattern.permute.xlu0 0
    %848 = vperm.xlu0 %847, %v629
    %v849 = vpop.permute.xlu0 %848
    %850 = vset.pattern.permute.xlu0 0
    %851 = vperm.xlu0 %850, %v630
    %v852 = vpop.permute.xlu0 %851
    %853 = vset.pattern.permute.xlu0 0
    %854 = vperm.xlu0 %853, %v631
    %v855 = vpop.permute.xlu0 %854
    %856 = vset.pattern.permute.xlu0 0
    %857 = vperm.xlu0 %856, %v632
    %v858 = vpop.permute.xlu0 %857
    %859 = vset.pattern.permute.xlu0 0
    %860 = vperm.xlu0 %859, %v633
    %v861 = vpop.permute.xlu0 %860
    %862 = vset.pattern.permute.xlu0 0
    %863 = vperm.xlu0 %862, %v634
    %v864 = vpop.permute.xlu0 %863
    %865 = vset.pattern.permute.xlu0 0
    %866 = vperm.xlu0 %865, %v635
    %v867 = vpop.permute.xlu0 %866
    %868 = vset.pattern.permute.xlu0 0
    %869 = vperm.xlu0 %868, %v636
    %v870 = vpop.permute.xlu0 %869
    %871 = vset.pattern.permute.xlu0 0
    %872 = vperm.xlu0 %871, %v637
    %v873 = vpop.permute.xlu0 %872
    %874 = vset.pattern.permute.xlu0 0
    %875 = vperm.xlu0 %874, %v638
    %v876 = vpop.permute.xlu0 %875
    %877 = vset.pattern.permute.xlu0 0
    %878 = vperm.xlu0 %877, %v639
    %v879 = vpop.permute.xlu0 %878
    %880 = vset.pattern.permute.xlu0 0
    %881 = vperm.xlu0 %880, %v640
    %v882 = vpop.permute.xlu0 %881
    %883 = vset.pattern.permute.xlu0 0
    %884 = vperm.xlu0 %883, %v641
    %v885 = vpop.permute.xlu0 %884
    %886 = vset.pattern.permute.xlu0 0
    %887 = vperm.xlu0 %886, %v642
    %v888 = vpop.permute.xlu0 %887
    %889 = vset.pattern.permute.xlu0 0
    %890 = vperm.xlu0 %889, %v643
    %v891 = vpop.permute.xlu0 %890
    %892 = vset.pattern.permute.xlu0 0
    %893 = vperm.xlu0 %892, %v644
    %v894 = vpop.permute.xlu0 %893
    %895 = vset.pattern.permute.xlu0 0
    %896 = vperm.xlu0 %895, %v645
    %v897 = vpop.permute.xlu0 %896
    %898 = vset.pattern.permute.xlu0 0
    %899 = vperm.xlu0 %898, %v646
    %v900 = vpop.permute.xlu0 %899
    %901 = vset.pattern.permute.xlu0 0
    %902 = vperm.xlu0 %901, %v647
    %v903 = vpop.permute.xlu0 %902
    %v904 = vlaneseq
    %v905 = vshrl.u32 %v904, 7
    %v906 = vsub.s32 %v227, %v905
    %v907 = vrot.slane %v714, %v906
    %v908 = vlaneseq
    %v909 = vshrl.u32 %v908, 7
    %v910 = vsub.s32 %v227, %v909
    %v911 = vrot.slane %v717, %v910
    %v912 = vlaneseq
    %v913 = vshrl.u32 %v912, 7
    %v914 = vsub.s32 %v227, %v913
    %v915 = vrot.slane %v720, %v914
    %v916 = vlaneseq
    %v917 = vshrl.u32 %v916, 7
    %v918 = vsub.s32 %v227, %v917
    %v919 = vrot.slane %v723, %v918
    %v920 = vlaneseq
    %v921 = vshrl.u32 %v920, 7
    %v922 = vsub.s32 %v227, %v921
    %v923 = vrot.slane %v726, %v922
    %v924 = vlaneseq
    %v925 = vshrl.u32 %v924, 7
    %v926 = vsub.s32 %v227, %v925
    %v927 = vrot.slane %v729, %v926
    %v928 = vlaneseq
    %v929 = vshrl.u32 %v928, 7
    %v930 = vsub.s32 %v227, %v929
    %v931 = vrot.slane %v732, %v930
    %v932 = vlaneseq
    %v933 = vshrl.u32 %v932, 7
    %v934 = vsub.s32 %v227, %v933
    %v935 = vrot.slane %v735, %v934
    %v936 = vlaneseq
    %v937 = vshrl.u32 %v936, 7
    %v938 = vsub.s32 %v227, %v937
    %v939 = vrot.slane %v738, %v938
    %v940 = vlaneseq
    %v941 = vshrl.u32 %v940, 7
    %v942 = vsub.s32 %v227, %v941
    %v943 = vrot.slane %v741, %v942
    %v944 = vlaneseq
    %v945 = vshrl.u32 %v944, 7
    %v946 = vsub.s32 %v227, %v945
    %v947 = vrot.slane %v744, %v946
    %v948 = vlaneseq
    %v949 = vshrl.u32 %v948, 7
    %v950 = vsub.s32 %v227, %v949
    %v951 = vrot.slane %v747, %v950
    %v952 = vlaneseq
    %v953 = vshrl.u32 %v952, 7
    %v954 = vsub.s32 %v227, %v953
    %v955 = vrot.slane %v750, %v954
    %v956 = vlaneseq
    %v957 = vshrl.u32 %v956, 7
    %v958 = vsub.s32 %v227, %v957
    %v959 = vrot.slane %v753, %v958
    %v960 = vlaneseq
    %v961 = vshrl.u32 %v960, 7
    %v962 = vsub.s32 %v227, %v961
    %v963 = vrot.slane %v756, %v962
    %v964 = vlaneseq
    %v965 = vshrl.u32 %v964, 7
    %v966 = vsub.s32 %v227, %v965
    %v967 = vrot.slane %v759, %v966
    %v968 = vlaneseq
    %v969 = vshrl.u32 %v968, 7
    %v970 = vsub.s32 %v227, %v969
    %v971 = vrot.slane %v762, %v970
    %v972 = vlaneseq
    %v973 = vshrl.u32 %v972, 7
    %v974 = vsub.s32 %v227, %v973
    %v975 = vrot.slane %v765, %v974
    %v976 = vlaneseq
    %v977 = vshrl.u32 %v976, 7
    %v978 = vsub.s32 %v227, %v977
    %v979 = vrot.slane %v768, %v978
    %v980 = vlaneseq
    %v981 = vshrl.u32 %v980, 7
    %v982 = vsub.s32 %v227, %v981
    %v983 = vrot.slane %v771, %v982
    %v984 = vlaneseq
    %v985 = vshrl.u32 %v984, 7
    %v986 = vsub.s32 %v227, %v985
    %v987 = vrot.slane %v774, %v986
    %v988 = vlaneseq
    %v989 = vshrl.u32 %v988, 7
    %v990 = vsub.s32 %v227, %v989
    %v991 = vrot.slane %v777, %v990
    %v992 = vlaneseq
    %v993 = vshrl.u32 %v992, 7
    %v994 = vsub.s32 %v227, %v993
    %v995 = vrot.slane %v780, %v994
    %v996 = vlaneseq
    %v997 = vshrl.u32 %v996, 7
    %v998 = vsub.s32 %v227, %v997
    %v999 = vrot.slane %v783, %v998
    %v1000 = vlaneseq
    %v1001 = vshrl.u32 %v1000, 7
    %v1002 = vsub.s32 %v227, %v1001
    %v1003 = vrot.slane %v786, %v1002
    %v1004 = vlaneseq
    %v1005 = vshrl.u32 %v1004, 7
    %v1006 = vsub.s32 %v227, %v1005
    %v1007 = vrot.slane %v789, %v1006
    %v1008 = vlaneseq
    %v1009 = vshrl.u32 %v1008, 7
    %v1010 = vsub.s32 %v227, %v1009
    %v1011 = vrot.slane %v792, %v1010
    %v1012 = vlaneseq
    %v1013 = vshrl.u32 %v1012, 7
    %v1014 = vsub.s32 %v227, %v1013
    %v1015 = vrot.slane %v795, %v1014
    %v1016 = vlaneseq
    %v1017 = vshrl.u32 %v1016, 7
    %v1018 = vsub.s32 %v227, %v1017
    %v1019 = vrot.slane %v798, %v1018
    %v1020 = vlaneseq
    %v1021 = vshrl.u32 %v1020, 7
    %v1022 = vsub.s32 %v227, %v1021
    %v1023 = vrot.slane %v801, %v1022
    %v1024 = vlaneseq
    %v1025 = vshrl.u32 %v1024, 7
    %v1026 = vsub.s32 %v227, %v1025
    %v1027 = vrot.slane %v804, %v1026
    %v1028 = vlaneseq
    %v1029 = vshrl.u32 %v1028, 7
    %v1030 = vsub.s32 %v227, %v1029
    %v1031 = vrot.slane %v807, %v1030
    %v1032 = vlaneseq
    %v1033 = vshrl.u32 %v1032, 7
    %v1034 = vsub.s32 %v227, %v1033
    %v1035 = vrot.slane %v810, %v1034
    %v1036 = vlaneseq
    %v1037 = vshrl.u32 %v1036, 7
    %v1038 = vsub.s32 %v227, %v1037
    %v1039 = vrot.slane %v813, %v1038
    %v1040 = vlaneseq
    %v1041 = vshrl.u32 %v1040, 7
    %v1042 = vsub.s32 %v227, %v1041
    %v1043 = vrot.slane %v816, %v1042
    %v1044 = vlaneseq
    %v1045 = vshrl.u32 %v1044, 7
    %v1046 = vsub.s32 %v227, %v1045
    %v1047 = vrot.slane %v819, %v1046
    %v1048 = vlaneseq
    %v1049 = vshrl.u32 %v1048, 7
    %v1050 = vsub.s32 %v227, %v1049
    %v1051 = vrot.slane %v822, %v1050
    %v1052 = vlaneseq
    %v1053 = vshrl.u32 %v1052, 7
    %v1054 = vsub.s32 %v227, %v1053
    %v1055 = vrot.slane %v825, %v1054
    %v1056 = vlaneseq
    %v1057 = vshrl.u32 %v1056, 7
    %v1058 = vsub.s32 %v227, %v1057
    %v1059 = vrot.slane %v828, %v1058
    %v1060 = vlaneseq
    %v1061 = vshrl.u32 %v1060, 7
    %v1062 = vsub.s32 %v227, %v1061
    %v1063 = vrot.slane %v831, %v1062
    %v1064 = vlaneseq
    %v1065 = vshrl.u32 %v1064, 7
    %v1066 = vsub.s32 %v227, %v1065
    %v1067 = vrot.slane %v834, %v1066
    %v1068 = vlaneseq
    %v1069 = vshrl.u32 %v1068, 7
    %v1070 = vsub.s32 %v227, %v1069
    %v1071 = vrot.slane %v837, %v1070
    %v1072 = vlaneseq
    %v1073 = vshrl.u32 %v1072, 7
    %v1074 = vsub.s32 %v227, %v1073
    %v1075 = vrot.slane %v840, %v1074
    %v1076 = vlaneseq
    %v1077 = vshrl.u32 %v1076, 7
    %v1078 = vsub.s32 %v227, %v1077
    %v1079 = vrot.slane %v843, %v1078
    %v1080 = vlaneseq
    %v1081 = vshrl.u32 %v1080, 7
    %v1082 = vsub.s32 %v227, %v1081
    %v1083 = vrot.slane %v846, %v1082
    %v1084 = vlaneseq
    %v1085 = vshrl.u32 %v1084, 7
    %v1086 = vsub.s32 %v227, %v1085
    %v1087 = vrot.slane %v849, %v1086
    %v1088 = vlaneseq
    %v1089 = vshrl.u32 %v1088, 7
    %v1090 = vsub.s32 %v227, %v1089
    %v1091 = vrot.slane %v852, %v1090
    %v1092 = vlaneseq
    %v1093 = vshrl.u32 %v1092, 7
    %v1094 = vsub.s32 %v227, %v1093
    %v1095 = vrot.slane %v855, %v1094
    %v1096 = vlaneseq
    %v1097 = vshrl.u32 %v1096, 7
    %v1098 = vsub.s32 %v227, %v1097
    %v1099 = vrot.slane %v858, %v1098
    %v1100 = vlaneseq
    %v1101 = vshrl.u32 %v1100, 7
    %v1102 = vsub.s32 %v227, %v1101
    %v1103 = vrot.slane %v861, %v1102
    %v1104 = vlaneseq
    %v1105 = vshrl.u32 %v1104, 7
    %v1106 = vsub.s32 %v227, %v1105
    %v1107 = vrot.slane %v864, %v1106
    %v1108 = vlaneseq
    %v1109 = vshrl.u32 %v1108, 7
    %v1110 = vsub.s32 %v227, %v1109
    %v1111 = vrot.slane %v867, %v1110
    %v1112 = vlaneseq
    %v1113 = vshrl.u32 %v1112, 7
    %v1114 = vsub.s32 %v227, %v1113
    %v1115 = vrot.slane %v870, %v1114
    %v1116 = vlaneseq
    %v1117 = vshrl.u32 %v1116, 7
    %v1118 = vsub.s32 %v227, %v1117
    %v1119 = vrot.slane %v873, %v1118
    %v1120 = vlaneseq
    %v1121 = vshrl.u32 %v1120, 7
    %v1122 = vsub.s32 %v227, %v1121
    %v1123 = vrot.slane %v876, %v1122
    %v1124 = vlaneseq
    %v1125 = vshrl.u32 %v1124, 7
    %v1126 = vsub.s32 %v227, %v1125
    %v1127 = vrot.slane %v879, %v1126
    %v1128 = vlaneseq
    %v1129 = vshrl.u32 %v1128, 7
    %v1130 = vsub.s32 %v227, %v1129
    %v1131 = vrot.slane %v882, %v1130
    %v1132 = vlaneseq
    %v1133 = vshrl.u32 %v1132, 7
    %v1134 = vsub.s32 %v227, %v1133
    %v1135 = vrot.slane %v885, %v1134
    %v1136 = vlaneseq
    %v1137 = vshrl.u32 %v1136, 7
    %v1138 = vsub.s32 %v227, %v1137
    %v1139 = vrot.slane %v888, %v1138
    %v1140 = vlaneseq
    %v1141 = vshrl.u32 %v1140, 7
    %v1142 = vsub.s32 %v227, %v1141
    %v1143 = vrot.slane %v891, %v1142
    %v1144 = vlaneseq
    %v1145 = vshrl.u32 %v1144, 7
    %v1146 = vsub.s32 %v227, %v1145
    %v1147 = vrot.slane %v894, %v1146
    %v1148 = vlaneseq
    %v1149 = vshrl.u32 %v1148, 7
    %v1150 = vsub.s32 %v227, %v1149
    %v1151 = vrot.slane %v897, %v1150
    %v1152 = vlaneseq
    %v1153 = vshrl.u32 %v1152, 7
    %v1154 = vsub.s32 %v227, %v1153
    %v1155 = vrot.slane %v900, %v1154
    %v1156 = vlaneseq
    %v1157 = vshrl.u32 %v1156, 7
    %v1158 = vsub.s32 %v227, %v1157
    %v1159 = vrot.slane %v903, %v1158
    %v1160 = vsel %vm310, %v911, %v907
    %vm1161 = vcmask 1042434
    %v1162 = vsel %vm1161, %v915, %v1160
    %vm1163 = vcmask 1043459
    %v1164 = vsel %vm1163, %v919, %v1162
    %vm1165 = vcmask 1044484
    %v1166 = vsel %vm1165, %v923, %v1164
    %vm1167 = vcmask 1045509
    %v1168 = vsel %vm1167, %v927, %v1166
    %vm1169 = vcmask 1046534
    %v1170 = vsel %vm1169, %v931, %v1168
    %vm1171 = vcmask 1047559
    %v1172 = vsel %vm1171, %v935, %v1170
    %v1173 = vsel %vm310, %v943, %v939
    %v1174 = vsel %vm1161, %v947, %v1173
    %v1175 = vsel %vm1163, %v951, %v1174
    %v1176 = vsel %vm1165, %v955, %v1175
    %v1177 = vsel %vm1167, %v959, %v1176
    %v1178 = vsel %vm1169, %v963, %v1177
    %v1179 = vsel %vm1171, %v967, %v1178
    %v1180 = vsel %vm310, %v975, %v971
    %v1181 = vsel %vm1161, %v979, %v1180
    %v1182 = vsel %vm1163, %v983, %v1181
    %v1183 = vsel %vm1165, %v987, %v1182
    %v1184 = vsel %vm1167, %v991, %v1183
    %v1185 = vsel %vm1169, %v995, %v1184
    %v1186 = vsel %vm1171, %v999, %v1185
    %v1187 = vsel %vm310, %v1007, %v1003
    %v1188 = vsel %vm1161, %v1011, %v1187
    %v1189 = vsel %vm1163, %v1015, %v1188
    %v1190 = vsel %vm1165, %v1019, %v1189
    %v1191 = vsel %vm1167, %v1023, %v1190
    %v1192 = vsel %vm1169, %v1027, %v1191
    %v1193 = vsel %vm1171, %v1031, %v1192
    %v1194 = vsel %vm310, %v1039, %v1035
    %v1195 = vsel %vm1161, %v1043, %v1194
    %v1196 = vsel %vm1163, %v1047, %v1195
    %v1197 = vsel %vm1165, %v1051, %v1196
    %v1198 = vsel %vm1167, %v1055, %v1197
    %v1199 = vsel %vm1169, %v1059, %v1198
    %v1200 = vsel %vm1171, %v1063, %v1199
    %v1201 = vsel %vm310, %v1071, %v1067
    %v1202 = vsel %vm1161, %v1075, %v1201
    %v1203 = vsel %vm1163, %v1079, %v1202
    %v1204 = vsel %vm1165, %v1083, %v1203
    %v1205 = vsel %vm1167, %v1087, %v1204
    %v1206 = vsel %vm1169, %v1091, %v1205
    %v1207 = vsel %vm1171, %v1095, %v1206
    %v1208 = vsel %vm310, %v1103, %v1099
    %v1209 = vsel %vm1161, %v1107, %v1208
    %v1210 = vsel %vm1163, %v1111, %v1209
    %v1211 = vsel %vm1165, %v1115, %v1210
    %v1212 = vsel %vm1167, %v1119, %v1211
    %v1213 = vsel %vm1169, %v1123, %v1212
    %v1214 = vsel %vm1171, %v1127, %v1213
    %v1215 = vsel %vm310, %v1135, %v1131
    %v1216 = vsel %vm1161, %v1139, %v1215
    %v1217 = vsel %vm1163, %v1143, %v1216
    %v1218 = vsel %vm1165, %v1147, %v1217
    %v1219 = vsel %vm1167, %v1151, %v1218
    %v1220 = vsel %vm1169, %v1155, %v1219
    %v1221 = vsel %vm1171, %v1159, %v1220
    %vm1230 = vcmask 15360
    %v1231 = vsel %vm1230, %v1172, 0.0
    %1232 = vadd.xlane.f32.xlu0 %v1231
    %v1233 = vpop.xlane.xlu0 %1232
    %v1234 = vsel %vm1230, %v1179, 0.0
    %1235 = vadd.xlane.f32.xlu0 %v1234
    %v1236 = vpop.xlane.xlu0 %1235
    %v1237 = vsel %vm1230, %v1186, 0.0
    %1238 = vadd.xlane.f32.xlu0 %v1237
    %v1239 = vpop.xlane.xlu0 %1238
    %v1240 = vsel %vm1230, %v1193, 0.0
    %1241 = vadd.xlane.f32.xlu0 %v1240
    %v1242 = vpop.xlane.xlu0 %1241
    %v1243 = vsel %vm1230, %v1200, 0.0
    %1244 = vadd.xlane.f32.xlu0 %v1243
    %v1245 = vpop.xlane.xlu0 %1244
    %v1246 = vsel %vm1230, %v1207, 0.0
    %1247 = vadd.xlane.f32.xlu0 %v1246
    %v1248 = vpop.xlane.xlu0 %1247
    %v1249 = vsel %vm1230, %v1214, 0.0
    %1250 = vadd.xlane.f32.xlu0 %v1249
    %v1251 = vpop.xlane.xlu0 %1250
    %v1252 = vsel %vm1230, %v1221, 0.0
    %1253 = vadd.xlane.f32.xlu0 %v1252
    %v1254 = vpop.xlane.xlu0 %1253
    %v1255 = vxor.u32 %v1233, 2147483648
    %v1256 = vxor.u32 %v1236, 2147483648
    %v1257 = vxor.u32 %v1239, 2147483648
    %v1258 = vxor.u32 %v1242, 2147483648
    %v1259 = vxor.u32 %v1245, 2147483648
    %v1260 = vxor.u32 %v1248, 2147483648
    %v1261 = vxor.u32 %v1251, 2147483648
    %v1262 = vxor.u32 %v1254, 2147483648
    %v1263 = vmul.f32 %v1255, 1.442695
    %v1264 = vpow.pop %v1263
    %v1265 = vmul.f32 %v1256, 1.442695
    %v1266 = vpow.pop %v1265
    %v1267 = vmul.f32 %v1257, 1.442695
    %v1268 = vpow.pop %v1267
    %v1269 = vmul.f32 %v1258, 1.442695
    %v1270 = vpow.pop %v1269
    %v1271 = vmul.f32 %v1259, 1.442695
    %v1272 = vpow.pop %v1271
    %v1273 = vmul.f32 %v1260, 1.442695
    %v1274 = vpow.pop %v1273
    %v1275 = vmul.f32 %v1261, 1.442695
    %v1276 = vpow.pop %v1275
    %v1277 = vmul.f32 %v1262, 1.442695
    %v1278 = vpow.pop %v1277
    %v1279 = vadd.f32 %v1264, 1.0
    %v1280 = vadd.f32 %v1266, 1.0
    %v1281 = vadd.f32 %v1268, 1.0
    %v1282 = vadd.f32 %v1270, 1.0
    %v1283 = vadd.f32 %v1272, 1.0
    %v1284 = vadd.f32 %v1274, 1.0
    %v1285 = vadd.f32 %v1276, 1.0
    %v1286 = vadd.f32 %v1278, 1.0
    %v1287 = vrcp.pop %v1279
    %v1288 = vmul.f32 1.0, %v1287
    %v1289 = vrcp.pop %v1280
    %v1290 = vmul.f32 1.0, %v1289
    %v1291 = vrcp.pop %v1281
    %v1292 = vmul.f32 1.0, %v1291
    %v1293 = vrcp.pop %v1282
    %v1294 = vmul.f32 1.0, %v1293
    %v1295 = vrcp.pop %v1283
    %v1296 = vmul.f32 1.0, %v1295
    %v1297 = vrcp.pop %v1284
    %v1298 = vmul.f32 1.0, %v1297
    %v1299 = vrcp.pop %v1285
    %v1300 = vmul.f32 1.0, %v1299
    %v1301 = vrcp.pop %v1286
    %v1302 = vmul.f32 1.0, %v1301
    %v1303 = vmul.f32 %v46, %v1288
    %v1304 = vmul.f32 %v47, %v1288
    %v1305 = vmul.f32 %v48, %v1290
    %v1306 = vmul.f32 %v49, %v1290
    %v1307 = vmul.f32 %v50, %v1292
    %v1308 = vmul.f32 %v51, %v1292
    %v1309 = vmul.f32 %v52, %v1294
    %v1310 = vmul.f32 %v53, %v1294
    %v1311 = vmul.f32 %v54, %v1296
    %v1312 = vmul.f32 %v55, %v1296
    %v1313 = vmul.f32 %v56, %v1298
    %v1314 = vmul.f32 %v57, %v1298
    %v1315 = vmul.f32 %v58, %v1300
    %v1316 = vmul.f32 %v59, %v1300
    %v1317 = vmul.f32 %v60, %v1302
    %v1318 = vmul.f32 %v61, %v1302
    %v1319 = vadd.f32 %v1303, %v1305
    %v1320 = vadd.f32 %v1319, %v1307
    %v1321 = vadd.f32 %v1320, %v1309
    %v1322 = vrot.slane %v1321, 4
    %v1323 = vadd.f32 %v1321, %v1322
    %v1324 = vrot.slane %v1323, 2
    %v1325 = vadd.f32 %v1323, %v1324
    %v1326 = vrot.slane %v1325, 1
    %v1327 = vadd.f32 %v1325, %v1326
    %v1328 = vadd.f32 %v1304, %v1306
    %v1329 = vadd.f32 %v1328, %v1308
    %v1330 = vadd.f32 %v1329, %v1310
    %v1331 = vrot.slane %v1330, 4
    %v1332 = vadd.f32 %v1330, %v1331
    %v1333 = vrot.slane %v1332, 2
    %v1334 = vadd.f32 %v1332, %v1333
    %v1335 = vrot.slane %v1334, 1
    %v1336 = vadd.f32 %v1334, %v1335
    %v1337 = vadd.f32 %v1311, %v1313
    %v1338 = vadd.f32 %v1337, %v1315
    %v1339 = vadd.f32 %v1338, %v1317
    %v1340 = vrot.slane %v1339, 4
    %v1341 = vadd.f32 %v1339, %v1340
    %v1342 = vrot.slane %v1341, 2
    %v1343 = vadd.f32 %v1341, %v1342
    %v1344 = vrot.slane %v1343, 1
    %v1345 = vadd.f32 %v1343, %v1344
    %v1346 = vadd.f32 %v1312, %v1314
    %v1347 = vadd.f32 %v1346, %v1316
    %v1348 = vadd.f32 %v1347, %v1318
    %v1349 = vrot.slane %v1348, 4
    %v1350 = vadd.f32 %v1348, %v1349
    %v1351 = vrot.slane %v1350, 2
    %v1352 = vadd.f32 %v1350, %v1351
    %v1353 = vrot.slane %v1352, 1
    %v1354 = vadd.f32 %v1352, %v1353
    %v1355 = vrcp.pop 32.0
    %v1356 = vmul.f32 %v1327, %v1355
    %v1357 = vmul.f32 %v1336, %v1355
    %v1358 = vmul.f32 %v1345, %v1355
    %v1359 = vmul.f32 %v1354, %v1355
    %v1360 = vmax.f32 %v1303, %v1305
    %v1361 = vmax.f32 %v1360, %v1307
    %v1362 = vmax.f32 %v1361, %v1309
    %v1363 = vrot.slane %v1362, 4
    %v1364 = vmax.f32 %v1362, %v1363
    %v1365 = vrot.slane %v1364, 2
    %v1366 = vmax.f32 %v1364, %v1365
    %v1367 = vrot.slane %v1366, 1
    %v1368 = vmax.f32 %v1366, %v1367
    %v1369 = vmax.f32 %v1304, %v1306
    %v1370 = vmax.f32 %v1369, %v1308
    %v1371 = vmax.f32 %v1370, %v1310
    %v1372 = vrot.slane %v1371, 4
    %v1373 = vmax.f32 %v1371, %v1372
    %v1374 = vrot.slane %v1373, 2
    %v1375 = vmax.f32 %v1373, %v1374
    %v1376 = vrot.slane %v1375, 1
    %v1377 = vmax.f32 %v1375, %v1376
    %v1378 = vmax.f32 %v1311, %v1313
    %v1379 = vmax.f32 %v1378, %v1315
    %v1380 = vmax.f32 %v1379, %v1317
    %v1381 = vrot.slane %v1380, 4
    %v1382 = vmax.f32 %v1380, %v1381
    %v1383 = vrot.slane %v1382, 2
    %v1384 = vmax.f32 %v1382, %v1383
    %v1385 = vrot.slane %v1384, 1
    %v1386 = vmax.f32 %v1384, %v1385
    %v1387 = vmax.f32 %v1312, %v1314
    %v1388 = vmax.f32 %v1387, %v1316
    %v1389 = vmax.f32 %v1388, %v1318
    %v1390 = vrot.slane %v1389, 4
    %v1391 = vmax.f32 %v1389, %v1390
    %v1392 = vrot.slane %v1391, 2
    %v1393 = vmax.f32 %v1391, %v1392
    %v1394 = vrot.slane %v1393, 1
    %v1395 = vmax.f32 %v1393, %v1394
    %v1400 = vsel %vm310, %v1358, %v1356
    %v1401 = vsel %vm310, %v1359, %v1357
    %v1408 = vsel %vm310, %v1386, %v1368
    %v1409 = vsel %vm310, %v1395, %v1377
    %v1412 = vld [vmem:[#allocation5] sm:$0xff]
    %v1413 = vld [vmem:[#allocation5 + $0x8] sm:$0xff]
    %v1414 = vld [vmem:[#allocation5 + $0x10] sm:$0xff]
    %v1415 = vld [vmem:[#allocation5 + $0x18] sm:$0xff]
    %v1416 = vld [vmem:[#allocation5 + $0x20] sm:$0xff]
    %v1417 = vld [vmem:[#allocation5 + $0x28] sm:$0xff]
    %v1418 = vld [vmem:[#allocation5 + $0x30] sm:$0xff]
    %v1419 = vld [vmem:[#allocation5 + $0x38] sm:$0xff]
    %v1420 = vld [vmem:[#allocation5 + $0x40] sm:$0xff]
    %v1421 = vld [vmem:[#allocation5 + $0x48] sm:$0xff]
    %v1422 = vld [vmem:[#allocation5 + $0x50] sm:$0xff]
    %v1423 = vld [vmem:[#allocation5 + $0x58] sm:$0xff]
    %v1424 = vld [vmem:[#allocation5 + $0x60] sm:$0xff]
    %v1425 = vld [vmem:[#allocation5 + $0x68] sm:$0xff]
    %v1426 = vld [vmem:[#allocation5 + $0x70] sm:$0xff]
    %v1427 = vld [vmem:[#allocation5 + $0x78] sm:$0xff]
    %v1428 = vld [vmem:[#allocation5 + $0x80] sm:$0xff]
    %v1429 = vld [vmem:[#allocation5 + $0x88] sm:$0xff]
    %v1430 = vld [vmem:[#allocation5 + $0x90] sm:$0xff]
    %v1431 = vld [vmem:[#allocation5 + $0x98] sm:$0xff]
    %v1432 = vld [vmem:[#allocation5 + $0xa0] sm:$0xff]
    %v1433 = vld [vmem:[#allocation5 + $0xa8] sm:$0xff]
    %v1434 = vld [vmem:[#allocation5 + $0xb0] sm:$0xff]
    %v1435 = vld [vmem:[#allocation5 + $0xb8] sm:$0xff]
    %v1436 = vld [vmem:[#allocation5 + $0xc0] sm:$0xff]
    %v1437 = vld [vmem:[#allocation5 + $0xc8] sm:$0xff]
    %v1438 = vld [vmem:[#allocation5 + $0xd0] sm:$0xff]
    %v1439 = vld [vmem:[#allocation5 + $0xd8] sm:$0xff]
    %v1440 = vld [vmem:[#allocation5 + $0xe0] sm:$0xff]
    %v1441 = vld [vmem:[#allocation5 + $0xe8] sm:$0xff]
    %v1442 = vld [vmem:[#allocation5 + $0xf0] sm:$0xff]
    %v1443 = vld [vmem:[#allocation5 + $0xf8] sm:$0xff]
    %v1444 = vld [vmem:[#allocation5 + $0x100] sm:$0xff]
    %v1445 = vld [vmem:[#allocation5 + $0x108] sm:$0xff]
    %v1446 = vld [vmem:[#allocation5 + $0x110] sm:$0xff]
    %v1447 = vld [vmem:[#allocation5 + $0x118] sm:$0xff]
    %v1448 = vld [vmem:[#allocation5 + $0x120] sm:$0xff]
    %v1449 = vld [vmem:[#allocation5 + $0x128] sm:$0xff]
    %v1450 = vld [vmem:[#allocation5 + $0x130] sm:$0xff]
    %v1451 = vld [vmem:[#allocation5 + $0x138] sm:$0xff]
    %v1452 = vld [vmem:[#allocation5 + $0x140] sm:$0xff]
    %v1453 = vld [vmem:[#allocation5 + $0x148] sm:$0xff]
    %v1454 = vld [vmem:[#allocation5 + $0x150] sm:$0xff]
    %v1455 = vld [vmem:[#allocation5 + $0x158] sm:$0xff]
    %v1456 = vld [vmem:[#allocation5 + $0x160] sm:$0xff]
    %v1457 = vld [vmem:[#allocation5 + $0x168] sm:$0xff]
    %v1458 = vld [vmem:[#allocation5 + $0x170] sm:$0xff]
    %v1459 = vld [vmem:[#allocation5 + $0x178] sm:$0xff]
    %v1460 = vld [vmem:[#allocation5 + $0x180] sm:$0xff]
    %v1461 = vld [vmem:[#allocation5 + $0x188] sm:$0xff]
    %v1462 = vld [vmem:[#allocation5 + $0x190] sm:$0xff]
    %v1463 = vld [vmem:[#allocation5 + $0x198] sm:$0xff]
    %v1464 = vld [vmem:[#allocation5 + $0x1a0] sm:$0xff]
    %v1465 = vld [vmem:[#allocation5 + $0x1a8] sm:$0xff]
    %v1466 = vld [vmem:[#allocation5 + $0x1b0] sm:$0xff]
    %v1467 = vld [vmem:[#allocation5 + $0x1b8] sm:$0xff]
    %v1468 = vld [vmem:[#allocation5 + $0x1c0] sm:$0xff]
    %v1469 = vld [vmem:[#allocation5 + $0x1c8] sm:$0xff]
    %v1470 = vld [vmem:[#allocation5 + $0x1d0] sm:$0xff]
    %v1471 = vld [vmem:[#allocation5 + $0x1d8] sm:$0xff]
    %v1472 = vld [vmem:[#allocation5 + $0x1e0] sm:$0xff]
    %v1473 = vld [vmem:[#allocation5 + $0x1e8] sm:$0xff]
    %v1474 = vld [vmem:[#allocation5 + $0x1f0] sm:$0xff]
    %v1475 = vld [vmem:[#allocation5 + $0x1f8] sm:$0xff]
    %v1476 = vld [vmem:[#allocation5 + $0x200] sm:$0xff]
    %v1477 = vld [vmem:[#allocation5 + $0x208] sm:$0xff]
    %v1478 = vld [vmem:[#allocation5 + $0x210] sm:$0xff]
    %v1479 = vld [vmem:[#allocation5 + $0x218] sm:$0xff]
    %v1480 = vld [vmem:[#allocation5 + $0x220] sm:$0xff]
    %v1481 = vld [vmem:[#allocation5 + $0x228] sm:$0xff]
    %v1482 = vld [vmem:[#allocation5 + $0x230] sm:$0xff]
    %v1483 = vld [vmem:[#allocation5 + $0x238] sm:$0xff]
    %v1484 = vld [vmem:[#allocation5 + $0x240] sm:$0xff]
    %v1485 = vld [vmem:[#allocation5 + $0x248] sm:$0xff]
    %v1486 = vld [vmem:[#allocation5 + $0x250] sm:$0xff]
    %v1487 = vld [vmem:[#allocation5 + $0x258] sm:$0xff]
    %v1488 = vld [vmem:[#allocation5 + $0x260] sm:$0xff]
    %v1489 = vld [vmem:[#allocation5 + $0x268] sm:$0xff]
    %v1490 = vld [vmem:[#allocation5 + $0x270] sm:$0xff]
    %v1491 = vld [vmem:[#allocation5 + $0x278] sm:$0xff]
    %v1492 = vld [vmem:[#allocation5 + $0x280] sm:$0xff]
    %v1493 = vld [vmem:[#allocation5 + $0x288] sm:$0xff]
    %v1494 = vld [vmem:[#allocation5 + $0x290] sm:$0xff]
    %v1495 = vld [vmem:[#allocation5 + $0x298] sm:$0xff]
    %v1496 = vld [vmem:[#allocation5 + $0x2a0] sm:$0xff]
    %v1497 = vld [vmem:[#allocation5 + $0x2a8] sm:$0xff]
    %v1498 = vld [vmem:[#allocation5 + $0x2b0] sm:$0xff]
    %v1499 = vld [vmem:[#allocation5 + $0x2b8] sm:$0xff]
    %v1500 = vld [vmem:[#allocation5 + $0x2c0] sm:$0xff]
    %v1501 = vld [vmem:[#allocation5 + $0x2c8] sm:$0xff]
    %v1502 = vld [vmem:[#allocation5 + $0x2d0] sm:$0xff]
    %v1503 = vld [vmem:[#allocation5 + $0x2d8] sm:$0xff]
    %v1504 = vld [vmem:[#allocation5 + $0x2e0] sm:$0xff]
    %v1505 = vld [vmem:[#allocation5 + $0x2e8] sm:$0xff]
    %v1506 = vld [vmem:[#allocation5 + $0x2f0] sm:$0xff]
    %v1507 = vld [vmem:[#allocation5 + $0x2f8] sm:$0xff]
    %v1508 = vld [vmem:[#allocation5 + $0x300] sm:$0xff]
    %v1509 = vld [vmem:[#allocation5 + $0x308] sm:$0xff]
    %v1510 = vld [vmem:[#allocation5 + $0x310] sm:$0xff]
    %v1511 = vld [vmem:[#allocation5 + $0x318] sm:$0xff]
    %v1512 = vld [vmem:[#allocation5 + $0x320] sm:$0xff]
    %v1513 = vld [vmem:[#allocation5 + $0x328] sm:$0xff]
    %v1514 = vld [vmem:[#allocation5 + $0x330] sm:$0xff]
    %v1515 = vld [vmem:[#allocation5 + $0x338] sm:$0xff]
    %v1516 = vld [vmem:[#allocation5 + $0x340] sm:$0xff]
    %v1517 = vld [vmem:[#allocation5 + $0x348] sm:$0xff]
    %v1518 = vld [vmem:[#allocation5 + $0x350] sm:$0xff]
    %v1519 = vld [vmem:[#allocation5 + $0x358] sm:$0xff]
    %v1520 = vld [vmem:[#allocation5 + $0x360] sm:$0xff]
    %v1521 = vld [vmem:[#allocation5 + $0x368] sm:$0xff]
    %v1522 = vld [vmem:[#allocation5 + $0x370] sm:$0xff]
    %v1523 = vld [vmem:[#allocation5 + $0x378] sm:$0xff]
    %v1524 = vld [vmem:[#allocation5 + $0x380] sm:$0xff]
    %v1525 = vld [vmem:[#allocation5 + $0x388] sm:$0xff]
    %v1526 = vld [vmem:[#allocation5 + $0x390] sm:$0xff]
    %v1527 = vld [vmem:[#allocation5 + $0x398] sm:$0xff]
    %v1528 = vld [vmem:[#allocation5 + $0x3a0] sm:$0xff]
    %v1529 = vld [vmem:[#allocation5 + $0x3a8] sm:$0xff]
    %v1530 = vld [vmem:[#allocation5 + $0x3b0] sm:$0xff]
    %v1531 = vld [vmem:[#allocation5 + $0x3b8] sm:$0xff]
    %v1532 = vld [vmem:[#allocation5 + $0x3c0] sm:$0xff]
    %v1533 = vld [vmem:[#allocation5 + $0x3c8] sm:$0xff]
    %v1534 = vld [vmem:[#allocation5 + $0x3d0] sm:$0xff]
    %v1535 = vld [vmem:[#allocation5 + $0x3d8] sm:$0xff]
    %v1536 = vld [vmem:[#allocation5 + $0x3e0] sm:$0xff]
    %v1537 = vld [vmem:[#allocation5 + $0x3e8] sm:$0xff]
    %v1538 = vld [vmem:[#allocation5 + $0x3f0] sm:$0xff]
    %v1539 = vld [vmem:[#allocation5 + $0x3f8] sm:$0xff]
    %v1540 = vand.u32 %v1443, 4294901760
    %1541 = vmatprep.subr.mxu0 %v1540
    %v1542 = vand.u32 %v1442, 4294901760
    %1543 = vmatpush1.msra.mxu0 %v1542
    %v1544 = vand.u32 %v1441, 4294901760
    %1545 = vmatprep.subr.mxu0 %v1544
    %v1546 = vand.u32 %v1440, 4294901760
    %1547 = vmatpush1.msra.mxu0 %v1546
    %v1548 = vand.u32 %v1439, 4294901760
    %1549 = vmatprep.subr.mxu0 %v1548
    %v1550 = vand.u32 %v1438, 4294901760
    %1551 = vmatpush1.msra.mxu0 %v1550
    %v1552 = vand.u32 %v1437, 4294901760
    %1553 = vmatprep.subr.mxu0 %v1552
    %v1554 = vand.u32 %v1436, 4294901760
    %1555 = vmatpush1.msra.mxu0 %v1554
    %v1556 = vand.u32 %v1435, 4294901760
    %1557 = vmatprep.subr.mxu0 %v1556
    %v1558 = vand.u32 %v1434, 4294901760
    %1559 = vmatpush1.msra.mxu0 %v1558
    %v1560 = vand.u32 %v1433, 4294901760
    %1561 = vmatprep.subr.mxu0 %v1560
    %v1562 = vand.u32 %v1432, 4294901760
    %1563 = vmatpush1.msra.mxu0 %v1562
    %v1564 = vand.u32 %v1431, 4294901760
    %1565 = vmatprep.subr.mxu0 %v1564
    %v1566 = vand.u32 %v1430, 4294901760
    %1567 = vmatpush1.msra.mxu0 %v1566
    %v1568 = vand.u32 %v1429, 4294901760
    %1569 = vmatprep.subr.mxu0 %v1568
    %v1570 = vand.u32 %v1428, 4294901760
    %1571 = vmatpush1.msra.mxu0 %v1570
    %v1572 = vand.u32 %v1427, 4294901760
    %1573 = vmatprep.subr.mxu0 %v1572
    %v1574 = vand.u32 %v1426, 4294901760
    %1575 = vmatpush1.msra.mxu0 %v1574
    %v1576 = vand.u32 %v1425, 4294901760
    %1577 = vmatprep.subr.mxu0 %v1576
    %v1578 = vand.u32 %v1424, 4294901760
    %1579 = vmatpush1.msra.mxu0 %v1578
    %v1580 = vand.u32 %v1423, 4294901760
    %1581 = vmatprep.subr.mxu0 %v1580
    %v1582 = vand.u32 %v1422, 4294901760
    %1583 = vmatpush1.msra.mxu0 %v1582
    %v1584 = vand.u32 %v1421, 4294901760
    %1585 = vmatprep.subr.mxu0 %v1584
    %v1586 = vand.u32 %v1420, 4294901760
    %1587 = vmatpush1.msra.mxu0 %v1586
    %v1588 = vand.u32 %v1419, 4294901760
    %1589 = vmatprep.subr.mxu0 %v1588
    %v1590 = vand.u32 %v1418, 4294901760
    %1591 = vmatpush1.msra.mxu0 %v1590
    %v1592 = vand.u32 %v1417, 4294901760
    %1593 = vmatprep.subr.mxu0 %v1592
    %v1594 = vand.u32 %v1416, 4294901760
    %1595 = vmatpush1.msra.mxu0 %v1594
    %v1596 = vand.u32 %v1415, 4294901760
    %1597 = vmatprep.subr.mxu0 %v1596
    %v1598 = vand.u32 %v1414, 4294901760
    %1599 = vmatpush1.msra.mxu0 %v1598
    %v1600 = vand.u32 %v1413, 4294901760
    %1601 = vmatprep.subr.mxu0 %v1600
    %v1602 = vand.u32 %v1412, 4294901760
    %1603 = vmatpush1.msra.mxu0 %v1602
    %v1604 = vand.u32 %v1475, 4294901760
    %1605 = vmatprep.subr.mxu0 %v1604
    %v1606 = vand.u32 %v1474, 4294901760
    %1607 = vmatpush2.msra.mxu0 %v1606
    %v1608 = vand.u32 %v1473, 4294901760
    %1609 = vmatprep.subr.mxu0 %v1608
    %v1610 = vand.u32 %v1472, 4294901760
    %1611 = vmatpush2.msra.mxu0 %v1610
    %v1612 = vand.u32 %v1471, 4294901760
    %1613 = vmatprep.subr.mxu0 %v1612
    %v1614 = vand.u32 %v1470, 4294901760
    %1615 = vmatpush2.msra.mxu0 %v1614
    %v1616 = vand.u32 %v1469, 4294901760
    %1617 = vmatprep.subr.mxu0 %v1616
    %v1618 = vand.u32 %v1468, 4294901760
    %1619 = vmatpush2.msra.mxu0 %v1618
    %v1620 = vand.u32 %v1467, 4294901760
    %1621 = vmatprep.subr.mxu0 %v1620
    %v1622 = vand.u32 %v1466, 4294901760
    %1623 = vmatpush2.msra.mxu0 %v1622
    %v1624 = vand.u32 %v1465, 4294901760
    %1625 = vmatprep.subr.mxu0 %v1624
    %v1626 = vand.u32 %v1464, 4294901760
    %1627 = vmatpush2.msra.mxu0 %v1626
    %v1628 = vand.u32 %v1463, 4294901760
    %1629 = vmatprep.subr.mxu0 %v1628
    %v1630 = vand.u32 %v1462, 4294901760
    %1631 = vmatpush2.msra.mxu0 %v1630
    %v1632 = vand.u32 %v1461, 4294901760
    %1633 = vmatprep.subr.mxu0 %v1632
    %v1634 = vand.u32 %v1460, 4294901760
    %1635 = vmatpush2.msra.mxu0 %v1634
    %v1636 = vand.u32 %v1459, 4294901760
    %1637 = vmatprep.subr.mxu0 %v1636
    %v1638 = vand.u32 %v1458, 4294901760
    %1639 = vmatpush2.msra.mxu0 %v1638
    %v1640 = vand.u32 %v1457, 4294901760
    %1641 = vmatprep.subr.mxu0 %v1640
    %v1642 = vand.u32 %v1456, 4294901760
    %1643 = vmatpush2.msra.mxu0 %v1642
    %v1644 = vand.u32 %v1455, 4294901760
    %1645 = vmatprep.subr.mxu0 %v1644
    %v1646 = vand.u32 %v1454, 4294901760
    %1647 = vmatpush2.msra.mxu0 %v1646
    %v1648 = vand.u32 %v1453, 4294901760
    %1649 = vmatprep.subr.mxu0 %v1648
    %v1650 = vand.u32 %v1452, 4294901760
    %1651 = vmatpush2.msra.mxu0 %v1650
    %v1652 = vand.u32 %v1451, 4294901760
    %1653 = vmatprep.subr.mxu0 %v1652
    %v1654 = vand.u32 %v1450, 4294901760
    %1655 = vmatpush2.msra.mxu0 %v1654
    %v1656 = vand.u32 %v1449, 4294901760
    %1657 = vmatprep.subr.mxu0 %v1656
    %v1658 = vand.u32 %v1448, 4294901760
    %1659 = vmatpush2.msra.mxu0 %v1658
    %v1660 = vand.u32 %v1447, 4294901760
    %1661 = vmatprep.subr.mxu0 %v1660
    %v1662 = vand.u32 %v1446, 4294901760
    %1663 = vmatpush2.msra.mxu0 %v1662
    %v1664 = vand.u32 %v1445, 4294901760
    %1665 = vmatprep.subr.mxu0 %v1664
    %v1666 = vand.u32 %v1444, 4294901760
    %1667 = vmatpush2.msra.mxu0 %v1666
    %v1668 = vand.u32 %v1401, 4294901760
    %v1669 = vsub.f32 %v1401, %v1668
    %v1670 = vand.u32 %v1669, 4294901760
    %v1671 = vsub.f32 %v1669, %v1670
    %v1672 = vand.u32 %v1671, 4294901760
    %1673 = vmatprep.mubr.f32.mxu0 %v1672
    %v1674 = vand.u32 %v1400, 4294901760
    %v1675 = vsub.f32 %v1400, %v1674
    %v1676 = vand.u32 %v1675, 4294901760
    %v1677 = vsub.f32 %v1675, %v1676
    %v1678 = vand.u32 %v1677, 4294901760
    %1679 = vmatmul.mubr.f32.gmra.mxu0 %v1678
    %v1680 = vpop.f32.mrf.mxu0
    %v1681 = vadd.f32 0.0, %v1680
    %v1682 = vpop.f32.mrf.mxu0
    %v1683 = vadd.f32 0.0, %v1682
    %1684 = vdwg.mxu0
    %v1685 = vand.u32 %v1443, 4294901760
    %v1686 = vsub.f32 %v1443, %v1685
    %v1687 = vand.u32 %v1686, 4294901760
    %v1688 = vsub.f32 %v1686, %v1687
    %v1689 = vand.u32 %v1688, 4294901760
    %1690 = vmatprep.subr.mxu0 %v1689
    %v1691 = vand.u32 %v1442, 4294901760
    %v1692 = vsub.f32 %v1442, %v1691
    %v1693 = vand.u32 %v1692, 4294901760
    %v1694 = vsub.f32 %v1692, %v1693
    %v1695 = vand.u32 %v1694, 4294901760
    %1696 = vmatpush1.msra.mxu0 %v1695
    %v1697 = vand.u32 %v1441, 4294901760
    %v1698 = vsub.f32 %v1441, %v1697
    %v1699 = vand.u32 %v1698, 4294901760
    %v1700 = vsub.f32 %v1698, %v1699
    %v1701 = vand.u32 %v1700, 4294901760
    %1702 = vmatprep.subr.mxu0 %v1701
    %v1703 = vand.u32 %v1440, 4294901760
    %v1704 = vsub.f32 %v1440, %v1703
    %v1705 = vand.u32 %v1704, 4294901760
    %v1706 = vsub.f32 %v1704, %v1705
    %v1707 = vand.u32 %v1706, 4294901760
    %1708 = vmatpush1.msra.mxu0 %v1707
    %v1709 = vand.u32 %v1439, 4294901760
    %v1710 = vsub.f32 %v1439, %v1709
    %v1711 = vand.u32 %v1710, 4294901760
    %v1712 = vsub.f32 %v1710, %v1711
    %v1713 = vand.u32 %v1712, 4294901760
    %1714 = vmatprep.subr.mxu0 %v1713
    %v1715 = vand.u32 %v1438, 4294901760
    %v1716 = vsub.f32 %v1438, %v1715
    %v1717 = vand.u32 %v1716, 4294901760
    %v1718 = vsub.f32 %v1716, %v1717
    %v1719 = vand.u32 %v1718, 4294901760
    %1720 = vmatpush1.msra.mxu0 %v1719
    %v1721 = vand.u32 %v1437, 4294901760
    %v1722 = vsub.f32 %v1437, %v1721
    %v1723 = vand.u32 %v1722, 4294901760
    %v1724 = vsub.f32 %v1722, %v1723
    %v1725 = vand.u32 %v1724, 4294901760
    %1726 = vmatprep.subr.mxu0 %v1725
    %v1727 = vand.u32 %v1436, 4294901760
    %v1728 = vsub.f32 %v1436, %v1727
    %v1729 = vand.u32 %v1728, 4294901760
    %v1730 = vsub.f32 %v1728, %v1729
    %v1731 = vand.u32 %v1730, 4294901760
    %1732 = vmatpush1.msra.mxu0 %v1731
    %v1733 = vand.u32 %v1435, 4294901760
    %v1734 = vsub.f32 %v1435, %v1733
    %v1735 = vand.u32 %v1734, 4294901760
    %v1736 = vsub.f32 %v1734, %v1735
    %v1737 = vand.u32 %v1736, 4294901760
    %1738 = vmatprep.subr.mxu0 %v1737
    %v1739 = vand.u32 %v1434, 4294901760
    %v1740 = vsub.f32 %v1434, %v1739
    %v1741 = vand.u32 %v1740, 4294901760
    %v1742 = vsub.f32 %v1740, %v1741
    %v1743 = vand.u32 %v1742, 4294901760
    %1744 = vmatpush1.msra.mxu0 %v1743
    %v1745 = vand.u32 %v1433, 4294901760
    %v1746 = vsub.f32 %v1433, %v1745
    %v1747 = vand.u32 %v1746, 4294901760
    %v1748 = vsub.f32 %v1746, %v1747
    %v1749 = vand.u32 %v1748, 4294901760
    %1750 = vmatprep.subr.mxu0 %v1749
    %v1751 = vand.u32 %v1432, 4294901760
    %v1752 = vsub.f32 %v1432, %v1751
    %v1753 = vand.u32 %v1752, 4294901760
    %v1754 = vsub.f32 %v1752, %v1753
    %v1755 = vand.u32 %v1754, 4294901760
    %1756 = vmatpush1.msra.mxu0 %v1755
    %v1757 = vand.u32 %v1431, 4294901760
    %v1758 = vsub.f32 %v1431, %v1757
    %v1759 = vand.u32 %v1758, 4294901760
    %v1760 = vsub.f32 %v1758, %v1759
    %v1761 = vand.u32 %v1760, 4294901760
    %1762 = vmatprep.subr.mxu0 %v1761
    %v1763 = vand.u32 %v1430, 4294901760
    %v1764 = vsub.f32 %v1430, %v1763
    %v1765 = vand.u32 %v1764, 4294901760
    %v1766 = vsub.f32 %v1764, %v1765
    %v1767 = vand.u32 %v1766, 4294901760
    %1768 = vmatpush1.msra.mxu0 %v1767
    %v1769 = vand.u32 %v1429, 4294901760
    %v1770 = vsub.f32 %v1429, %v1769
    %v1771 = vand.u32 %v1770, 4294901760
    %v1772 = vsub.f32 %v1770, %v1771
    %v1773 = vand.u32 %v1772, 4294901760
    %1774 = vmatprep.subr.mxu0 %v1773
    %v1775 = vand.u32 %v1428, 4294901760
    %v1776 = vsub.f32 %v1428, %v1775
    %v1777 = vand.u32 %v1776, 4294901760
    %v1778 = vsub.f32 %v1776, %v1777
    %v1779 = vand.u32 %v1778, 4294901760
    %1780 = vmatpush1.msra.mxu0 %v1779
    %v1781 = vand.u32 %v1427, 4294901760
    %v1782 = vsub.f32 %v1427, %v1781
    %v1783 = vand.u32 %v1782, 4294901760
    %v1784 = vsub.f32 %v1782, %v1783
    %v1785 = vand.u32 %v1784, 4294901760
    %1786 = vmatprep.subr.mxu0 %v1785
    %v1787 = vand.u32 %v1426, 4294901760
    %v1788 = vsub.f32 %v1426, %v1787
    %v1789 = vand.u32 %v1788, 4294901760
    %v1790 = vsub.f32 %v1788, %v1789
    %v1791 = vand.u32 %v1790, 4294901760
    %1792 = vmatpush1.msra.mxu0 %v1791
    %v1793 = vand.u32 %v1425, 4294901760
    %v1794 = vsub.f32 %v1425, %v1793
    %v1795 = vand.u32 %v1794, 4294901760
    %v1796 = vsub.f32 %v1794, %v1795
    %v1797 = vand.u32 %v1796, 4294901760
    %1798 = vmatprep.subr.mxu0 %v1797
    %v1799 = vand.u32 %v1424, 4294901760
    %v1800 = vsub.f32 %v1424, %v1799
    %v1801 = vand.u32 %v1800, 4294901760
    %v1802 = vsub.f32 %v1800, %v1801
    %v1803 = vand.u32 %v1802, 4294901760
    %1804 = vmatpush1.msra.mxu0 %v1803
    %v1805 = vand.u32 %v1423, 4294901760
    %v1806 = vsub.f32 %v1423, %v1805
    %v1807 = vand.u32 %v1806, 4294901760
    %v1808 = vsub.f32 %v1806, %v1807
    %v1809 = vand.u32 %v1808, 4294901760
    %1810 = vmatprep.subr.mxu0 %v1809
    %v1811 = vand.u32 %v1422, 4294901760
    %v1812 = vsub.f32 %v1422, %v1811
    %v1813 = vand.u32 %v1812, 4294901760
    %v1814 = vsub.f32 %v1812, %v1813
    %v1815 = vand.u32 %v1814, 4294901760
    %1816 = vmatpush1.msra.mxu0 %v1815
    %v1817 = vand.u32 %v1421, 4294901760
    %v1818 = vsub.f32 %v1421, %v1817
    %v1819 = vand.u32 %v1818, 4294901760
    %v1820 = vsub.f32 %v1818, %v1819
    %v1821 = vand.u32 %v1820, 4294901760
    %1822 = vmatprep.subr.mxu0 %v1821
    %v1823 = vand.u32 %v1420, 4294901760
    %v1824 = vsub.f32 %v1420, %v1823
    %v1825 = vand.u32 %v1824, 4294901760
    %v1826 = vsub.f32 %v1824, %v1825
    %v1827 = vand.u32 %v1826, 4294901760
    %1828 = vmatpush1.msra.mxu0 %v1827
    %v1829 = vand.u32 %v1419, 4294901760
    %v1830 = vsub.f32 %v1419, %v1829
    %v1831 = vand.u32 %v1830, 4294901760
    %v1832 = vsub.f32 %v1830, %v1831
    %v1833 = vand.u32 %v1832, 4294901760
    %1834 = vmatprep.subr.mxu0 %v1833
    %v1835 = vand.u32 %v1418, 4294901760
    %v1836 = vsub.f32 %v1418, %v1835
    %v1837 = vand.u32 %v1836, 4294901760
    %v1838 = vsub.f32 %v1836, %v1837
    %v1839 = vand.u32 %v1838, 4294901760
    %1840 = vmatpush1.msra.mxu0 %v1839
    %v1841 = vand.u32 %v1417, 4294901760
    %v1842 = vsub.f32 %v1417, %v1841
    %v1843 = vand.u32 %v1842, 4294901760
    %v1844 = vsub.f32 %v1842, %v1843
    %v1845 = vand.u32 %v1844, 4294901760
    %1846 = vmatprep.subr.mxu0 %v1845
    %v1847 = vand.u32 %v1416, 4294901760
    %v1848 = vsub.f32 %v1416, %v1847
    %v1849 = vand.u32 %v1848, 4294901760
    %v1850 = vsub.f32 %v1848, %v1849
    %v1851 = vand.u32 %v1850, 4294901760
    %1852 = vmatpush1.msra.mxu0 %v1851
    %v1853 = vand.u32 %v1415, 4294901760
    %v1854 = vsub.f32 %v1415, %v1853
    %v1855 = vand.u32 %v1854, 4294901760
    %v1856 = vsub.f32 %v1854, %v1855
    %v1857 = vand.u32 %v1856, 4294901760
    %1858 = vmatprep.subr.mxu0 %v1857
    %v1859 = vand.u32 %v1414, 4294901760
    %v1860 = vsub.f32 %v1414, %v1859
    %v1861 = vand.u32 %v1860, 4294901760
    %v1862 = vsub.f32 %v1860, %v1861
    %v1863 = vand.u32 %v1862, 4294901760
    %1864 = vmatpush1.msra.mxu0 %v1863
    %v1865 = vand.u32 %v1413, 4294901760
    %v1866 = vsub.f32 %v1413, %v1865
    %v1867 = vand.u32 %v1866, 4294901760
    %v1868 = vsub.f32 %v1866, %v1867
    %v1869 = vand.u32 %v1868, 4294901760
    %1870 = vmatprep.subr.mxu0 %v1869
    %v1871 = vand.u32 %v1412, 4294901760
    %v1872 = vsub.f32 %v1412, %v1871
    %v1873 = vand.u32 %v1872, 4294901760
    %v1874 = vsub.f32 %v1872, %v1873
    %v1875 = vand.u32 %v1874, 4294901760
    %1876 = vmatpush1.msra.mxu0 %v1875
    %v1877 = vand.u32 %v1475, 4294901760
    %v1878 = vsub.f32 %v1475, %v1877
    %v1879 = vand.u32 %v1878, 4294901760
    %v1880 = vsub.f32 %v1878, %v1879
    %v1881 = vand.u32 %v1880, 4294901760
    %1882 = vmatprep.subr.mxu0 %v1881
    %v1883 = vand.u32 %v1474, 4294901760
    %v1884 = vsub.f32 %v1474, %v1883
    %v1885 = vand.u32 %v1884, 4294901760
    %v1886 = vsub.f32 %v1884, %v1885
    %v1887 = vand.u32 %v1886, 4294901760
    %1888 = vmatpush2.msra.mxu0 %v1887
    %v1889 = vand.u32 %v1473, 4294901760
    %v1890 = vsub.f32 %v1473, %v1889
    %v1891 = vand.u32 %v1890, 4294901760
    %v1892 = vsub.f32 %v1890, %v1891
    %v1893 = vand.u32 %v1892, 4294901760
    %1894 = vmatprep.subr.mxu0 %v1893
    %v1895 = vand.u32 %v1472, 4294901760
    %v1896 = vsub.f32 %v1472, %v1895
    %v1897 = vand.u32 %v1896, 4294901760
    %v1898 = vsub.f32 %v1896, %v1897
    %v1899 = vand.u32 %v1898, 4294901760
    %1900 = vmatpush2.msra.mxu0 %v1899
    %v1901 = vand.u32 %v1471, 4294901760
    %v1902 = vsub.f32 %v1471, %v1901
    %v1903 = vand.u32 %v1902, 4294901760
    %v1904 = vsub.f32 %v1902, %v1903
    %v1905 = vand.u32 %v1904, 4294901760
    %1906 = vmatprep.subr.mxu0 %v1905
    %v1907 = vand.u32 %v1470, 4294901760
    %v1908 = vsub.f32 %v1470, %v1907
    %v1909 = vand.u32 %v1908, 4294901760
    %v1910 = vsub.f32 %v1908, %v1909
    %v1911 = vand.u32 %v1910, 4294901760
    %1912 = vmatpush2.msra.mxu0 %v1911
    %v1913 = vand.u32 %v1469, 4294901760
    %v1914 = vsub.f32 %v1469, %v1913
    %v1915 = vand.u32 %v1914, 4294901760
    %v1916 = vsub.f32 %v1914, %v1915
    %v1917 = vand.u32 %v1916, 4294901760
    %1918 = vmatprep.subr.mxu0 %v1917
    %v1919 = vand.u32 %v1468, 4294901760
    %v1920 = vsub.f32 %v1468, %v1919
    %v1921 = vand.u32 %v1920, 4294901760
    %v1922 = vsub.f32 %v1920, %v1921
    %v1923 = vand.u32 %v1922, 4294901760
    %1924 = vmatpush2.msra.mxu0 %v1923
    %v1925 = vand.u32 %v1467, 4294901760
    %v1926 = vsub.f32 %v1467, %v1925
    %v1927 = vand.u32 %v1926, 4294901760
    %v1928 = vsub.f32 %v1926, %v1927
    %v1929 = vand.u32 %v1928, 4294901760
    %1930 = vmatprep.subr.mxu0 %v1929
    %v1931 = vand.u32 %v1466, 4294901760
    %v1932 = vsub.f32 %v1466, %v1931
    %v1933 = vand.u32 %v1932, 4294901760
    %v1934 = vsub.f32 %v1932, %v1933
    %v1935 = vand.u32 %v1934, 4294901760
    %1936 = vmatpush2.msra.mxu0 %v1935
    %v1937 = vand.u32 %v1465, 4294901760
    %v1938 = vsub.f32 %v1465, %v1937
    %v1939 = vand.u32 %v1938, 4294901760
    %v1940 = vsub.f32 %v1938, %v1939
    %v1941 = vand.u32 %v1940, 4294901760
    %1942 = vmatprep.subr.mxu0 %v1941
    %v1943 = vand.u32 %v1464, 4294901760
    %v1944 = vsub.f32 %v1464, %v1943
    %v1945 = vand.u32 %v1944, 4294901760
    %v1946 = vsub.f32 %v1944, %v1945
    %v1947 = vand.u32 %v1946, 4294901760
    %1948 = vmatpush2.msra.mxu0 %v1947
    %v1949 = vand.u32 %v1463, 4294901760
    %v1950 = vsub.f32 %v1463, %v1949
    %v1951 = vand.u32 %v1950, 4294901760
    %v1952 = vsub.f32 %v1950, %v1951
    %v1953 = vand.u32 %v1952, 4294901760
    %1954 = vmatprep.subr.mxu0 %v1953
    %v1955 = vand.u32 %v1462, 4294901760
    %v1956 = vsub.f32 %v1462, %v1955
    %v1957 = vand.u32 %v1956, 4294901760
    %v1958 = vsub.f32 %v1956, %v1957
    %v1959 = vand.u32 %v1958, 4294901760
    %1960 = vmatpush2.msra.mxu0 %v1959
    %v1961 = vand.u32 %v1461, 4294901760
    %v1962 = vsub.f32 %v1461, %v1961
    %v1963 = vand.u32 %v1962, 4294901760
    %v1964 = vsub.f32 %v1962, %v1963
    %v1965 = vand.u32 %v1964, 4294901760
    %1966 = vmatprep.subr.mxu0 %v1965
    %v1967 = vand.u32 %v1460, 4294901760
    %v1968 = vsub.f32 %v1460, %v1967
    %v1969 = vand.u32 %v1968, 4294901760
    %v1970 = vsub.f32 %v1968, %v1969
    %v1971 = vand.u32 %v1970, 4294901760
    %1972 = vmatpush2.msra.mxu0 %v1971
    %v1973 = vand.u32 %v1459, 4294901760
    %v1974 = vsub.f32 %v1459, %v1973
    %v1975 = vand.u32 %v1974, 4294901760
    %v1976 = vsub.f32 %v1974, %v1975
    %v1977 = vand.u32 %v1976, 4294901760
    %1978 = vmatprep.subr.mxu0 %v1977
    %v1979 = vand.u32 %v1458, 4294901760
    %v1980 = vsub.f32 %v1458, %v1979
    %v1981 = vand.u32 %v1980, 4294901760
    %v1982 = vsub.f32 %v1980, %v1981
    %v1983 = vand.u32 %v1982, 4294901760
    %1984 = vmatpush2.msra.mxu0 %v1983
    %v1985 = vand.u32 %v1457, 4294901760
    %v1986 = vsub.f32 %v1457, %v1985
    %v1987 = vand.u32 %v1986, 4294901760
    %v1988 = vsub.f32 %v1986, %v1987
    %v1989 = vand.u32 %v1988, 4294901760
    %1990 = vmatprep.subr.mxu0 %v1989
    %v1991 = vand.u32 %v1456, 4294901760
    %v1992 = vsub.f32 %v1456, %v1991
    %v1993 = vand.u32 %v1992, 4294901760
    %v1994 = vsub.f32 %v1992, %v1993
    %v1995 = vand.u32 %v1994, 4294901760
    %1996 = vmatpush2.msra.mxu0 %v1995
    %v1997 = vand.u32 %v1455, 4294901760
    %v1998 = vsub.f32 %v1455, %v1997
    %v1999 = vand.u32 %v1998, 4294901760
    %v2000 = vsub.f32 %v1998, %v1999
    %v2001 = vand.u32 %v2000, 4294901760
    %2002 = vmatprep.subr.mxu0 %v2001
    %v2003 = vand.u32 %v1454, 4294901760
    %v2004 = vsub.f32 %v1454, %v2003
    %v2005 = vand.u32 %v2004, 4294901760
    %v2006 = vsub.f32 %v2004, %v2005
    %v2007 = vand.u32 %v2006, 4294901760
    %2008 = vmatpush2.msra.mxu0 %v2007
    %v2009 = vand.u32 %v1453, 4294901760
    %v2010 = vsub.f32 %v1453, %v2009
    %v2011 = vand.u32 %v2010, 4294901760
    %v2012 = vsub.f32 %v2010, %v2011
    %v2013 = vand.u32 %v2012, 4294901760
    %2014 = vmatprep.subr.mxu0 %v2013
    %v2015 = vand.u32 %v1452, 4294901760
    %v2016 = vsub.f32 %v1452, %v2015
    %v2017 = vand.u32 %v2016, 4294901760
    %v2018 = vsub.f32 %v2016, %v2017
    %v2019 = vand.u32 %v2018, 4294901760
    %2020 = vmatpush2.msra.mxu0 %v2019
    %v2021 = vand.u32 %v1451, 4294901760
    %v2022 = vsub.f32 %v1451, %v2021
    %v2023 = vand.u32 %v2022, 4294901760
    %v2024 = vsub.f32 %v2022, %v2023
    %v2025 = vand.u32 %v2024, 4294901760
    %2026 = vmatprep.subr.mxu0 %v2025
    %v2027 = vand.u32 %v1450, 4294901760
    %v2028 = vsub.f32 %v1450, %v2027
    %v2029 = vand.u32 %v2028, 4294901760
    %v2030 = vsub.f32 %v2028, %v2029
    %v2031 = vand.u32 %v2030, 4294901760
    %2032 = vmatpush2.msra.mxu0 %v2031
    %v2033 = vand.u32 %v1449, 4294901760
    %v2034 = vsub.f32 %v1449, %v2033
    %v2035 = vand.u32 %v2034, 4294901760
    %v2036 = vsub.f32 %v2034, %v2035
    %v2037 = vand.u32 %v2036, 4294901760
    %2038 = vmatprep.subr.mxu0 %v2037
    %v2039 = vand.u32 %v1448, 4294901760
    %v2040 = vsub.f32 %v1448, %v2039
    %v2041 = vand.u32 %v2040, 4294901760
    %v2042 = vsub.f32 %v2040, %v2041
    %v2043 = vand.u32 %v2042, 4294901760
    %2044 = vmatpush2.msra.mxu0 %v2043
    %v2045 = vand.u32 %v1447, 4294901760
    %v2046 = vsub.f32 %v1447, %v2045
    %v2047 = vand.u32 %v2046, 4294901760
    %v2048 = vsub.f32 %v2046, %v2047
    %v2049 = vand.u32 %v2048, 4294901760
    %2050 = vmatprep.subr.mxu0 %v2049
    %v2051 = vand.u32 %v1446, 4294901760
    %v2052 = vsub.f32 %v1446, %v2051
    %v2053 = vand.u32 %v2052, 4294901760
    %v2054 = vsub.f32 %v2052, %v2053
    %v2055 = vand.u32 %v2054, 4294901760
    %2056 = vmatpush2.msra.mxu0 %v2055
    %v2057 = vand.u32 %v1445, 4294901760
    %v2058 = vsub.f32 %v1445, %v2057
    %v2059 = vand.u32 %v2058, 4294901760
    %v2060 = vsub.f32 %v2058, %v2059
    %v2061 = vand.u32 %v2060, 4294901760
    %2062 = vmatprep.subr.mxu0 %v2061
    %v2063 = vand.u32 %v1444, 4294901760
    %v2064 = vsub.f32 %v1444, %v2063
    %v2065 = vand.u32 %v2064, 4294901760
    %v2066 = vsub.f32 %v2064, %v2065
    %v2067 = vand.u32 %v2066, 4294901760
    %2068 = vmatpush2.msra.mxu0 %v2067
    %v2069 = vand.u32 %v1401, 4294901760
    %2070 = vmatprep.mubr.f32.mxu0 %v2069
    %v2071 = vand.u32 %v1400, 4294901760
    %2072 = vmatmul.mubr.f32.gmra.mxu0 %v2071
    %v2073 = vpop.f32.mrf.mxu0
    %v2074 = vadd.f32 %v1681, %v2073
    %v2075 = vpop.f32.mrf.mxu0
    %v2076 = vadd.f32 %v1683, %v2075
    %2077 = vdwg.mxu0
    %v2078 = vand.u32 %v1443, 4294901760
    %v2079 = vsub.f32 %v1443, %v2078
    %2080 = vmatprep.subr.mxu0 %v2079
    %v2081 = vand.u32 %v1442, 4294901760
    %v2082 = vsub.f32 %v1442, %v2081
    %2083 = vmatpush1.msra.mxu0 %v2082
    %v2084 = vand.u32 %v1441, 4294901760
    %v2085 = vsub.f32 %v1441, %v2084
    %2086 = vmatprep.subr.mxu0 %v2085
    %v2087 = vand.u32 %v1440, 4294901760
    %v2088 = vsub.f32 %v1440, %v2087
    %2089 = vmatpush1.msra.mxu0 %v2088
    %v2090 = vand.u32 %v1439, 4294901760
    %v2091 = vsub.f32 %v1439, %v2090
    %2092 = vmatprep.subr.mxu0 %v2091
    %v2093 = vand.u32 %v1438, 4294901760
    %v2094 = vsub.f32 %v1438, %v2093
    %2095 = vmatpush1.msra.mxu0 %v2094
    %v2096 = vand.u32 %v1437, 4294901760
    %v2097 = vsub.f32 %v1437, %v2096
    %2098 = vmatprep.subr.mxu0 %v2097
    %v2099 = vand.u32 %v1436, 4294901760
    %v2100 = vsub.f32 %v1436, %v2099
    %2101 = vmatpush1.msra.mxu0 %v2100
    %v2102 = vand.u32 %v1435, 4294901760
    %v2103 = vsub.f32 %v1435, %v2102
    %2104 = vmatprep.subr.mxu0 %v2103
    %v2105 = vand.u32 %v1434, 4294901760
    %v2106 = vsub.f32 %v1434, %v2105
    %2107 = vmatpush1.msra.mxu0 %v2106
    %v2108 = vand.u32 %v1433, 4294901760
    %v2109 = vsub.f32 %v1433, %v2108
    %2110 = vmatprep.subr.mxu0 %v2109
    %v2111 = vand.u32 %v1432, 4294901760
    %v2112 = vsub.f32 %v1432, %v2111
    %2113 = vmatpush1.msra.mxu0 %v2112
    %v2114 = vand.u32 %v1431, 4294901760
    %v2115 = vsub.f32 %v1431, %v2114
    %2116 = vmatprep.subr.mxu0 %v2115
    %v2117 = vand.u32 %v1430, 4294901760
    %v2118 = vsub.f32 %v1430, %v2117
    %2119 = vmatpush1.msra.mxu0 %v2118
    %v2120 = vand.u32 %v1429, 4294901760
    %v2121 = vsub.f32 %v1429, %v2120
    %2122 = vmatprep.subr.mxu0 %v2121
    %v2123 = vand.u32 %v1428, 4294901760
    %v2124 = vsub.f32 %v1428, %v2123
    %2125 = vmatpush1.msra.mxu0 %v2124
    %v2126 = vand.u32 %v1427, 4294901760
    %v2127 = vsub.f32 %v1427, %v2126
    %2128 = vmatprep.subr.mxu0 %v2127
    %v2129 = vand.u32 %v1426, 4294901760
    %v2130 = vsub.f32 %v1426, %v2129
    %2131 = vmatpush1.msra.mxu0 %v2130
    %v2132 = vand.u32 %v1425, 4294901760
    %v2133 = vsub.f32 %v1425, %v2132
    %2134 = vmatprep.subr.mxu0 %v2133
    %v2135 = vand.u32 %v1424, 4294901760
    %v2136 = vsub.f32 %v1424, %v2135
    %2137 = vmatpush1.msra.mxu0 %v2136
    %v2138 = vand.u32 %v1423, 4294901760
    %v2139 = vsub.f32 %v1423, %v2138
    %2140 = vmatprep.subr.mxu0 %v2139
    %v2141 = vand.u32 %v1422, 4294901760
    %v2142 = vsub.f32 %v1422, %v2141
    %2143 = vmatpush1.msra.mxu0 %v2142
    %v2144 = vand.u32 %v1421, 4294901760
    %v2145 = vsub.f32 %v1421, %v2144
    %2146 = vmatprep.subr.mxu0 %v2145
    %v2147 = vand.u32 %v1420, 4294901760
    %v2148 = vsub.f32 %v1420, %v2147
    %2149 = vmatpush1.msra.mxu0 %v2148
    %v2150 = vand.u32 %v1419, 4294901760
    %v2151 = vsub.f32 %v1419, %v2150
    %2152 = vmatprep.subr.mxu0 %v2151
    %v2153 = vand.u32 %v1418, 4294901760
    %v2154 = vsub.f32 %v1418, %v2153
    %2155 = vmatpush1.msra.mxu0 %v2154
    %v2156 = vand.u32 %v1417, 4294901760
    %v2157 = vsub.f32 %v1417, %v2156
    %2158 = vmatprep.subr.mxu0 %v2157
    %v2159 = vand.u32 %v1416, 4294901760
    %v2160 = vsub.f32 %v1416, %v2159
    %2161 = vmatpush1.msra.mxu0 %v2160
    %v2162 = vand.u32 %v1415, 4294901760
    %v2163 = vsub.f32 %v1415, %v2162
    %2164 = vmatprep.subr.mxu0 %v2163
    %v2165 = vand.u32 %v1414, 4294901760
    %v2166 = vsub.f32 %v1414, %v2165
    %2167 = vmatpush1.msra.mxu0 %v2166
    %v2168 = vand.u32 %v1413, 4294901760
    %v2169 = vsub.f32 %v1413, %v2168
    %2170 = vmatprep.subr.mxu0 %v2169
    %v2171 = vand.u32 %v1412, 4294901760
    %v2172 = vsub.f32 %v1412, %v2171
    %2173 = vmatpush1.msra.mxu0 %v2172
    %v2174 = vand.u32 %v1475, 4294901760
    %v2175 = vsub.f32 %v1475, %v2174
    %2176 = vmatprep.subr.mxu0 %v2175
    %v2177 = vand.u32 %v1474, 4294901760
    %v2178 = vsub.f32 %v1474, %v2177
    %2179 = vmatpush2.msra.mxu0 %v2178
    %v2180 = vand.u32 %v1473, 4294901760
    %v2181 = vsub.f32 %v1473, %v2180
    %2182 = vmatprep.subr.mxu0 %v2181
    %v2183 = vand.u32 %v1472, 4294901760
    %v2184 = vsub.f32 %v1472, %v2183
    %2185 = vmatpush2.msra.mxu0 %v2184
    %v2186 = vand.u32 %v1471, 4294901760
    %v2187 = vsub.f32 %v1471, %v2186
    %2188 = vmatprep.subr.mxu0 %v2187
    %v2189 = vand.u32 %v1470, 4294901760
    %v2190 = vsub.f32 %v1470, %v2189
    %2191 = vmatpush2.msra.mxu0 %v2190
    %v2192 = vand.u32 %v1469, 4294901760
    %v2193 = vsub.f32 %v1469, %v2192
    %2194 = vmatprep.subr.mxu0 %v2193
    %v2195 = vand.u32 %v1468, 4294901760
    %v2196 = vsub.f32 %v1468, %v2195
    %2197 = vmatpush2.msra.mxu0 %v2196
    %v2198 = vand.u32 %v1467, 4294901760
    %v2199 = vsub.f32 %v1467, %v2198
    %2200 = vmatprep.subr.mxu0 %v2199
    %v2201 = vand.u32 %v1466, 4294901760
    %v2202 = vsub.f32 %v1466, %v2201
    %2203 = vmatpush2.msra.mxu0 %v2202
    %v2204 = vand.u32 %v1465, 4294901760
    %v2205 = vsub.f32 %v1465, %v2204
    %2206 = vmatprep.subr.mxu0 %v2205
    %v2207 = vand.u32 %v1464, 4294901760
    %v2208 = vsub.f32 %v1464, %v2207
    %2209 = vmatpush2.msra.mxu0 %v2208
    %v2210 = vand.u32 %v1463, 4294901760
    %v2211 = vsub.f32 %v1463, %v2210
    %2212 = vmatprep.subr.mxu0 %v2211
    %v2213 = vand.u32 %v1462, 4294901760
    %v2214 = vsub.f32 %v1462, %v2213
    %2215 = vmatpush2.msra.mxu0 %v2214
    %v2216 = vand.u32 %v1461, 4294901760
    %v2217 = vsub.f32 %v1461, %v2216
    %2218 = vmatprep.subr.mxu0 %v2217
    %v2219 = vand.u32 %v1460, 4294901760
    %v2220 = vsub.f32 %v1460, %v2219
    %2221 = vmatpush2.msra.mxu0 %v2220
    %v2222 = vand.u32 %v1459, 4294901760
    %v2223 = vsub.f32 %v1459, %v2222
    %2224 = vmatprep.subr.mxu0 %v2223
    %v2225 = vand.u32 %v1458, 4294901760
    %v2226 = vsub.f32 %v1458, %v2225
    %2227 = vmatpush2.msra.mxu0 %v2226
    %v2228 = vand.u32 %v1457, 4294901760
    %v2229 = vsub.f32 %v1457, %v2228
    %2230 = vmatprep.subr.mxu0 %v2229
    %v2231 = vand.u32 %v1456, 4294901760
    %v2232 = vsub.f32 %v1456, %v2231
    %2233 = vmatpush2.msra.mxu0 %v2232
    %v2234 = vand.u32 %v1455, 4294901760
    %v2235 = vsub.f32 %v1455, %v2234
    %2236 = vmatprep.subr.mxu0 %v2235
    %v2237 = vand.u32 %v1454, 4294901760
    %v2238 = vsub.f32 %v1454, %v2237
    %2239 = vmatpush2.msra.mxu0 %v2238
    %v2240 = vand.u32 %v1453, 4294901760
    %v2241 = vsub.f32 %v1453, %v2240
    %2242 = vmatprep.subr.mxu0 %v2241
    %v2243 = vand.u32 %v1452, 4294901760
    %v2244 = vsub.f32 %v1452, %v2243
    %2245 = vmatpush2.msra.mxu0 %v2244
    %v2246 = vand.u32 %v1451, 4294901760
    %v2247 = vsub.f32 %v1451, %v2246
    %2248 = vmatprep.subr.mxu0 %v2247
    %v2249 = vand.u32 %v1450, 4294901760
    %v2250 = vsub.f32 %v1450, %v2249
    %2251 = vmatpush2.msra.mxu0 %v2250
    %v2252 = vand.u32 %v1449, 4294901760
    %v2253 = vsub.f32 %v1449, %v2252
    %2254 = vmatprep.subr.mxu0 %v2253
    %v2255 = vand.u32 %v1448, 4294901760
    %v2256 = vsub.f32 %v1448, %v2255
    %2257 = vmatpush2.msra.mxu0 %v2256
    %v2258 = vand.u32 %v1447, 4294901760
    %v2259 = vsub.f32 %v1447, %v2258
    %2260 = vmatprep.subr.mxu0 %v2259
    %v2261 = vand.u32 %v1446, 4294901760
    %v2262 = vsub.f32 %v1446, %v2261
    %2263 = vmatpush2.msra.mxu0 %v2262
    %v2264 = vand.u32 %v1445, 4294901760
    %v2265 = vsub.f32 %v1445, %v2264
    %2266 = vmatprep.subr.mxu0 %v2265
    %v2267 = vand.u32 %v1444, 4294901760
    %v2268 = vsub.f32 %v1444, %v2267
    %2269 = vmatpush2.msra.mxu0 %v2268
    %v2270 = vand.u32 %v1401, 4294901760
    %v2271 = vsub.f32 %v1401, %v2270
    %2272 = vmatprep.mubr.f32.mxu0 %v2271
    %v2273 = vand.u32 %v1400, 4294901760
    %v2274 = vsub.f32 %v1400, %v2273
    %2275 = vmatmul.mubr.f32.gmra.mxu0 %v2274
    %v2276 = vpop.f32.mrf.mxu0
    %v2277 = vadd.f32 %v2074, %v2276
    %v2278 = vpop.f32.mrf.mxu0
    %v2279 = vadd.f32 %v2076, %v2278
    %2280 = vdwg.mxu0
    %v2281 = vand.u32 %v1443, 4294901760
    %2282 = vmatprep.subr.mxu0 %v2281
    %v2283 = vand.u32 %v1442, 4294901760
    %2284 = vmatpush1.msra.mxu0 %v2283
    %v2285 = vand.u32 %v1441, 4294901760
    %2286 = vmatprep.subr.mxu0 %v2285
    %v2287 = vand.u32 %v1440, 4294901760
    %2288 = vmatpush1.msra.mxu0 %v2287
    %v2289 = vand.u32 %v1439, 4294901760
    %2290 = vmatprep.subr.mxu0 %v2289
    %v2291 = vand.u32 %v1438, 4294901760
    %2292 = vmatpush1.msra.mxu0 %v2291
    %v2293 = vand.u32 %v1437, 4294901760
    %2294 = vmatprep.subr.mxu0 %v2293
    %v2295 = vand.u32 %v1436, 4294901760
    %2296 = vmatpush1.msra.mxu0 %v2295
    %v2297 = vand.u32 %v1435, 4294901760
    %2298 = vmatprep.subr.mxu0 %v2297
    %v2299 = vand.u32 %v1434, 4294901760
    %2300 = vmatpush1.msra.mxu0 %v2299
    %v2301 = vand.u32 %v1433, 4294901760
    %2302 = vmatprep.subr.mxu0 %v2301
    %v2303 = vand.u32 %v1432, 4294901760
    %2304 = vmatpush1.msra.mxu0 %v2303
    %v2305 = vand.u32 %v1431, 4294901760
    %2306 = vmatprep.subr.mxu0 %v2305
    %v2307 = vand.u32 %v1430, 4294901760
    %2308 = vmatpush1.msra.mxu0 %v2307
    %v2309 = vand.u32 %v1429, 4294901760
    %2310 = vmatprep.subr.mxu0 %v2309
    %v2311 = vand.u32 %v1428, 4294901760
    %2312 = vmatpush1.msra.mxu0 %v2311
    %v2313 = vand.u32 %v1427, 4294901760
    %2314 = vmatprep.subr.mxu0 %v2313
    %v2315 = vand.u32 %v1426, 4294901760
    %2316 = vmatpush1.msra.mxu0 %v2315
    %v2317 = vand.u32 %v1425, 4294901760
    %2318 = vmatprep.subr.mxu0 %v2317
    %v2319 = vand.u32 %v1424, 4294901760
    %2320 = vmatpush1.msra.mxu0 %v2319
    %v2321 = vand.u32 %v1423, 4294901760
    %2322 = vmatprep.subr.mxu0 %v2321
    %v2323 = vand.u32 %v1422, 4294901760
    %2324 = vmatpush1.msra.mxu0 %v2323
    %v2325 = vand.u32 %v1421, 4294901760
    %2326 = vmatprep.subr.mxu0 %v2325
    %v2327 = vand.u32 %v1420, 4294901760
    %2328 = vmatpush1.msra.mxu0 %v2327
    %v2329 = vand.u32 %v1419, 4294901760
    %2330 = vmatprep.subr.mxu0 %v2329
    %v2331 = vand.u32 %v1418, 4294901760
    %2332 = vmatpush1.msra.mxu0 %v2331
    %v2333 = vand.u32 %v1417, 4294901760
    %2334 = vmatprep.subr.mxu0 %v2333
    %v2335 = vand.u32 %v1416, 4294901760
    %2336 = vmatpush1.msra.mxu0 %v2335
    %v2337 = vand.u32 %v1415, 4294901760
    %2338 = vmatprep.subr.mxu0 %v2337
    %v2339 = vand.u32 %v1414, 4294901760
    %2340 = vmatpush1.msra.mxu0 %v2339
    %v2341 = vand.u32 %v1413, 4294901760
    %2342 = vmatprep.subr.mxu0 %v2341
    %v2343 = vand.u32 %v1412, 4294901760
    %2344 = vmatpush1.msra.mxu0 %v2343
    %v2345 = vand.u32 %v1475, 4294901760
    %2346 = vmatprep.subr.mxu0 %v2345
    %v2347 = vand.u32 %v1474, 4294901760
    %2348 = vmatpush2.msra.mxu0 %v2347
    %v2349 = vand.u32 %v1473, 4294901760
    %2350 = vmatprep.subr.mxu0 %v2349
    %v2351 = vand.u32 %v1472, 4294901760
    %2352 = vmatpush2.msra.mxu0 %v2351
    %v2353 = vand.u32 %v1471, 4294901760
    %2354 = vmatprep.subr.mxu0 %v2353
    %v2355 = vand.u32 %v1470, 4294901760
    %2356 = vmatpush2.msra.mxu0 %v2355
    %v2357 = vand.u32 %v1469, 4294901760
    %2358 = vmatprep.subr.mxu0 %v2357
    %v2359 = vand.u32 %v1468, 4294901760
    %2360 = vmatpush2.msra.mxu0 %v2359
    %v2361 = vand.u32 %v1467, 4294901760
    %2362 = vmatprep.subr.mxu0 %v2361
    %v2363 = vand.u32 %v1466, 4294901760
    %2364 = vmatpush2.msra.mxu0 %v2363
    %v2365 = vand.u32 %v1465, 4294901760
    %2366 = vmatprep.subr.mxu0 %v2365
    %v2367 = vand.u32 %v1464, 4294901760
    %2368 = vmatpush2.msra.mxu0 %v2367
    %v2369 = vand.u32 %v1463, 4294901760
    %2370 = vmatprep.subr.mxu0 %v2369
    %v2371 = vand.u32 %v1462, 4294901760
    %2372 = vmatpush2.msra.mxu0 %v2371
    %v2373 = vand.u32 %v1461, 4294901760
    %2374 = vmatprep.subr.mxu0 %v2373
    %v2375 = vand.u32 %v1460, 4294901760
    %2376 = vmatpush2.msra.mxu0 %v2375
    %v2377 = vand.u32 %v1459, 4294901760
    %2378 = vmatprep.subr.mxu0 %v2377
    %v2379 = vand.u32 %v1458, 4294901760
    %2380 = vmatpush2.msra.mxu0 %v2379
    %v2381 = vand.u32 %v1457, 4294901760
    %2382 = vmatprep.subr.mxu0 %v2381
    %v2383 = vand.u32 %v1456, 4294901760
    %2384 = vmatpush2.msra.mxu0 %v2383
    %v2385 = vand.u32 %v1455, 4294901760
    %2386 = vmatprep.subr.mxu0 %v2385
    %v2387 = vand.u32 %v1454, 4294901760
    %2388 = vmatpush2.msra.mxu0 %v2387
    %v2389 = vand.u32 %v1453, 4294901760
    %2390 = vmatprep.subr.mxu0 %v2389
    %v2391 = vand.u32 %v1452, 4294901760
    %2392 = vmatpush2.msra.mxu0 %v2391
    %v2393 = vand.u32 %v1451, 4294901760
    %2394 = vmatprep.subr.mxu0 %v2393
    %v2395 = vand.u32 %v1450, 4294901760
    %2396 = vmatpush2.msra.mxu0 %v2395
    %v2397 = vand.u32 %v1449, 4294901760
    %2398 = vmatprep.subr.mxu0 %v2397
    %v2399 = vand.u32 %v1448, 4294901760
    %2400 = vmatpush2.msra.mxu0 %v2399
    %v2401 = vand.u32 %v1447, 4294901760
    %2402 = vmatprep.subr.mxu0 %v2401
    %v2403 = vand.u32 %v1446, 4294901760
    %2404 = vmatpush2.msra.mxu0 %v2403
    %v2405 = vand.u32 %v1445, 4294901760
    %2406 = vmatprep.subr.mxu0 %v2405
    %v2407 = vand.u32 %v1444, 4294901760
    %2408 = vmatpush2.msra.mxu0 %v2407
    %v2409 = vand.u32 %v1401, 4294901760
    %v2410 = vsub.f32 %v1401, %v2409
    %v2411 = vand.u32 %v2410, 4294901760
    %2412 = vmatprep.mubr.f32.mxu0 %v2411
    %v2413 = vand.u32 %v1400, 4294901760
    %v2414 = vsub.f32 %v1400, %v2413
    %v2415 = vand.u32 %v2414, 4294901760
    %2416 = vmatmul.mubr.f32.gmra.mxu0 %v2415
    %v2417 = vpop.f32.mrf.mxu0
    %v2418 = vadd.f32 %v2277, %v2417
    %v2419 = vpop.f32.mrf.mxu0
    %v2420 = vadd.f32 %v2279, %v2419
    %2421 = vdwg.mxu0
    %v2422 = vand.u32 %v1443, 4294901760
    %v2423 = vsub.f32 %v1443, %v2422
    %v2424 = vand.u32 %v2423, 4294901760
    %2425 = vmatprep.subr.mxu0 %v2424
    %v2426 = vand.u32 %v1442, 4294901760
    %v2427 = vsub.f32 %v1442, %v2426
    %v2428 = vand.u32 %v2427, 4294901760
    %2429 = vmatpush1.msra.mxu0 %v2428
    %v2430 = vand.u32 %v1441, 4294901760
    %v2431 = vsub.f32 %v1441, %v2430
    %v2432 = vand.u32 %v2431, 4294901760
    %2433 = vmatprep.subr.mxu0 %v2432
    %v2434 = vand.u32 %v1440, 4294901760
    %v2435 = vsub.f32 %v1440, %v2434
    %v2436 = vand.u32 %v2435, 4294901760
    %2437 = vmatpush1.msra.mxu0 %v2436
    %v2438 = vand.u32 %v1439, 4294901760
    %v2439 = vsub.f32 %v1439, %v2438
    %v2440 = vand.u32 %v2439, 4294901760
    %2441 = vmatprep.subr.mxu0 %v2440
    %v2442 = vand.u32 %v1438, 4294901760
    %v2443 = vsub.f32 %v1438, %v2442
    %v2444 = vand.u32 %v2443, 4294901760
    %2445 = vmatpush1.msra.mxu0 %v2444
    %v2446 = vand.u32 %v1437, 4294901760
    %v2447 = vsub.f32 %v1437, %v2446
    %v2448 = vand.u32 %v2447, 4294901760
    %2449 = vmatprep.subr.mxu0 %v2448
    %v2450 = vand.u32 %v1436, 4294901760
    %v2451 = vsub.f32 %v1436, %v2450
    %v2452 = vand.u32 %v2451, 4294901760
    %2453 = vmatpush1.msra.mxu0 %v2452
    %v2454 = vand.u32 %v1435, 4294901760
    %v2455 = vsub.f32 %v1435, %v2454
    %v2456 = vand.u32 %v2455, 4294901760
    %2457 = vmatprep.subr.mxu0 %v2456
    %v2458 = vand.u32 %v1434, 4294901760
    %v2459 = vsub.f32 %v1434, %v2458
    %v2460 = vand.u32 %v2459, 4294901760
    %2461 = vmatpush1.msra.mxu0 %v2460
    %v2462 = vand.u32 %v1433, 4294901760
    %v2463 = vsub.f32 %v1433, %v2462
    %v2464 = vand.u32 %v2463, 4294901760
    %2465 = vmatprep.subr.mxu0 %v2464
    %v2466 = vand.u32 %v1432, 4294901760
    %v2467 = vsub.f32 %v1432, %v2466
    %v2468 = vand.u32 %v2467, 4294901760
    %2469 = vmatpush1.msra.mxu0 %v2468
    %v2470 = vand.u32 %v1431, 4294901760
    %v2471 = vsub.f32 %v1431, %v2470
    %v2472 = vand.u32 %v2471, 4294901760
    %2473 = vmatprep.subr.mxu0 %v2472
    %v2474 = vand.u32 %v1430, 4294901760
    %v2475 = vsub.f32 %v1430, %v2474
    %v2476 = vand.u32 %v2475, 4294901760
    %2477 = vmatpush1.msra.mxu0 %v2476
    %v2478 = vand.u32 %v1429, 4294901760
    %v2479 = vsub.f32 %v1429, %v2478
    %v2480 = vand.u32 %v2479, 4294901760
    %2481 = vmatprep.subr.mxu0 %v2480
    %v2482 = vand.u32 %v1428, 4294901760
    %v2483 = vsub.f32 %v1428, %v2482
    %v2484 = vand.u32 %v2483, 4294901760
    %2485 = vmatpush1.msra.mxu0 %v2484
    %v2486 = vand.u32 %v1427, 4294901760
    %v2487 = vsub.f32 %v1427, %v2486
    %v2488 = vand.u32 %v2487, 4294901760
    %2489 = vmatprep.subr.mxu0 %v2488
    %v2490 = vand.u32 %v1426, 4294901760
    %v2491 = vsub.f32 %v1426, %v2490
    %v2492 = vand.u32 %v2491, 4294901760
    %2493 = vmatpush1.msra.mxu0 %v2492
    %v2494 = vand.u32 %v1425, 4294901760
    %v2495 = vsub.f32 %v1425, %v2494
    %v2496 = vand.u32 %v2495, 4294901760
    %2497 = vmatprep.subr.mxu0 %v2496
    %v2498 = vand.u32 %v1424, 4294901760
    %v2499 = vsub.f32 %v1424, %v2498
    %v2500 = vand.u32 %v2499, 4294901760
    %2501 = vmatpush1.msra.mxu0 %v2500
    %v2502 = vand.u32 %v1423, 4294901760
    %v2503 = vsub.f32 %v1423, %v2502
    %v2504 = vand.u32 %v2503, 4294901760
    %2505 = vmatprep.subr.mxu0 %v2504
    %v2506 = vand.u32 %v1422, 4294901760
    %v2507 = vsub.f32 %v1422, %v2506
    %v2508 = vand.u32 %v2507, 4294901760
    %2509 = vmatpush1.msra.mxu0 %v2508
    %v2510 = vand.u32 %v1421, 4294901760
    %v2511 = vsub.f32 %v1421, %v2510
    %v2512 = vand.u32 %v2511, 4294901760
    %2513 = vmatprep.subr.mxu0 %v2512
    %v2514 = vand.u32 %v1420, 4294901760
    %v2515 = vsub.f32 %v1420, %v2514
    %v2516 = vand.u32 %v2515, 4294901760
    %2517 = vmatpush1.msra.mxu0 %v2516
    %v2518 = vand.u32 %v1419, 4294901760
    %v2519 = vsub.f32 %v1419, %v2518
    %v2520 = vand.u32 %v2519, 4294901760
    %2521 = vmatprep.subr.mxu0 %v2520
    %v2522 = vand.u32 %v1418, 4294901760
    %v2523 = vsub.f32 %v1418, %v2522
    %v2524 = vand.u32 %v2523, 4294901760
    %2525 = vmatpush1.msra.mxu0 %v2524
    %v2526 = vand.u32 %v1417, 4294901760
    %v2527 = vsub.f32 %v1417, %v2526
    %v2528 = vand.u32 %v2527, 4294901760
    %2529 = vmatprep.subr.mxu0 %v2528
    %v2530 = vand.u32 %v1416, 4294901760
    %v2531 = vsub.f32 %v1416, %v2530
    %v2532 = vand.u32 %v2531, 4294901760
    %2533 = vmatpush1.msra.mxu0 %v2532
    %v2534 = vand.u32 %v1415, 4294901760
    %v2535 = vsub.f32 %v1415, %v2534
    %v2536 = vand.u32 %v2535, 4294901760
    %2537 = vmatprep.subr.mxu0 %v2536
    %v2538 = vand.u32 %v1414, 4294901760
    %v2539 = vsub.f32 %v1414, %v2538
    %v2540 = vand.u32 %v2539, 4294901760
    %2541 = vmatpush1.msra.mxu0 %v2540
    %v2542 = vand.u32 %v1413, 4294901760
    %v2543 = vsub.f32 %v1413, %v2542
    %v2544 = vand.u32 %v2543, 4294901760
    %2545 = vmatprep.subr.mxu0 %v2544
    %v2546 = vand.u32 %v1412, 4294901760
    %v2547 = vsub.f32 %v1412, %v2546
    %v2548 = vand.u32 %v2547, 4294901760
    %2549 = vmatpush1.msra.mxu0 %v2548
    %v2550 = vand.u32 %v1475, 4294901760
    %v2551 = vsub.f32 %v1475, %v2550
    %v2552 = vand.u32 %v2551, 4294901760
    %2553 = vmatprep.subr.mxu0 %v2552
    %v2554 = vand.u32 %v1474, 4294901760
    %v2555 = vsub.f32 %v1474, %v2554
    %v2556 = vand.u32 %v2555, 4294901760
    %2557 = vmatpush2.msra.mxu0 %v2556
    %v2558 = vand.u32 %v1473, 4294901760
    %v2559 = vsub.f32 %v1473, %v2558
    %v2560 = vand.u32 %v2559, 4294901760
    %2561 = vmatprep.subr.mxu0 %v2560
    %v2562 = vand.u32 %v1472, 4294901760
    %v2563 = vsub.f32 %v1472, %v2562
    %v2564 = vand.u32 %v2563, 4294901760
    %2565 = vmatpush2.msra.mxu0 %v2564
    %v2566 = vand.u32 %v1471, 4294901760
    %v2567 = vsub.f32 %v1471, %v2566
    %v2568 = vand.u32 %v2567, 4294901760
    %2569 = vmatprep.subr.mxu0 %v2568
    %v2570 = vand.u32 %v1470, 4294901760
    %v2571 = vsub.f32 %v1470, %v2570
    %v2572 = vand.u32 %v2571, 4294901760
    %2573 = vmatpush2.msra.mxu0 %v2572
    %v2574 = vand.u32 %v1469, 4294901760
    %v2575 = vsub.f32 %v1469, %v2574
    %v2576 = vand.u32 %v2575, 4294901760
    %2577 = vmatprep.subr.mxu0 %v2576
    %v2578 = vand.u32 %v1468, 4294901760
    %v2579 = vsub.f32 %v1468, %v2578
    %v2580 = vand.u32 %v2579, 4294901760
    %2581 = vmatpush2.msra.mxu0 %v2580
    %v2582 = vand.u32 %v1467, 4294901760
    %v2583 = vsub.f32 %v1467, %v2582
    %v2584 = vand.u32 %v2583, 4294901760
    %2585 = vmatprep.subr.mxu0 %v2584
    %v2586 = vand.u32 %v1466, 4294901760
    %v2587 = vsub.f32 %v1466, %v2586
    %v2588 = vand.u32 %v2587, 4294901760
    %2589 = vmatpush2.msra.mxu0 %v2588
    %v2590 = vand.u32 %v1465, 4294901760
    %v2591 = vsub.f32 %v1465, %v2590
    %v2592 = vand.u32 %v2591, 4294901760
    %2593 = vmatprep.subr.mxu0 %v2592
    %v2594 = vand.u32 %v1464, 4294901760
    %v2595 = vsub.f32 %v1464, %v2594
    %v2596 = vand.u32 %v2595, 4294901760
    %2597 = vmatpush2.msra.mxu0 %v2596
    %v2598 = vand.u32 %v1463, 4294901760
    %v2599 = vsub.f32 %v1463, %v2598
    %v2600 = vand.u32 %v2599, 4294901760
    %2601 = vmatprep.subr.mxu0 %v2600
    %v2602 = vand.u32 %v1462, 4294901760
    %v2603 = vsub.f32 %v1462, %v2602
    %v2604 = vand.u32 %v2603, 4294901760
    %2605 = vmatpush2.msra.mxu0 %v2604
    %v2606 = vand.u32 %v1461, 4294901760
    %v2607 = vsub.f32 %v1461, %v2606
    %v2608 = vand.u32 %v2607, 4294901760
    %2609 = vmatprep.subr.mxu0 %v2608
    %v2610 = vand.u32 %v1460, 4294901760
    %v2611 = vsub.f32 %v1460, %v2610
    %v2612 = vand.u32 %v2611, 4294901760
    %2613 = vmatpush2.msra.mxu0 %v2612
    %v2614 = vand.u32 %v1459, 4294901760
    %v2615 = vsub.f32 %v1459, %v2614
    %v2616 = vand.u32 %v2615, 4294901760
    %2617 = vmatprep.subr.mxu0 %v2616
    %v2618 = vand.u32 %v1458, 4294901760
    %v2619 = vsub.f32 %v1458, %v2618
    %v2620 = vand.u32 %v2619, 4294901760
    %2621 = vmatpush2.msra.mxu0 %v2620
    %v2622 = vand.u32 %v1457, 4294901760
    %v2623 = vsub.f32 %v1457, %v2622
    %v2624 = vand.u32 %v2623, 4294901760
    %2625 = vmatprep.subr.mxu0 %v2624
    %v2626 = vand.u32 %v1456, 4294901760
    %v2627 = vsub.f32 %v1456, %v2626
    %v2628 = vand.u32 %v2627, 4294901760
    %2629 = vmatpush2.msra.mxu0 %v2628
    %v2630 = vand.u32 %v1455, 4294901760
    %v2631 = vsub.f32 %v1455, %v2630
    %v2632 = vand.u32 %v2631, 4294901760
    %2633 = vmatprep.subr.mxu0 %v2632
    %v2634 = vand.u32 %v1454, 4294901760
    %v2635 = vsub.f32 %v1454, %v2634
    %v2636 = vand.u32 %v2635, 4294901760
    %2637 = vmatpush2.msra.mxu0 %v2636
    %v2638 = vand.u32 %v1453, 4294901760
    %v2639 = vsub.f32 %v1453, %v2638
    %v2640 = vand.u32 %v2639, 4294901760
    %2641 = vmatprep.subr.mxu0 %v2640
    %v2642 = vand.u32 %v1452, 4294901760
    %v2643 = vsub.f32 %v1452, %v2642
    %v2644 = vand.u32 %v2643, 4294901760
    %2645 = vmatpush2.msra.mxu0 %v2644
    %v2646 = vand.u32 %v1451, 4294901760
    %v2647 = vsub.f32 %v1451, %v2646
    %v2648 = vand.u32 %v2647, 4294901760
    %2649 = vmatprep.subr.mxu0 %v2648
    %v2650 = vand.u32 %v1450, 4294901760
    %v2651 = vsub.f32 %v1450, %v2650
    %v2652 = vand.u32 %v2651, 4294901760
    %2653 = vmatpush2.msra.mxu0 %v2652
    %v2654 = vand.u32 %v1449, 4294901760
    %v2655 = vsub.f32 %v1449, %v2654
    %v2656 = vand.u32 %v2655, 4294901760
    %2657 = vmatprep.subr.mxu0 %v2656
    %v2658 = vand.u32 %v1448, 4294901760
    %v2659 = vsub.f32 %v1448, %v2658
    %v2660 = vand.u32 %v2659, 4294901760
    %2661 = vmatpush2.msra.mxu0 %v2660
    %v2662 = vand.u32 %v1447, 4294901760
    %v2663 = vsub.f32 %v1447, %v2662
    %v2664 = vand.u32 %v2663, 4294901760
    %2665 = vmatprep.subr.mxu0 %v2664
    %v2666 = vand.u32 %v1446, 4294901760
    %v2667 = vsub.f32 %v1446, %v2666
    %v2668 = vand.u32 %v2667, 4294901760
    %2669 = vmatpush2.msra.mxu0 %v2668
    %v2670 = vand.u32 %v1445, 4294901760
    %v2671 = vsub.f32 %v1445, %v2670
    %v2672 = vand.u32 %v2671, 4294901760
    %2673 = vmatprep.subr.mxu0 %v2672
    %v2674 = vand.u32 %v1444, 4294901760
    %v2675 = vsub.f32 %v1444, %v2674
    %v2676 = vand.u32 %v2675, 4294901760
    %2677 = vmatpush2.msra.mxu0 %v2676
    %v2678 = vand.u32 %v1401, 4294901760
    %2679 = vmatprep.mubr.f32.mxu0 %v2678
    %v2680 = vand.u32 %v1400, 4294901760
    %2681 = vmatmul.mubr.f32.gmra.mxu0 %v2680
    %v2682 = vpop.f32.mrf.mxu0
    %v2683 = vadd.f32 %v2418, %v2682
    %v2684 = vpop.f32.mrf.mxu0
    %v2685 = vadd.f32 %v2420, %v2684
    %2686 = vdwg.mxu0
    %v2687 = vand.u32 %v1443, 4294901760
    %2688 = vmatprep.subr.mxu0 %v2687
    %v2689 = vand.u32 %v1442, 4294901760
    %2690 = vmatpush1.msra.mxu0 %v2689
    %v2691 = vand.u32 %v1441, 4294901760
    %2692 = vmatprep.subr.mxu0 %v2691
    %v2693 = vand.u32 %v1440, 4294901760
    %2694 = vmatpush1.msra.mxu0 %v2693
    %v2695 = vand.u32 %v1439, 4294901760
    %2696 = vmatprep.subr.mxu0 %v2695
    %v2697 = vand.u32 %v1438, 4294901760
    %2698 = vmatpush1.msra.mxu0 %v2697
    %v2699 = vand.u32 %v1437, 4294901760
    %2700 = vmatprep.subr.mxu0 %v2699
    %v2701 = vand.u32 %v1436, 4294901760
    %2702 = vmatpush1.msra.mxu0 %v2701
    %v2703 = vand.u32 %v1435, 4294901760
    %2704 = vmatprep.subr.mxu0 %v2703
    %v2705 = vand.u32 %v1434, 4294901760
    %2706 = vmatpush1.msra.mxu0 %v2705
    %v2707 = vand.u32 %v1433, 4294901760
    %2708 = vmatprep.subr.mxu0 %v2707
    %v2709 = vand.u32 %v1432, 4294901760
    %2710 = vmatpush1.msra.mxu0 %v2709
    %v2711 = vand.u32 %v1431, 4294901760
    %2712 = vmatprep.subr.mxu0 %v2711
    %v2713 = vand.u32 %v1430, 4294901760
    %2714 = vmatpush1.msra.mxu0 %v2713
    %v2715 = vand.u32 %v1429, 4294901760
    %2716 = vmatprep.subr.mxu0 %v2715
    %v2717 = vand.u32 %v1428, 4294901760
    %2718 = vmatpush1.msra.mxu0 %v2717
    %v2719 = vand.u32 %v1427, 4294901760
    %2720 = vmatprep.subr.mxu0 %v2719
    %v2721 = vand.u32 %v1426, 4294901760
    %2722 = vmatpush1.msra.mxu0 %v2721
    %v2723 = vand.u32 %v1425, 4294901760
    %2724 = vmatprep.subr.mxu0 %v2723
    %v2725 = vand.u32 %v1424, 4294901760
    %2726 = vmatpush1.msra.mxu0 %v2725
    %v2727 = vand.u32 %v1423, 4294901760
    %2728 = vmatprep.subr.mxu0 %v2727
    %v2729 = vand.u32 %v1422, 4294901760
    %2730 = vmatpush1.msra.mxu0 %v2729
    %v2731 = vand.u32 %v1421, 4294901760
    %2732 = vmatprep.subr.mxu0 %v2731
    %v2733 = vand.u32 %v1420, 4294901760
    %2734 = vmatpush1.msra.mxu0 %v2733
    %v2735 = vand.u32 %v1419, 4294901760
    %2736 = vmatprep.subr.mxu0 %v2735
    %v2737 = vand.u32 %v1418, 4294901760
    %2738 = vmatpush1.msra.mxu0 %v2737
    %v2739 = vand.u32 %v1417, 4294901760
    %2740 = vmatprep.subr.mxu0 %v2739
    %v2741 = vand.u32 %v1416, 4294901760
    %2742 = vmatpush1.msra.mxu0 %v2741
    %v2743 = vand.u32 %v1415, 4294901760
    %2744 = vmatprep.subr.mxu0 %v2743
    %v2745 = vand.u32 %v1414, 4294901760
    %2746 = vmatpush1.msra.mxu0 %v2745
    %v2747 = vand.u32 %v1413, 4294901760
    %2748 = vmatprep.subr.mxu0 %v2747
    %v2749 = vand.u32 %v1412, 4294901760
    %2750 = vmatpush1.msra.mxu0 %v2749
    %v2751 = vand.u32 %v1475, 4294901760
    %2752 = vmatprep.subr.mxu0 %v2751
    %v2753 = vand.u32 %v1474, 4294901760
    %2754 = vmatpush2.msra.mxu0 %v2753
    %v2755 = vand.u32 %v1473, 4294901760
    %2756 = vmatprep.subr.mxu0 %v2755
    %v2757 = vand.u32 %v1472, 4294901760
    %2758 = vmatpush2.msra.mxu0 %v2757
    %v2759 = vand.u32 %v1471, 4294901760
    %2760 = vmatprep.subr.mxu0 %v2759
    %v2761 = vand.u32 %v1470, 4294901760
    %2762 = vmatpush2.msra.mxu0 %v2761
    %v2763 = vand.u32 %v1469, 4294901760
    %2764 = vmatprep.subr.mxu0 %v2763
    %v2765 = vand.u32 %v1468, 4294901760
    %2766 = vmatpush2.msra.mxu0 %v2765
    %v2767 = vand.u32 %v1467, 4294901760
    %2768 = vmatprep.subr.mxu0 %v2767
    %v2769 = vand.u32 %v1466, 4294901760
    %2770 = vmatpush2.msra.mxu0 %v2769
    %v2771 = vand.u32 %v1465, 4294901760
    %2772 = vmatprep.subr.mxu0 %v2771
    %v2773 = vand.u32 %v1464, 4294901760
    %2774 = vmatpush2.msra.mxu0 %v2773
    %v2775 = vand.u32 %v1463, 4294901760
    %2776 = vmatprep.subr.mxu0 %v2775
    %v2777 = vand.u32 %v1462, 4294901760
    %2778 = vmatpush2.msra.mxu0 %v2777
    %v2779 = vand.u32 %v1461, 4294901760
    %2780 = vmatprep.subr.mxu0 %v2779
    %v2781 = vand.u32 %v1460, 4294901760
    %2782 = vmatpush2.msra.mxu0 %v2781
    %v2783 = vand.u32 %v1459, 4294901760
    %2784 = vmatprep.subr.mxu0 %v2783
    %v2785 = vand.u32 %v1458, 4294901760
    %2786 = vmatpush2.msra.mxu0 %v2785
    %v2787 = vand.u32 %v1457, 4294901760
    %2788 = vmatprep.subr.mxu0 %v2787
    %v2789 = vand.u32 %v1456, 4294901760
    %2790 = vmatpush2.msra.mxu0 %v2789
    %v2791 = vand.u32 %v1455, 4294901760
    %2792 = vmatprep.subr.mxu0 %v2791
    %v2793 = vand.u32 %v1454, 4294901760
    %2794 = vmatpush2.msra.mxu0 %v2793
    %v2795 = vand.u32 %v1453, 4294901760
    %2796 = vmatprep.subr.mxu0 %v2795
    %v2797 = vand.u32 %v1452, 4294901760
    %2798 = vmatpush2.msra.mxu0 %v2797
    %v2799 = vand.u32 %v1451, 4294901760
    %2800 = vmatprep.subr.mxu0 %v2799
    %v2801 = vand.u32 %v1450, 4294901760
    %2802 = vmatpush2.msra.mxu0 %v2801
    %v2803 = vand.u32 %v1449, 4294901760
    %2804 = vmatprep.subr.mxu0 %v2803
    %v2805 = vand.u32 %v1448, 4294901760
    %2806 = vmatpush2.msra.mxu0 %v2805
    %v2807 = vand.u32 %v1447, 4294901760
    %2808 = vmatprep.subr.mxu0 %v2807
    %v2809 = vand.u32 %v1446, 4294901760
    %2810 = vmatpush2.msra.mxu0 %v2809
    %v2811 = vand.u32 %v1445, 4294901760
    %2812 = vmatprep.subr.mxu0 %v2811
    %v2813 = vand.u32 %v1444, 4294901760
    %2814 = vmatpush2.msra.mxu0 %v2813
    %v2815 = vand.u32 %v1401, 4294901760
    %2816 = vmatprep.mubr.f32.mxu0 %v2815
    %v2817 = vand.u32 %v1400, 4294901760
    %2818 = vmatmul.mubr.f32.gmra.mxu0 %v2817
    %v2819 = vpop.f32.mrf.mxu0
    %v2820 = vadd.f32 %v2683, %v2819
    %v2821 = vpop.f32.mrf.mxu0
    %v2822 = vadd.f32 %v2685, %v2821
    %2823 = vdwg.mxu0
    %v2824 = vand.u32 %v1507, 4294901760
    %2825 = vmatprep.subr.mxu0 %v2824
    %v2826 = vand.u32 %v1506, 4294901760
    %2827 = vmatpush1.msra.mxu0 %v2826
    %v2828 = vand.u32 %v1505, 4294901760
    %2829 = vmatprep.subr.mxu0 %v2828
    %v2830 = vand.u32 %v1504, 4294901760
    %2831 = vmatpush1.msra.mxu0 %v2830
    %v2832 = vand.u32 %v1503, 4294901760
    %2833 = vmatprep.subr.mxu0 %v2832
    %v2834 = vand.u32 %v1502, 4294901760
    %2835 = vmatpush1.msra.mxu0 %v2834
    %v2836 = vand.u32 %v1501, 4294901760
    %2837 = vmatprep.subr.mxu0 %v2836
    %v2838 = vand.u32 %v1500, 4294901760
    %2839 = vmatpush1.msra.mxu0 %v2838
    %v2840 = vand.u32 %v1499, 4294901760
    %2841 = vmatprep.subr.mxu0 %v2840
    %v2842 = vand.u32 %v1498, 4294901760
    %2843 = vmatpush1.msra.mxu0 %v2842
    %v2844 = vand.u32 %v1497, 4294901760
    %2845 = vmatprep.subr.mxu0 %v2844
    %v2846 = vand.u32 %v1496, 4294901760
    %2847 = vmatpush1.msra.mxu0 %v2846
    %v2848 = vand.u32 %v1495, 4294901760
    %2849 = vmatprep.subr.mxu0 %v2848
    %v2850 = vand.u32 %v1494, 4294901760
    %2851 = vmatpush1.msra.mxu0 %v2850
    %v2852 = vand.u32 %v1493, 4294901760
    %2853 = vmatprep.subr.mxu0 %v2852
    %v2854 = vand.u32 %v1492, 4294901760
    %2855 = vmatpush1.msra.mxu0 %v2854
    %v2856 = vand.u32 %v1491, 4294901760
    %2857 = vmatprep.subr.mxu0 %v2856
    %v2858 = vand.u32 %v1490, 4294901760
    %2859 = vmatpush1.msra.mxu0 %v2858
    %v2860 = vand.u32 %v1489, 4294901760
    %2861 = vmatprep.subr.mxu0 %v2860
    %v2862 = vand.u32 %v1488, 4294901760
    %2863 = vmatpush1.msra.mxu0 %v2862
    %v2864 = vand.u32 %v1487, 4294901760
    %2865 = vmatprep.subr.mxu0 %v2864
    %v2866 = vand.u32 %v1486, 4294901760
    %2867 = vmatpush1.msra.mxu0 %v2866
    %v2868 = vand.u32 %v1485, 4294901760
    %2869 = vmatprep.subr.mxu0 %v2868
    %v2870 = vand.u32 %v1484, 4294901760
    %2871 = vmatpush1.msra.mxu0 %v2870
    %v2872 = vand.u32 %v1483, 4294901760
    %2873 = vmatprep.subr.mxu0 %v2872
    %v2874 = vand.u32 %v1482, 4294901760
    %2875 = vmatpush1.msra.mxu0 %v2874
    %v2876 = vand.u32 %v1481, 4294901760
    %2877 = vmatprep.subr.mxu0 %v2876
    %v2878 = vand.u32 %v1480, 4294901760
    %2879 = vmatpush1.msra.mxu0 %v2878
    %v2880 = vand.u32 %v1479, 4294901760
    %2881 = vmatprep.subr.mxu0 %v2880
    %v2882 = vand.u32 %v1478, 4294901760
    %2883 = vmatpush1.msra.mxu0 %v2882
    %v2884 = vand.u32 %v1477, 4294901760
    %2885 = vmatprep.subr.mxu0 %v2884
    %v2886 = vand.u32 %v1476, 4294901760
    %2887 = vmatpush1.msra.mxu0 %v2886
    %v2888 = vand.u32 %v1539, 4294901760
    %2889 = vmatprep.subr.mxu0 %v2888
    %v2890 = vand.u32 %v1538, 4294901760
    %2891 = vmatpush2.msra.mxu0 %v2890
    %v2892 = vand.u32 %v1537, 4294901760
    %2893 = vmatprep.subr.mxu0 %v2892
    %v2894 = vand.u32 %v1536, 4294901760
    %2895 = vmatpush2.msra.mxu0 %v2894
    %v2896 = vand.u32 %v1535, 4294901760
    %2897 = vmatprep.subr.mxu0 %v2896
    %v2898 = vand.u32 %v1534, 4294901760
    %2899 = vmatpush2.msra.mxu0 %v2898
    %v2900 = vand.u32 %v1533, 4294901760
    %2901 = vmatprep.subr.mxu0 %v2900
    %v2902 = vand.u32 %v1532, 4294901760
    %2903 = vmatpush2.msra.mxu0 %v2902
    %v2904 = vand.u32 %v1531, 4294901760
    %2905 = vmatprep.subr.mxu0 %v2904
    %v2906 = vand.u32 %v1530, 4294901760
    %2907 = vmatpush2.msra.mxu0 %v2906
    %v2908 = vand.u32 %v1529, 4294901760
    %2909 = vmatprep.subr.mxu0 %v2908
    %v2910 = vand.u32 %v1528, 4294901760
    %2911 = vmatpush2.msra.mxu0 %v2910
    %v2912 = vand.u32 %v1527, 4294901760
    %2913 = vmatprep.subr.mxu0 %v2912
    %v2914 = vand.u32 %v1526, 4294901760
    %2915 = vmatpush2.msra.mxu0 %v2914
    %v2916 = vand.u32 %v1525, 4294901760
    %2917 = vmatprep.subr.mxu0 %v2916
    %v2918 = vand.u32 %v1524, 4294901760
    %2919 = vmatpush2.msra.mxu0 %v2918
    %v2920 = vand.u32 %v1523, 4294901760
    %2921 = vmatprep.subr.mxu0 %v2920
    %v2922 = vand.u32 %v1522, 4294901760
    %2923 = vmatpush2.msra.mxu0 %v2922
    %v2924 = vand.u32 %v1521, 4294901760
    %2925 = vmatprep.subr.mxu0 %v2924
    %v2926 = vand.u32 %v1520, 4294901760
    %2927 = vmatpush2.msra.mxu0 %v2926
    %v2928 = vand.u32 %v1519, 4294901760
    %2929 = vmatprep.subr.mxu0 %v2928
    %v2930 = vand.u32 %v1518, 4294901760
    %2931 = vmatpush2.msra.mxu0 %v2930
    %v2932 = vand.u32 %v1517, 4294901760
    %2933 = vmatprep.subr.mxu0 %v2932
    %v2934 = vand.u32 %v1516, 4294901760
    %2935 = vmatpush2.msra.mxu0 %v2934
    %v2936 = vand.u32 %v1515, 4294901760
    %2937 = vmatprep.subr.mxu0 %v2936
    %v2938 = vand.u32 %v1514, 4294901760
    %2939 = vmatpush2.msra.mxu0 %v2938
    %v2940 = vand.u32 %v1513, 4294901760
    %2941 = vmatprep.subr.mxu0 %v2940
    %v2942 = vand.u32 %v1512, 4294901760
    %2943 = vmatpush2.msra.mxu0 %v2942
    %v2944 = vand.u32 %v1511, 4294901760
    %2945 = vmatprep.subr.mxu0 %v2944
    %v2946 = vand.u32 %v1510, 4294901760
    %2947 = vmatpush2.msra.mxu0 %v2946
    %v2948 = vand.u32 %v1509, 4294901760
    %2949 = vmatprep.subr.mxu0 %v2948
    %v2950 = vand.u32 %v1508, 4294901760
    %2951 = vmatpush2.msra.mxu0 %v2950
    %v2952 = vand.u32 %v1409, 4294901760
    %v2953 = vsub.f32 %v1409, %v2952
    %v2954 = vand.u32 %v2953, 4294901760
    %v2955 = vsub.f32 %v2953, %v2954
    %v2956 = vand.u32 %v2955, 4294901760
    %2957 = vmatprep.mubr.f32.mxu0 %v2956
    %v2958 = vand.u32 %v1408, 4294901760
    %v2959 = vsub.f32 %v1408, %v2958
    %v2960 = vand.u32 %v2959, 4294901760
    %v2961 = vsub.f32 %v2959, %v2960
    %v2962 = vand.u32 %v2961, 4294901760
    %2963 = vmatmul.mubr.f32.gmra.mxu0 %v2962
    %v2964 = vpop.f32.mrf.mxu0
    %v2965 = vadd.f32 %v2820, %v2964
    %v2966 = vpop.f32.mrf.mxu0
    %v2967 = vadd.f32 %v2822, %v2966
    %2968 = vdwg.mxu0
    %v2969 = vand.u32 %v1507, 4294901760
    %v2970 = vsub.f32 %v1507, %v2969
    %v2971 = vand.u32 %v2970, 4294901760
    %v2972 = vsub.f32 %v2970, %v2971
    %v2973 = vand.u32 %v2972, 4294901760
    %2974 = vmatprep.subr.mxu0 %v2973
    %v2975 = vand.u32 %v1506, 4294901760
    %v2976 = vsub.f32 %v1506, %v2975
    %v2977 = vand.u32 %v2976, 4294901760
    %v2978 = vsub.f32 %v2976, %v2977
    %v2979 = vand.u32 %v2978, 4294901760
    %2980 = vmatpush1.msra.mxu0 %v2979
    %v2981 = vand.u32 %v1505, 4294901760
    %v2982 = vsub.f32 %v1505, %v2981
    %v2983 = vand.u32 %v2982, 4294901760
    %v2984 = vsub.f32 %v2982, %v2983
    %v2985 = vand.u32 %v2984, 4294901760
    %2986 = vmatprep.subr.mxu0 %v2985
    %v2987 = vand.u32 %v1504, 4294901760
    %v2988 = vsub.f32 %v1504, %v2987
    %v2989 = vand.u32 %v2988, 4294901760
    %v2990 = vsub.f32 %v2988, %v2989
    %v2991 = vand.u32 %v2990, 4294901760
    %2992 = vmatpush1.msra.mxu0 %v2991
    %v2993 = vand.u32 %v1503, 4294901760
    %v2994 = vsub.f32 %v1503, %v2993
    %v2995 = vand.u32 %v2994, 4294901760
    %v2996 = vsub.f32 %v2994, %v2995
    %v2997 = vand.u32 %v2996, 4294901760
    %2998 = vmatprep.subr.mxu0 %v2997
    %v2999 = vand.u32 %v1502, 4294901760
    %v3000 = vsub.f32 %v1502, %v2999
    %v3001 = vand.u32 %v3000, 4294901760
    %v3002 = vsub.f32 %v3000, %v3001
    %v3003 = vand.u32 %v3002, 4294901760
    %3004 = vmatpush1.msra.mxu0 %v3003
    %v3005 = vand.u32 %v1501, 4294901760
    %v3006 = vsub.f32 %v1501, %v3005
    %v3007 = vand.u32 %v3006, 4294901760
    %v3008 = vsub.f32 %v3006, %v3007
    %v3009 = vand.u32 %v3008, 4294901760
    %3010 = vmatprep.subr.mxu0 %v3009
    %v3011 = vand.u32 %v1500, 4294901760
    %v3012 = vsub.f32 %v1500, %v3011
    %v3013 = vand.u32 %v3012, 4294901760
    %v3014 = vsub.f32 %v3012, %v3013
    %v3015 = vand.u32 %v3014, 4294901760
    %3016 = vmatpush1.msra.mxu0 %v3015
    %v3017 = vand.u32 %v1499, 4294901760
    %v3018 = vsub.f32 %v1499, %v3017
    %v3019 = vand.u32 %v3018, 4294901760
    %v3020 = vsub.f32 %v3018, %v3019
    %v3021 = vand.u32 %v3020, 4294901760
    %3022 = vmatprep.subr.mxu0 %v3021
    %v3023 = vand.u32 %v1498, 4294901760
    %v3024 = vsub.f32 %v1498, %v3023
    %v3025 = vand.u32 %v3024, 4294901760
    %v3026 = vsub.f32 %v3024, %v3025
    %v3027 = vand.u32 %v3026, 4294901760
    %3028 = vmatpush1.msra.mxu0 %v3027
    %v3029 = vand.u32 %v1497, 4294901760
    %v3030 = vsub.f32 %v1497, %v3029
    %v3031 = vand.u32 %v3030, 4294901760
    %v3032 = vsub.f32 %v3030, %v3031
    %v3033 = vand.u32 %v3032, 4294901760
    %3034 = vmatprep.subr.mxu0 %v3033
    %v3035 = vand.u32 %v1496, 4294901760
    %v3036 = vsub.f32 %v1496, %v3035
    %v3037 = vand.u32 %v3036, 4294901760
    %v3038 = vsub.f32 %v3036, %v3037
    %v3039 = vand.u32 %v3038, 4294901760
    %3040 = vmatpush1.msra.mxu0 %v3039
    %v3041 = vand.u32 %v1495, 4294901760
    %v3042 = vsub.f32 %v1495, %v3041
    %v3043 = vand.u32 %v3042, 4294901760
    %v3044 = vsub.f32 %v3042, %v3043
    %v3045 = vand.u32 %v3044, 4294901760
    %3046 = vmatprep.subr.mxu0 %v3045
    %v3047 = vand.u32 %v1494, 4294901760
    %v3048 = vsub.f32 %v1494, %v3047
    %v3049 = vand.u32 %v3048, 4294901760
    %v3050 = vsub.f32 %v3048, %v3049
    %v3051 = vand.u32 %v3050, 4294901760
    %3052 = vmatpush1.msra.mxu0 %v3051
    %v3053 = vand.u32 %v1493, 4294901760
    %v3054 = vsub.f32 %v1493, %v3053
    %v3055 = vand.u32 %v3054, 4294901760
    %v3056 = vsub.f32 %v3054, %v3055
    %v3057 = vand.u32 %v3056, 4294901760
    %3058 = vmatprep.subr.mxu0 %v3057
    %v3059 = vand.u32 %v1492, 4294901760
    %v3060 = vsub.f32 %v1492, %v3059
    %v3061 = vand.u32 %v3060, 4294901760
    %v3062 = vsub.f32 %v3060, %v3061
    %v3063 = vand.u32 %v3062, 4294901760
    %3064 = vmatpush1.msra.mxu0 %v3063
    %v3065 = vand.u32 %v1491, 4294901760
    %v3066 = vsub.f32 %v1491, %v3065
    %v3067 = vand.u32 %v3066, 4294901760
    %v3068 = vsub.f32 %v3066, %v3067
    %v3069 = vand.u32 %v3068, 4294901760
    %3070 = vmatprep.subr.mxu0 %v3069
    %v3071 = vand.u32 %v1490, 4294901760
    %v3072 = vsub.f32 %v1490, %v3071
    %v3073 = vand.u32 %v3072, 4294901760
    %v3074 = vsub.f32 %v3072, %v3073
    %v3075 = vand.u32 %v3074, 4294901760
    %3076 = vmatpush1.msra.mxu0 %v3075
    %v3077 = vand.u32 %v1489, 4294901760
    %v3078 = vsub.f32 %v1489, %v3077
    %v3079 = vand.u32 %v3078, 4294901760
    %v3080 = vsub.f32 %v3078, %v3079
    %v3081 = vand.u32 %v3080, 4294901760
    %3082 = vmatprep.subr.mxu0 %v3081
    %v3083 = vand.u32 %v1488, 4294901760
    %v3084 = vsub.f32 %v1488, %v3083
    %v3085 = vand.u32 %v3084, 4294901760
    %v3086 = vsub.f32 %v3084, %v3085
    %v3087 = vand.u32 %v3086, 4294901760
    %3088 = vmatpush1.msra.mxu0 %v3087
    %v3089 = vand.u32 %v1487, 4294901760
    %v3090 = vsub.f32 %v1487, %v3089
    %v3091 = vand.u32 %v3090, 4294901760
    %v3092 = vsub.f32 %v3090, %v3091
    %v3093 = vand.u32 %v3092, 4294901760
    %3094 = vmatprep.subr.mxu0 %v3093
    %v3095 = vand.u32 %v1486, 4294901760
    %v3096 = vsub.f32 %v1486, %v3095
    %v3097 = vand.u32 %v3096, 4294901760
    %v3098 = vsub.f32 %v3096, %v3097
    %v3099 = vand.u32 %v3098, 4294901760
    %3100 = vmatpush1.msra.mxu0 %v3099
    %v3101 = vand.u32 %v1485, 4294901760
    %v3102 = vsub.f32 %v1485, %v3101
    %v3103 = vand.u32 %v3102, 4294901760
    %v3104 = vsub.f32 %v3102, %v3103
    %v3105 = vand.u32 %v3104, 4294901760
    %3106 = vmatprep.subr.mxu0 %v3105
    %v3107 = vand.u32 %v1484, 4294901760
    %v3108 = vsub.f32 %v1484, %v3107
    %v3109 = vand.u32 %v3108, 4294901760
    %v3110 = vsub.f32 %v3108, %v3109
    %v3111 = vand.u32 %v3110, 4294901760
    %3112 = vmatpush1.msra.mxu0 %v3111
    %v3113 = vand.u32 %v1483, 4294901760
    %v3114 = vsub.f32 %v1483, %v3113
    %v3115 = vand.u32 %v3114, 4294901760
    %v3116 = vsub.f32 %v3114, %v3115
    %v3117 = vand.u32 %v3116, 4294901760
    %3118 = vmatprep.subr.mxu0 %v3117
    %v3119 = vand.u32 %v1482, 4294901760
    %v3120 = vsub.f32 %v1482, %v3119
    %v3121 = vand.u32 %v3120, 4294901760
    %v3122 = vsub.f32 %v3120, %v3121
    %v3123 = vand.u32 %v3122, 4294901760
    %3124 = vmatpush1.msra.mxu0 %v3123
    %v3125 = vand.u32 %v1481, 4294901760
    %v3126 = vsub.f32 %v1481, %v3125
    %v3127 = vand.u32 %v3126, 4294901760
    %v3128 = vsub.f32 %v3126, %v3127
    %v3129 = vand.u32 %v3128, 4294901760
    %3130 = vmatprep.subr.mxu0 %v3129
    %v3131 = vand.u32 %v1480, 4294901760
    %v3132 = vsub.f32 %v1480, %v3131
    %v3133 = vand.u32 %v3132, 4294901760
    %v3134 = vsub.f32 %v3132, %v3133
    %v3135 = vand.u32 %v3134, 4294901760
    %3136 = vmatpush1.msra.mxu0 %v3135
    %v3137 = vand.u32 %v1479, 4294901760
    %v3138 = vsub.f32 %v1479, %v3137
    %v3139 = vand.u32 %v3138, 4294901760
    %v3140 = vsub.f32 %v3138, %v3139
    %v3141 = vand.u32 %v3140, 4294901760
    %3142 = vmatprep.subr.mxu0 %v3141
    %v3143 = vand.u32 %v1478, 4294901760
    %v3144 = vsub.f32 %v1478, %v3143
    %v3145 = vand.u32 %v3144, 4294901760
    %v3146 = vsub.f32 %v3144, %v3145
    %v3147 = vand.u32 %v3146, 4294901760
    %3148 = vmatpush1.msra.mxu0 %v3147
    %v3149 = vand.u32 %v1477, 4294901760
    %v3150 = vsub.f32 %v1477, %v3149
    %v3151 = vand.u32 %v3150, 4294901760
    %v3152 = vsub.f32 %v3150, %v3151
    %v3153 = vand.u32 %v3152, 4294901760
    %3154 = vmatprep.subr.mxu0 %v3153
    %v3155 = vand.u32 %v1476, 4294901760
    %v3156 = vsub.f32 %v1476, %v3155
    %v3157 = vand.u32 %v3156, 4294901760
    %v3158 = vsub.f32 %v3156, %v3157
    %v3159 = vand.u32 %v3158, 4294901760
    %3160 = vmatpush1.msra.mxu0 %v3159
    %v3161 = vand.u32 %v1539, 4294901760
    %v3162 = vsub.f32 %v1539, %v3161
    %v3163 = vand.u32 %v3162, 4294901760
    %v3164 = vsub.f32 %v3162, %v3163
    %v3165 = vand.u32 %v3164, 4294901760
    %3166 = vmatprep.subr.mxu0 %v3165
    %v3167 = vand.u32 %v1538, 4294901760
    %v3168 = vsub.f32 %v1538, %v3167
    %v3169 = vand.u32 %v3168, 4294901760
    %v3170 = vsub.f32 %v3168, %v3169
    %v3171 = vand.u32 %v3170, 4294901760
    %3172 = vmatpush2.msra.mxu0 %v3171
    %v3173 = vand.u32 %v1537, 4294901760
    %v3174 = vsub.f32 %v1537, %v3173
    %v3175 = vand.u32 %v3174, 4294901760
    %v3176 = vsub.f32 %v3174, %v3175
    %v3177 = vand.u32 %v3176, 4294901760
    %3178 = vmatprep.subr.mxu0 %v3177
    %v3179 = vand.u32 %v1536, 4294901760
    %v3180 = vsub.f32 %v1536, %v3179
    %v3181 = vand.u32 %v3180, 4294901760
    %v3182 = vsub.f32 %v3180, %v3181
    %v3183 = vand.u32 %v3182, 4294901760
    %3184 = vmatpush2.msra.mxu0 %v3183
    %v3185 = vand.u32 %v1535, 4294901760
    %v3186 = vsub.f32 %v1535, %v3185
    %v3187 = vand.u32 %v3186, 4294901760
    %v3188 = vsub.f32 %v3186, %v3187
    %v3189 = vand.u32 %v3188, 4294901760
    %3190 = vmatprep.subr.mxu0 %v3189
    %v3191 = vand.u32 %v1534, 4294901760
    %v3192 = vsub.f32 %v1534, %v3191
    %v3193 = vand.u32 %v3192, 4294901760
    %v3194 = vsub.f32 %v3192, %v3193
    %v3195 = vand.u32 %v3194, 4294901760
    %3196 = vmatpush2.msra.mxu0 %v3195
    %v3197 = vand.u32 %v1533, 4294901760
    %v3198 = vsub.f32 %v1533, %v3197
    %v3199 = vand.u32 %v3198, 4294901760
    %v3200 = vsub.f32 %v3198, %v3199
    %v3201 = vand.u32 %v3200, 4294901760
    %3202 = vmatprep.subr.mxu0 %v3201
    %v3203 = vand.u32 %v1532, 4294901760
    %v3204 = vsub.f32 %v1532, %v3203
    %v3205 = vand.u32 %v3204, 4294901760
    %v3206 = vsub.f32 %v3204, %v3205
    %v3207 = vand.u32 %v3206, 4294901760
    %3208 = vmatpush2.msra.mxu0 %v3207
    %v3209 = vand.u32 %v1531, 4294901760
    %v3210 = vsub.f32 %v1531, %v3209
    %v3211 = vand.u32 %v3210, 4294901760
    %v3212 = vsub.f32 %v3210, %v3211
    %v3213 = vand.u32 %v3212, 4294901760
    %3214 = vmatprep.subr.mxu0 %v3213
    %v3215 = vand.u32 %v1530, 4294901760
    %v3216 = vsub.f32 %v1530, %v3215
    %v3217 = vand.u32 %v3216, 4294901760
    %v3218 = vsub.f32 %v3216, %v3217
    %v3219 = vand.u32 %v3218, 4294901760
    %3220 = vmatpush2.msra.mxu0 %v3219
    %v3221 = vand.u32 %v1529, 4294901760
    %v3222 = vsub.f32 %v1529, %v3221
    %v3223 = vand.u32 %v3222, 4294901760
    %v3224 = vsub.f32 %v3222, %v3223
    %v3225 = vand.u32 %v3224, 4294901760
    %3226 = vmatprep.subr.mxu0 %v3225
    %v3227 = vand.u32 %v1528, 4294901760
    %v3228 = vsub.f32 %v1528, %v3227
    %v3229 = vand.u32 %v3228, 4294901760
    %v3230 = vsub.f32 %v3228, %v3229
    %v3231 = vand.u32 %v3230, 4294901760
    %3232 = vmatpush2.msra.mxu0 %v3231
    %v3233 = vand.u32 %v1527, 4294901760
    %v3234 = vsub.f32 %v1527, %v3233
    %v3235 = vand.u32 %v3234, 4294901760
    %v3236 = vsub.f32 %v3234, %v3235
    %v3237 = vand.u32 %v3236, 4294901760
    %3238 = vmatprep.subr.mxu0 %v3237
    %v3239 = vand.u32 %v1526, 4294901760
    %v3240 = vsub.f32 %v1526, %v3239
    %v3241 = vand.u32 %v3240, 4294901760
    %v3242 = vsub.f32 %v3240, %v3241
    %v3243 = vand.u32 %v3242, 4294901760
    %3244 = vmatpush2.msra.mxu0 %v3243
    %v3245 = vand.u32 %v1525, 4294901760
    %v3246 = vsub.f32 %v1525, %v3245
    %v3247 = vand.u32 %v3246, 4294901760
    %v3248 = vsub.f32 %v3246, %v3247
    %v3249 = vand.u32 %v3248, 4294901760
    %3250 = vmatprep.subr.mxu0 %v3249
    %v3251 = vand.u32 %v1524, 4294901760
    %v3252 = vsub.f32 %v1524, %v3251
    %v3253 = vand.u32 %v3252, 4294901760
    %v3254 = vsub.f32 %v3252, %v3253
    %v3255 = vand.u32 %v3254, 4294901760
    %3256 = vmatpush2.msra.mxu0 %v3255
    %v3257 = vand.u32 %v1523, 4294901760
    %v3258 = vsub.f32 %v1523, %v3257
    %v3259 = vand.u32 %v3258, 4294901760
    %v3260 = vsub.f32 %v3258, %v3259
    %v3261 = vand.u32 %v3260, 4294901760
    %3262 = vmatprep.subr.mxu0 %v3261
    %v3263 = vand.u32 %v1522, 4294901760
    %v3264 = vsub.f32 %v1522, %v3263
    %v3265 = vand.u32 %v3264, 4294901760
    %v3266 = vsub.f32 %v3264, %v3265
    %v3267 = vand.u32 %v3266, 4294901760
    %3268 = vmatpush2.msra.mxu0 %v3267
    %v3269 = vand.u32 %v1521, 4294901760
    %v3270 = vsub.f32 %v1521, %v3269
    %v3271 = vand.u32 %v3270, 4294901760
    %v3272 = vsub.f32 %v3270, %v3271
    %v3273 = vand.u32 %v3272, 4294901760
    %3274 = vmatprep.subr.mxu0 %v3273
    %v3275 = vand.u32 %v1520, 4294901760
    %v3276 = vsub.f32 %v1520, %v3275
    %v3277 = vand.u32 %v3276, 4294901760
    %v3278 = vsub.f32 %v3276, %v3277
    %v3279 = vand.u32 %v3278, 4294901760
    %3280 = vmatpush2.msra.mxu0 %v3279
    %v3281 = vand.u32 %v1519, 4294901760
    %v3282 = vsub.f32 %v1519, %v3281
    %v3283 = vand.u32 %v3282, 4294901760
    %v3284 = vsub.f32 %v3282, %v3283
    %v3285 = vand.u32 %v3284, 4294901760
    %3286 = vmatprep.subr.mxu0 %v3285
    %v3287 = vand.u32 %v1518, 4294901760
    %v3288 = vsub.f32 %v1518, %v3287
    %v3289 = vand.u32 %v3288, 4294901760
    %v3290 = vsub.f32 %v3288, %v3289
    %v3291 = vand.u32 %v3290, 4294901760
    %3292 = vmatpush2.msra.mxu0 %v3291
    %v3293 = vand.u32 %v1517, 4294901760
    %v3294 = vsub.f32 %v1517, %v3293
    %v3295 = vand.u32 %v3294, 4294901760
    %v3296 = vsub.f32 %v3294, %v3295
    %v3297 = vand.u32 %v3296, 4294901760
    %3298 = vmatprep.subr.mxu0 %v3297
    %v3299 = vand.u32 %v1516, 4294901760
    %v3300 = vsub.f32 %v1516, %v3299
    %v3301 = vand.u32 %v3300, 4294901760
    %v3302 = vsub.f32 %v3300, %v3301
    %v3303 = vand.u32 %v3302, 4294901760
    %3304 = vmatpush2.msra.mxu0 %v3303
    %v3305 = vand.u32 %v1515, 4294901760
    %v3306 = vsub.f32 %v1515, %v3305
    %v3307 = vand.u32 %v3306, 4294901760
    %v3308 = vsub.f32 %v3306, %v3307
    %v3309 = vand.u32 %v3308, 4294901760
    %3310 = vmatprep.subr.mxu0 %v3309
    %v3311 = vand.u32 %v1514, 4294901760
    %v3312 = vsub.f32 %v1514, %v3311
    %v3313 = vand.u32 %v3312, 4294901760
    %v3314 = vsub.f32 %v3312, %v3313
    %v3315 = vand.u32 %v3314, 4294901760
    %3316 = vmatpush2.msra.mxu0 %v3315
    %v3317 = vand.u32 %v1513, 4294901760
    %v3318 = vsub.f32 %v1513, %v3317
    %v3319 = vand.u32 %v3318, 4294901760
    %v3320 = vsub.f32 %v3318, %v3319
    %v3321 = vand.u32 %v3320, 4294901760
    %3322 = vmatprep.subr.mxu0 %v3321
    %v3323 = vand.u32 %v1512, 4294901760
    %v3324 = vsub.f32 %v1512, %v3323
    %v3325 = vand.u32 %v3324, 4294901760
    %v3326 = vsub.f32 %v3324, %v3325
    %v3327 = vand.u32 %v3326, 4294901760
    %3328 = vmatpush2.msra.mxu0 %v3327
    %v3329 = vand.u32 %v1511, 4294901760
    %v3330 = vsub.f32 %v1511, %v3329
    %v3331 = vand.u32 %v3330, 4294901760
    %v3332 = vsub.f32 %v3330, %v3331
    %v3333 = vand.u32 %v3332, 4294901760
    %3334 = vmatprep.subr.mxu0 %v3333
    %v3335 = vand.u32 %v1510, 4294901760
    %v3336 = vsub.f32 %v1510, %v3335
    %v3337 = vand.u32 %v3336, 4294901760
    %v3338 = vsub.f32 %v3336, %v3337
    %v3339 = vand.u32 %v3338, 4294901760
    %3340 = vmatpush2.msra.mxu0 %v3339
    %v3341 = vand.u32 %v1509, 4294901760
    %v3342 = vsub.f32 %v1509, %v3341
    %v3343 = vand.u32 %v3342, 4294901760
    %v3344 = vsub.f32 %v3342, %v3343
    %v3345 = vand.u32 %v3344, 4294901760
    %3346 = vmatprep.subr.mxu0 %v3345
    %v3347 = vand.u32 %v1508, 4294901760
    %v3348 = vsub.f32 %v1508, %v3347
    %v3349 = vand.u32 %v3348, 4294901760
    %v3350 = vsub.f32 %v3348, %v3349
    %v3351 = vand.u32 %v3350, 4294901760
    %3352 = vmatpush2.msra.mxu0 %v3351
    %v3353 = vand.u32 %v1409, 4294901760
    %3354 = vmatprep.mubr.f32.mxu0 %v3353
    %v3355 = vand.u32 %v1408, 4294901760
    %3356 = vmatmul.mubr.f32.gmra.mxu0 %v3355
    %v3357 = vpop.f32.mrf.mxu0
    %v3358 = vadd.f32 %v2965, %v3357
    %v3359 = vpop.f32.mrf.mxu0
    %v3360 = vadd.f32 %v2967, %v3359
    %3361 = vdwg.mxu0
    %v3362 = vand.u32 %v1507, 4294901760
    %v3363 = vsub.f32 %v1507, %v3362
    %3364 = vmatprep.subr.mxu0 %v3363
    %v3365 = vand.u32 %v1506, 4294901760
    %v3366 = vsub.f32 %v1506, %v3365
    %3367 = vmatpush1.msra.mxu0 %v3366
    %v3368 = vand.u32 %v1505, 4294901760
    %v3369 = vsub.f32 %v1505, %v3368
    %3370 = vmatprep.subr.mxu0 %v3369
    %v3371 = vand.u32 %v1504, 4294901760
    %v3372 = vsub.f32 %v1504, %v3371
    %3373 = vmatpush1.msra.mxu0 %v3372
    %v3374 = vand.u32 %v1503, 4294901760
    %v3375 = vsub.f32 %v1503, %v3374
    %3376 = vmatprep.subr.mxu0 %v3375
    %v3377 = vand.u32 %v1502, 4294901760
    %v3378 = vsub.f32 %v1502, %v3377
    %3379 = vmatpush1.msra.mxu0 %v3378
    %v3380 = vand.u32 %v1501, 4294901760
    %v3381 = vsub.f32 %v1501, %v3380
    %3382 = vmatprep.subr.mxu0 %v3381
    %v3383 = vand.u32 %v1500, 4294901760
    %v3384 = vsub.f32 %v1500, %v3383
    %3385 = vmatpush1.msra.mxu0 %v3384
    %v3386 = vand.u32 %v1499, 4294901760
    %v3387 = vsub.f32 %v1499, %v3386
    %3388 = vmatprep.subr.mxu0 %v3387
    %v3389 = vand.u32 %v1498, 4294901760
    %v3390 = vsub.f32 %v1498, %v3389
    %3391 = vmatpush1.msra.mxu0 %v3390
    %v3392 = vand.u32 %v1497, 4294901760
    %v3393 = vsub.f32 %v1497, %v3392
    %3394 = vmatprep.subr.mxu0 %v3393
    %v3395 = vand.u32 %v1496, 4294901760
    %v3396 = vsub.f32 %v1496, %v3395
    %3397 = vmatpush1.msra.mxu0 %v3396
    %v3398 = vand.u32 %v1495, 4294901760
    %v3399 = vsub.f32 %v1495, %v3398
    %3400 = vmatprep.subr.mxu0 %v3399
    %v3401 = vand.u32 %v1494, 4294901760
    %v3402 = vsub.f32 %v1494, %v3401
    %3403 = vmatpush1.msra.mxu0 %v3402
    %v3404 = vand.u32 %v1493, 4294901760
    %v3405 = vsub.f32 %v1493, %v3404
    %3406 = vmatprep.subr.mxu0 %v3405
    %v3407 = vand.u32 %v1492, 4294901760
    %v3408 = vsub.f32 %v1492, %v3407
    %3409 = vmatpush1.msra.mxu0 %v3408
    %v3410 = vand.u32 %v1491, 4294901760
    %v3411 = vsub.f32 %v1491, %v3410
    %3412 = vmatprep.subr.mxu0 %v3411
    %v3413 = vand.u32 %v1490, 4294901760
    %v3414 = vsub.f32 %v1490, %v3413
    %3415 = vmatpush1.msra.mxu0 %v3414
    %v3416 = vand.u32 %v1489, 4294901760
    %v3417 = vsub.f32 %v1489, %v3416
    %3418 = vmatprep.subr.mxu0 %v3417
    %v3419 = vand.u32 %v1488, 4294901760
    %v3420 = vsub.f32 %v1488, %v3419
    %3421 = vmatpush1.msra.mxu0 %v3420
    %v3422 = vand.u32 %v1487, 4294901760
    %v3423 = vsub.f32 %v1487, %v3422
    %3424 = vmatprep.subr.mxu0 %v3423
    %v3425 = vand.u32 %v1486, 4294901760
    %v3426 = vsub.f32 %v1486, %v3425
    %3427 = vmatpush1.msra.mxu0 %v3426
    %v3428 = vand.u32 %v1485, 4294901760
    %v3429 = vsub.f32 %v1485, %v3428
    %3430 = vmatprep.subr.mxu0 %v3429
    %v3431 = vand.u32 %v1484, 4294901760
    %v3432 = vsub.f32 %v1484, %v3431
    %3433 = vmatpush1.msra.mxu0 %v3432
    %v3434 = vand.u32 %v1483, 4294901760
    %v3435 = vsub.f32 %v1483, %v3434
    %3436 = vmatprep.subr.mxu0 %v3435
    %v3437 = vand.u32 %v1482, 4294901760
    %v3438 = vsub.f32 %v1482, %v3437
    %3439 = vmatpush1.msra.mxu0 %v3438
    %v3440 = vand.u32 %v1481, 4294901760
    %v3441 = vsub.f32 %v1481, %v3440
    %3442 = vmatprep.subr.mxu0 %v3441
    %v3443 = vand.u32 %v1480, 4294901760
    %v3444 = vsub.f32 %v1480, %v3443
    %3445 = vmatpush1.msra.mxu0 %v3444
    %v3446 = vand.u32 %v1479, 4294901760
    %v3447 = vsub.f32 %v1479, %v3446
    %3448 = vmatprep.subr.mxu0 %v3447
    %v3449 = vand.u32 %v1478, 4294901760
    %v3450 = vsub.f32 %v1478, %v3449
    %3451 = vmatpush1.msra.mxu0 %v3450
    %v3452 = vand.u32 %v1477, 4294901760
    %v3453 = vsub.f32 %v1477, %v3452
    %3454 = vmatprep.subr.mxu0 %v3453
    %v3455 = vand.u32 %v1476, 4294901760
    %v3456 = vsub.f32 %v1476, %v3455
    %3457 = vmatpush1.msra.mxu0 %v3456
    %v3458 = vand.u32 %v1539, 4294901760
    %v3459 = vsub.f32 %v1539, %v3458
    %3460 = vmatprep.subr.mxu0 %v3459
    %v3461 = vand.u32 %v1538, 4294901760
    %v3462 = vsub.f32 %v1538, %v3461
    %3463 = vmatpush2.msra.mxu0 %v3462
    %v3464 = vand.u32 %v1537, 4294901760
    %v3465 = vsub.f32 %v1537, %v3464
    %3466 = vmatprep.subr.mxu0 %v3465
    %v3467 = vand.u32 %v1536, 4294901760
    %v3468 = vsub.f32 %v1536, %v3467
    %3469 = vmatpush2.msra.mxu0 %v3468
    %v3470 = vand.u32 %v1535, 4294901760
    %v3471 = vsub.f32 %v1535, %v3470
    %3472 = vmatprep.subr.mxu0 %v3471
    %v3473 = vand.u32 %v1534, 4294901760
    %v3474 = vsub.f32 %v1534, %v3473
    %3475 = vmatpush2.msra.mxu0 %v3474
    %v3476 = vand.u32 %v1533, 4294901760
    %v3477 = vsub.f32 %v1533, %v3476
    %3478 = vmatprep.subr.mxu0 %v3477
    %v3479 = vand.u32 %v1532, 4294901760
    %v3480 = vsub.f32 %v1532, %v3479
    %3481 = vmatpush2.msra.mxu0 %v3480
    %v3482 = vand.u32 %v1531, 4294901760
    %v3483 = vsub.f32 %v1531, %v3482
    %3484 = vmatprep.subr.mxu0 %v3483
    %v3485 = vand.u32 %v1530, 4294901760
    %v3486 = vsub.f32 %v1530, %v3485
    %3487 = vmatpush2.msra.mxu0 %v3486
    %v3488 = vand.u32 %v1529, 4294901760
    %v3489 = vsub.f32 %v1529, %v3488
    %3490 = vmatprep.subr.mxu0 %v3489
    %v3491 = vand.u32 %v1528, 4294901760
    %v3492 = vsub.f32 %v1528, %v3491
    %3493 = vmatpush2.msra.mxu0 %v3492
    %v3494 = vand.u32 %v1527, 4294901760
    %v3495 = vsub.f32 %v1527, %v3494
    %3496 = vmatprep.subr.mxu0 %v3495
    %v3497 = vand.u32 %v1526, 4294901760
    %v3498 = vsub.f32 %v1526, %v3497
    %3499 = vmatpush2.msra.mxu0 %v3498
    %v3500 = vand.u32 %v1525, 4294901760
    %v3501 = vsub.f32 %v1525, %v3500
    %3502 = vmatprep.subr.mxu0 %v3501
    %v3503 = vand.u32 %v1524, 4294901760
    %v3504 = vsub.f32 %v1524, %v3503
    %3505 = vmatpush2.msra.mxu0 %v3504
    %v3506 = vand.u32 %v1523, 4294901760
    %v3507 = vsub.f32 %v1523, %v3506
    %3508 = vmatprep.subr.mxu0 %v3507
    %v3509 = vand.u32 %v1522, 4294901760
    %v3510 = vsub.f32 %v1522, %v3509
    %3511 = vmatpush2.msra.mxu0 %v3510
    %v3512 = vand.u32 %v1521, 4294901760
    %v3513 = vsub.f32 %v1521, %v3512
    %3514 = vmatprep.subr.mxu0 %v3513
    %v3515 = vand.u32 %v1520, 4294901760
    %v3516 = vsub.f32 %v1520, %v3515
    %3517 = vmatpush2.msra.mxu0 %v3516
    %v3518 = vand.u32 %v1519, 4294901760
    %v3519 = vsub.f32 %v1519, %v3518
    %3520 = vmatprep.subr.mxu0 %v3519
    %v3521 = vand.u32 %v1518, 4294901760
    %v3522 = vsub.f32 %v1518, %v3521
    %3523 = vmatpush2.msra.mxu0 %v3522
    %v3524 = vand.u32 %v1517, 4294901760
    %v3525 = vsub.f32 %v1517, %v3524
    %3526 = vmatprep.subr.mxu0 %v3525
    %v3527 = vand.u32 %v1516, 4294901760
    %v3528 = vsub.f32 %v1516, %v3527
    %3529 = vmatpush2.msra.mxu0 %v3528
    %v3530 = vand.u32 %v1515, 4294901760
    %v3531 = vsub.f32 %v1515, %v3530
    %3532 = vmatprep.subr.mxu0 %v3531
    %v3533 = vand.u32 %v1514, 4294901760
    %v3534 = vsub.f32 %v1514, %v3533
    %3535 = vmatpush2.msra.mxu0 %v3534
    %v3536 = vand.u32 %v1513, 4294901760
    %v3537 = vsub.f32 %v1513, %v3536
    %3538 = vmatprep.subr.mxu0 %v3537
    %v3539 = vand.u32 %v1512, 4294901760
    %v3540 = vsub.f32 %v1512, %v3539
    %3541 = vmatpush2.msra.mxu0 %v3540
    %v3542 = vand.u32 %v1511, 4294901760
    %v3543 = vsub.f32 %v1511, %v3542
    %3544 = vmatprep.subr.mxu0 %v3543
    %v3545 = vand.u32 %v1510, 4294901760
    %v3546 = vsub.f32 %v1510, %v3545
    %3547 = vmatpush2.msra.mxu0 %v3546
    %v3548 = vand.u32 %v1509, 4294901760
    %v3549 = vsub.f32 %v1509, %v3548
    %3550 = vmatprep.subr.mxu0 %v3549
    %v3551 = vand.u32 %v1508, 4294901760
    %v3552 = vsub.f32 %v1508, %v3551
    %3553 = vmatpush2.msra.mxu0 %v3552
    %v3554 = vand.u32 %v1409, 4294901760
    %v3555 = vsub.f32 %v1409, %v3554
    %3556 = vmatprep.mubr.f32.mxu0 %v3555
    %v3557 = vand.u32 %v1408, 4294901760
    %v3558 = vsub.f32 %v1408, %v3557
    %3559 = vmatmul.mubr.f32.gmra.mxu0 %v3558
    %v3560 = vpop.f32.mrf.mxu0
    %v3561 = vadd.f32 %v3358, %v3560
    %v3562 = vpop.f32.mrf.mxu0
    %v3563 = vadd.f32 %v3360, %v3562
    %3564 = vdwg.mxu0
    %v3565 = vand.u32 %v1507, 4294901760
    %3566 = vmatprep.subr.mxu0 %v3565
    %v3567 = vand.u32 %v1506, 4294901760
    %3568 = vmatpush1.msra.mxu0 %v3567
    %v3569 = vand.u32 %v1505, 4294901760
    %3570 = vmatprep.subr.mxu0 %v3569
    %v3571 = vand.u32 %v1504, 4294901760
    %3572 = vmatpush1.msra.mxu0 %v3571
    %v3573 = vand.u32 %v1503, 4294901760
    %3574 = vmatprep.subr.mxu0 %v3573
    %v3575 = vand.u32 %v1502, 4294901760
    %3576 = vmatpush1.msra.mxu0 %v3575
    %v3577 = vand.u32 %v1501, 4294901760
    %3578 = vmatprep.subr.mxu0 %v3577
    %v3579 = vand.u32 %v1500, 4294901760
    %3580 = vmatpush1.msra.mxu0 %v3579
    %v3581 = vand.u32 %v1499, 4294901760
    %3582 = vmatprep.subr.mxu0 %v3581
    %v3583 = vand.u32 %v1498, 4294901760
    %3584 = vmatpush1.msra.mxu0 %v3583
    %v3585 = vand.u32 %v1497, 4294901760
    %3586 = vmatprep.subr.mxu0 %v3585
    %v3587 = vand.u32 %v1496, 4294901760
    %3588 = vmatpush1.msra.mxu0 %v3587
    %v3589 = vand.u32 %v1495, 4294901760
    %3590 = vmatprep.subr.mxu0 %v3589
    %v3591 = vand.u32 %v1494, 4294901760
    %3592 = vmatpush1.msra.mxu0 %v3591
    %v3593 = vand.u32 %v1493, 4294901760
    %3594 = vmatprep.subr.mxu0 %v3593
    %v3595 = vand.u32 %v1492, 4294901760
    %3596 = vmatpush1.msra.mxu0 %v3595
    %v3597 = vand.u32 %v1491, 4294901760
    %3598 = vmatprep.subr.mxu0 %v3597
    %v3599 = vand.u32 %v1490, 4294901760
    %3600 = vmatpush1.msra.mxu0 %v3599
    %v3601 = vand.u32 %v1489, 4294901760
    %3602 = vmatprep.subr.mxu0 %v3601
    %v3603 = vand.u32 %v1488, 4294901760
    %3604 = vmatpush1.msra.mxu0 %v3603
    %v3605 = vand.u32 %v1487, 4294901760
    %3606 = vmatprep.subr.mxu0 %v3605
    %v3607 = vand.u32 %v1486, 4294901760
    %3608 = vmatpush1.msra.mxu0 %v3607
    %v3609 = vand.u32 %v1485, 4294901760
    %3610 = vmatprep.subr.mxu0 %v3609
    %v3611 = vand.u32 %v1484, 4294901760
    %3612 = vmatpush1.msra.mxu0 %v3611
    %v3613 = vand.u32 %v1483, 4294901760
    %3614 = vmatprep.subr.mxu0 %v3613
    %v3615 = vand.u32 %v1482, 4294901760
    %3616 = vmatpush1.msra.mxu0 %v3615
    %v3617 = vand.u32 %v1481, 4294901760
    %3618 = vmatprep.subr.mxu0 %v3617
    %v3619 = vand.u32 %v1480, 4294901760
    %3620 = vmatpush1.msra.mxu0 %v3619
    %v3621 = vand.u32 %v1479, 4294901760
    %3622 = vmatprep.subr.mxu0 %v3621
    %v3623 = vand.u32 %v1478, 4294901760
    %3624 = vmatpush1.msra.mxu0 %v3623
    %v3625 = vand.u32 %v1477, 4294901760
    %3626 = vmatprep.subr.mxu0 %v3625
    %v3627 = vand.u32 %v1476, 4294901760
    %3628 = vmatpush1.msra.mxu0 %v3627
    %v3629 = vand.u32 %v1539, 4294901760
    %3630 = vmatprep.subr.mxu0 %v3629
    %v3631 = vand.u32 %v1538, 4294901760
    %3632 = vmatpush2.msra.mxu0 %v3631
    %v3633 = vand.u32 %v1537, 4294901760
    %3634 = vmatprep.subr.mxu0 %v3633
    %v3635 = vand.u32 %v1536, 4294901760
    %3636 = vmatpush2.msra.mxu0 %v3635
    %v3637 = vand.u32 %v1535, 4294901760
    %3638 = vmatprep.subr.mxu0 %v3637
    %v3639 = vand.u32 %v1534, 4294901760
    %3640 = vmatpush2.msra.mxu0 %v3639
    %v3641 = vand.u32 %v1533, 4294901760
    %3642 = vmatprep.subr.mxu0 %v3641
    %v3643 = vand.u32 %v1532, 4294901760
    %3644 = vmatpush2.msra.mxu0 %v3643
    %v3645 = vand.u32 %v1531, 4294901760
    %3646 = vmatprep.subr.mxu0 %v3645
    %v3647 = vand.u32 %v1530, 4294901760
    %3648 = vmatpush2.msra.mxu0 %v3647
    %v3649 = vand.u32 %v1529, 4294901760
    %3650 = vmatprep.subr.mxu0 %v3649
    %v3651 = vand.u32 %v1528, 4294901760
    %3652 = vmatpush2.msra.mxu0 %v3651
    %v3653 = vand.u32 %v1527, 4294901760
    %3654 = vmatprep.subr.mxu0 %v3653
    %v3655 = vand.u32 %v1526, 4294901760
    %3656 = vmatpush2.msra.mxu0 %v3655
    %v3657 = vand.u32 %v1525, 4294901760
    %3658 = vmatprep.subr.mxu0 %v3657
    %v3659 = vand.u32 %v1524, 4294901760
    %3660 = vmatpush2.msra.mxu0 %v3659
    %v3661 = vand.u32 %v1523, 4294901760
    %3662 = vmatprep.subr.mxu0 %v3661
    %v3663 = vand.u32 %v1522, 4294901760
    %3664 = vmatpush2.msra.mxu0 %v3663
    %v3665 = vand.u32 %v1521, 4294901760
    %3666 = vmatprep.subr.mxu0 %v3665
    %v3667 = vand.u32 %v1520, 4294901760
    %3668 = vmatpush2.msra.mxu0 %v3667
    %v3669 = vand.u32 %v1519, 4294901760
    %3670 = vmatprep.subr.mxu0 %v3669
    %v3671 = vand.u32 %v1518, 4294901760
    %3672 = vmatpush2.msra.mxu0 %v3671
    %v3673 = vand.u32 %v1517, 4294901760
    %3674 = vmatprep.subr.mxu0 %v3673
    %v3675 = vand.u32 %v1516, 4294901760
    %3676 = vmatpush2.msra.mxu0 %v3675
    %v3677 = vand.u32 %v1515, 4294901760
    %3678 = vmatprep.subr.mxu0 %v3677
    %v3679 = vand.u32 %v1514, 4294901760
    %3680 = vmatpush2.msra.mxu0 %v3679
    %v3681 = vand.u32 %v1513, 4294901760
    %3682 = vmatprep.subr.mxu0 %v3681
    %v3683 = vand.u32 %v1512, 4294901760
    %3684 = vmatpush2.msra.mxu0 %v3683
    %v3685 = vand.u32 %v1511, 4294901760
    %3686 = vmatprep.subr.mxu0 %v3685
    %v3687 = vand.u32 %v1510, 4294901760
    %3688 = vmatpush2.msra.mxu0 %v3687
    %v3689 = vand.u32 %v1509, 4294901760
    %3690 = vmatprep.subr.mxu0 %v3689
    %v3691 = vand.u32 %v1508, 4294901760
    %3692 = vmatpush2.msra.mxu0 %v3691
    %v3693 = vand.u32 %v1409, 4294901760
    %v3694 = vsub.f32 %v1409, %v3693
    %v3695 = vand.u32 %v3694, 4294901760
    %3696 = vmatprep.mubr.f32.mxu0 %v3695
    %v3697 = vand.u32 %v1408, 4294901760
    %v3698 = vsub.f32 %v1408, %v3697
    %v3699 = vand.u32 %v3698, 4294901760
    %3700 = vmatmul.mubr.f32.gmra.mxu0 %v3699
    %v3701 = vpop.f32.mrf.mxu0
    %v3702 = vadd.f32 %v3561, %v3701
    %v3703 = vpop.f32.mrf.mxu0
    %v3704 = vadd.f32 %v3563, %v3703
    %3705 = vdwg.mxu0
    %v3706 = vand.u32 %v1507, 4294901760
    %v3707 = vsub.f32 %v1507, %v3706
    %v3708 = vand.u32 %v3707, 4294901760
    %3709 = vmatprep.subr.mxu0 %v3708
    %v3710 = vand.u32 %v1506, 4294901760
    %v3711 = vsub.f32 %v1506, %v3710
    %v3712 = vand.u32 %v3711, 4294901760
    %3713 = vmatpush1.msra.mxu0 %v3712
    %v3714 = vand.u32 %v1505, 4294901760
    %v3715 = vsub.f32 %v1505, %v3714
    %v3716 = vand.u32 %v3715, 4294901760
    %3717 = vmatprep.subr.mxu0 %v3716
    %v3718 = vand.u32 %v1504, 4294901760
    %v3719 = vsub.f32 %v1504, %v3718
    %v3720 = vand.u32 %v3719, 4294901760
    %3721 = vmatpush1.msra.mxu0 %v3720
    %v3722 = vand.u32 %v1503, 4294901760
    %v3723 = vsub.f32 %v1503, %v3722
    %v3724 = vand.u32 %v3723, 4294901760
    %3725 = vmatprep.subr.mxu0 %v3724
    %v3726 = vand.u32 %v1502, 4294901760
    %v3727 = vsub.f32 %v1502, %v3726
    %v3728 = vand.u32 %v3727, 4294901760
    %3729 = vmatpush1.msra.mxu0 %v3728
    %v3730 = vand.u32 %v1501, 4294901760
    %v3731 = vsub.f32 %v1501, %v3730
    %v3732 = vand.u32 %v3731, 4294901760
    %3733 = vmatprep.subr.mxu0 %v3732
    %v3734 = vand.u32 %v1500, 4294901760
    %v3735 = vsub.f32 %v1500, %v3734
    %v3736 = vand.u32 %v3735, 4294901760
    %3737 = vmatpush1.msra.mxu0 %v3736
    %v3738 = vand.u32 %v1499, 4294901760
    %v3739 = vsub.f32 %v1499, %v3738
    %v3740 = vand.u32 %v3739, 4294901760
    %3741 = vmatprep.subr.mxu0 %v3740
    %v3742 = vand.u32 %v1498, 4294901760
    %v3743 = vsub.f32 %v1498, %v3742
    %v3744 = vand.u32 %v3743, 4294901760
    %3745 = vmatpush1.msra.mxu0 %v3744
    %v3746 = vand.u32 %v1497, 4294901760
    %v3747 = vsub.f32 %v1497, %v3746
    %v3748 = vand.u32 %v3747, 4294901760
    %3749 = vmatprep.subr.mxu0 %v3748
    %v3750 = vand.u32 %v1496, 4294901760
    %v3751 = vsub.f32 %v1496, %v3750
    %v3752 = vand.u32 %v3751, 4294901760
    %3753 = vmatpush1.msra.mxu0 %v3752
    %v3754 = vand.u32 %v1495, 4294901760
    %v3755 = vsub.f32 %v1495, %v3754
    %v3756 = vand.u32 %v3755, 4294901760
    %3757 = vmatprep.subr.mxu0 %v3756
    %v3758 = vand.u32 %v1494, 4294901760
    %v3759 = vsub.f32 %v1494, %v3758
    %v3760 = vand.u32 %v3759, 4294901760
    %3761 = vmatpush1.msra.mxu0 %v3760
    %v3762 = vand.u32 %v1493, 4294901760
    %v3763 = vsub.f32 %v1493, %v3762
    %v3764 = vand.u32 %v3763, 4294901760
    %3765 = vmatprep.subr.mxu0 %v3764
    %v3766 = vand.u32 %v1492, 4294901760
    %v3767 = vsub.f32 %v1492, %v3766
    %v3768 = vand.u32 %v3767, 4294901760
    %3769 = vmatpush1.msra.mxu0 %v3768
    %v3770 = vand.u32 %v1491, 4294901760
    %v3771 = vsub.f32 %v1491, %v3770
    %v3772 = vand.u32 %v3771, 4294901760
    %3773 = vmatprep.subr.mxu0 %v3772
    %v3774 = vand.u32 %v1490, 4294901760
    %v3775 = vsub.f32 %v1490, %v3774
    %v3776 = vand.u32 %v3775, 4294901760
    %3777 = vmatpush1.msra.mxu0 %v3776
    %v3778 = vand.u32 %v1489, 4294901760
    %v3779 = vsub.f32 %v1489, %v3778
    %v3780 = vand.u32 %v3779, 4294901760
    %3781 = vmatprep.subr.mxu0 %v3780
    %v3782 = vand.u32 %v1488, 4294901760
    %v3783 = vsub.f32 %v1488, %v3782
    %v3784 = vand.u32 %v3783, 4294901760
    %3785 = vmatpush1.msra.mxu0 %v3784
    %v3786 = vand.u32 %v1487, 4294901760
    %v3787 = vsub.f32 %v1487, %v3786
    %v3788 = vand.u32 %v3787, 4294901760
    %3789 = vmatprep.subr.mxu0 %v3788
    %v3790 = vand.u32 %v1486, 4294901760
    %v3791 = vsub.f32 %v1486, %v3790
    %v3792 = vand.u32 %v3791, 4294901760
    %3793 = vmatpush1.msra.mxu0 %v3792
    %v3794 = vand.u32 %v1485, 4294901760
    %v3795 = vsub.f32 %v1485, %v3794
    %v3796 = vand.u32 %v3795, 4294901760
    %3797 = vmatprep.subr.mxu0 %v3796
    %v3798 = vand.u32 %v1484, 4294901760
    %v3799 = vsub.f32 %v1484, %v3798
    %v3800 = vand.u32 %v3799, 4294901760
    %3801 = vmatpush1.msra.mxu0 %v3800
    %v3802 = vand.u32 %v1483, 4294901760
    %v3803 = vsub.f32 %v1483, %v3802
    %v3804 = vand.u32 %v3803, 4294901760
    %3805 = vmatprep.subr.mxu0 %v3804
    %v3806 = vand.u32 %v1482, 4294901760
    %v3807 = vsub.f32 %v1482, %v3806
    %v3808 = vand.u32 %v3807, 4294901760
    %3809 = vmatpush1.msra.mxu0 %v3808
    %v3810 = vand.u32 %v1481, 4294901760
    %v3811 = vsub.f32 %v1481, %v3810
    %v3812 = vand.u32 %v3811, 4294901760
    %3813 = vmatprep.subr.mxu0 %v3812
    %v3814 = vand.u32 %v1480, 4294901760
    %v3815 = vsub.f32 %v1480, %v3814
    %v3816 = vand.u32 %v3815, 4294901760
    %3817 = vmatpush1.msra.mxu0 %v3816
    %v3818 = vand.u32 %v1479, 4294901760
    %v3819 = vsub.f32 %v1479, %v3818
    %v3820 = vand.u32 %v3819, 4294901760
    %3821 = vmatprep.subr.mxu0 %v3820
    %v3822 = vand.u32 %v1478, 4294901760
    %v3823 = vsub.f32 %v1478, %v3822
    %v3824 = vand.u32 %v3823, 4294901760
    %3825 = vmatpush1.msra.mxu0 %v3824
    %v3826 = vand.u32 %v1477, 4294901760
    %v3827 = vsub.f32 %v1477, %v3826
    %v3828 = vand.u32 %v3827, 4294901760
    %3829 = vmatprep.subr.mxu0 %v3828
    %v3830 = vand.u32 %v1476, 4294901760
    %v3831 = vsub.f32 %v1476, %v3830
    %v3832 = vand.u32 %v3831, 4294901760
    %3833 = vmatpush1.msra.mxu0 %v3832
    %v3834 = vand.u32 %v1539, 4294901760
    %v3835 = vsub.f32 %v1539, %v3834
    %v3836 = vand.u32 %v3835, 4294901760
    %3837 = vmatprep.subr.mxu0 %v3836
    %v3838 = vand.u32 %v1538, 4294901760
    %v3839 = vsub.f32 %v1538, %v3838
    %v3840 = vand.u32 %v3839, 4294901760
    %3841 = vmatpush2.msra.mxu0 %v3840
    %v3842 = vand.u32 %v1537, 4294901760
    %v3843 = vsub.f32 %v1537, %v3842
    %v3844 = vand.u32 %v3843, 4294901760
    %3845 = vmatprep.subr.mxu0 %v3844
    %v3846 = vand.u32 %v1536, 4294901760
    %v3847 = vsub.f32 %v1536, %v3846
    %v3848 = vand.u32 %v3847, 4294901760
    %3849 = vmatpush2.msra.mxu0 %v3848
    %v3850 = vand.u32 %v1535, 4294901760
    %v3851 = vsub.f32 %v1535, %v3850
    %v3852 = vand.u32 %v3851, 4294901760
    %3853 = vmatprep.subr.mxu0 %v3852
    %v3854 = vand.u32 %v1534, 4294901760
    %v3855 = vsub.f32 %v1534, %v3854
    %v3856 = vand.u32 %v3855, 4294901760
    %3857 = vmatpush2.msra.mxu0 %v3856
    %v3858 = vand.u32 %v1533, 4294901760
    %v3859 = vsub.f32 %v1533, %v3858
    %v3860 = vand.u32 %v3859, 4294901760
    %3861 = vmatprep.subr.mxu0 %v3860
    %v3862 = vand.u32 %v1532, 4294901760
    %v3863 = vsub.f32 %v1532, %v3862
    %v3864 = vand.u32 %v3863, 4294901760
    %3865 = vmatpush2.msra.mxu0 %v3864
    %v3866 = vand.u32 %v1531, 4294901760
    %v3867 = vsub.f32 %v1531, %v3866
    %v3868 = vand.u32 %v3867, 4294901760
    %3869 = vmatprep.subr.mxu0 %v3868
    %v3870 = vand.u32 %v1530, 4294901760
    %v3871 = vsub.f32 %v1530, %v3870
    %v3872 = vand.u32 %v3871, 4294901760
    %3873 = vmatpush2.msra.mxu0 %v3872
    %v3874 = vand.u32 %v1529, 4294901760
    %v3875 = vsub.f32 %v1529, %v3874
    %v3876 = vand.u32 %v3875, 4294901760
    %3877 = vmatprep.subr.mxu0 %v3876
    %v3878 = vand.u32 %v1528, 4294901760
    %v3879 = vsub.f32 %v1528, %v3878
    %v3880 = vand.u32 %v3879, 4294901760
    %3881 = vmatpush2.msra.mxu0 %v3880
    %v3882 = vand.u32 %v1527, 4294901760
    %v3883 = vsub.f32 %v1527, %v3882
    %v3884 = vand.u32 %v3883, 4294901760
    %3885 = vmatprep.subr.mxu0 %v3884
    %v3886 = vand.u32 %v1526, 4294901760
    %v3887 = vsub.f32 %v1526, %v3886
    %v3888 = vand.u32 %v3887, 4294901760
    %3889 = vmatpush2.msra.mxu0 %v3888
    %v3890 = vand.u32 %v1525, 4294901760
    %v3891 = vsub.f32 %v1525, %v3890
    %v3892 = vand.u32 %v3891, 4294901760
    %3893 = vmatprep.subr.mxu0 %v3892
    %v3894 = vand.u32 %v1524, 4294901760
    %v3895 = vsub.f32 %v1524, %v3894
    %v3896 = vand.u32 %v3895, 4294901760
    %3897 = vmatpush2.msra.mxu0 %v3896
    %v3898 = vand.u32 %v1523, 4294901760
    %v3899 = vsub.f32 %v1523, %v3898
    %v3900 = vand.u32 %v3899, 4294901760
    %3901 = vmatprep.subr.mxu0 %v3900
    %v3902 = vand.u32 %v1522, 4294901760
    %v3903 = vsub.f32 %v1522, %v3902
    %v3904 = vand.u32 %v3903, 4294901760
    %3905 = vmatpush2.msra.mxu0 %v3904
    %v3906 = vand.u32 %v1521, 4294901760
    %v3907 = vsub.f32 %v1521, %v3906
    %v3908 = vand.u32 %v3907, 4294901760
    %3909 = vmatprep.subr.mxu0 %v3908
    %v3910 = vand.u32 %v1520, 4294901760
    %v3911 = vsub.f32 %v1520, %v3910
    %v3912 = vand.u32 %v3911, 4294901760
    %3913 = vmatpush2.msra.mxu0 %v3912
    %v3914 = vand.u32 %v1519, 4294901760
    %v3915 = vsub.f32 %v1519, %v3914
    %v3916 = vand.u32 %v3915, 4294901760
    %3917 = vmatprep.subr.mxu0 %v3916
    %v3918 = vand.u32 %v1518, 4294901760
    %v3919 = vsub.f32 %v1518, %v3918
    %v3920 = vand.u32 %v3919, 4294901760
    %3921 = vmatpush2.msra.mxu0 %v3920
    %v3922 = vand.u32 %v1517, 4294901760
    %v3923 = vsub.f32 %v1517, %v3922
    %v3924 = vand.u32 %v3923, 4294901760
    %3925 = vmatprep.subr.mxu0 %v3924
    %v3926 = vand.u32 %v1516, 4294901760
    %v3927 = vsub.f32 %v1516, %v3926
    %v3928 = vand.u32 %v3927, 4294901760
    %3929 = vmatpush2.msra.mxu0 %v3928
    %v3930 = vand.u32 %v1515, 4294901760
    %v3931 = vsub.f32 %v1515, %v3930
    %v3932 = vand.u32 %v3931, 4294901760
    %3933 = vmatprep.subr.mxu0 %v3932
    %v3934 = vand.u32 %v1514, 4294901760
    %v3935 = vsub.f32 %v1514, %v3934
    %v3936 = vand.u32 %v3935, 4294901760
    %3937 = vmatpush2.msra.mxu0 %v3936
    %v3938 = vand.u32 %v1513, 4294901760
    %v3939 = vsub.f32 %v1513, %v3938
    %v3940 = vand.u32 %v3939, 4294901760
    %3941 = vmatprep.subr.mxu0 %v3940
    %v3942 = vand.u32 %v1512, 4294901760
    %v3943 = vsub.f32 %v1512, %v3942
    %v3944 = vand.u32 %v3943, 4294901760
    %3945 = vmatpush2.msra.mxu0 %v3944
    %v3946 = vand.u32 %v1511, 4294901760
    %v3947 = vsub.f32 %v1511, %v3946
    %v3948 = vand.u32 %v3947, 4294901760
    %3949 = vmatprep.subr.mxu0 %v3948
    %v3950 = vand.u32 %v1510, 4294901760
    %v3951 = vsub.f32 %v1510, %v3950
    %v3952 = vand.u32 %v3951, 4294901760
    %3953 = vmatpush2.msra.mxu0 %v3952
    %v3954 = vand.u32 %v1509, 4294901760
    %v3955 = vsub.f32 %v1509, %v3954
    %v3956 = vand.u32 %v3955, 4294901760
    %3957 = vmatprep.subr.mxu0 %v3956
    %v3958 = vand.u32 %v1508, 4294901760
    %v3959 = vsub.f32 %v1508, %v3958
    %v3960 = vand.u32 %v3959, 4294901760
    %3961 = vmatpush2.msra.mxu0 %v3960
    %v3962 = vand.u32 %v1409, 4294901760
    %3963 = vmatprep.mubr.f32.mxu0 %v3962
    %v3964 = vand.u32 %v1408, 4294901760
    %3965 = vmatmul.mubr.f32.gmra.mxu0 %v3964
    %v3966 = vpop.f32.mrf.mxu0
    %v3967 = vadd.f32 %v3702, %v3966
    %v3968 = vpop.f32.mrf.mxu0
    %v3969 = vadd.f32 %v3704, %v3968
    %3970 = vdwg.mxu0
    %v3971 = vand.u32 %v1507, 4294901760
    %3972 = vmatprep.subr.mxu0 %v3971
    %v3973 = vand.u32 %v1506, 4294901760
    %3974 = vmatpush1.msra.mxu0 %v3973
    %v3975 = vand.u32 %v1505, 4294901760
    %3976 = vmatprep.subr.mxu0 %v3975
    %v3977 = vand.u32 %v1504, 4294901760
    %3978 = vmatpush1.msra.mxu0 %v3977
    %v3979 = vand.u32 %v1503, 4294901760
    %3980 = vmatprep.subr.mxu0 %v3979
    %v3981 = vand.u32 %v1502, 4294901760
    %3982 = vmatpush1.msra.mxu0 %v3981
    %v3983 = vand.u32 %v1501, 4294901760
    %3984 = vmatprep.subr.mxu0 %v3983
    %v3985 = vand.u32 %v1500, 4294901760
    %3986 = vmatpush1.msra.mxu0 %v3985
    %v3987 = vand.u32 %v1499, 4294901760
    %3988 = vmatprep.subr.mxu0 %v3987
    %v3989 = vand.u32 %v1498, 4294901760
    %3990 = vmatpush1.msra.mxu0 %v3989
    %v3991 = vand.u32 %v1497, 4294901760
    %3992 = vmatprep.subr.mxu0 %v3991
    %v3993 = vand.u32 %v1496, 4294901760
    %3994 = vmatpush1.msra.mxu0 %v3993
    %v3995 = vand.u32 %v1495, 4294901760
    %3996 = vmatprep.subr.mxu0 %v3995
    %v3997 = vand.u32 %v1494, 4294901760
    %3998 = vmatpush1.msra.mxu0 %v3997
    %v3999 = vand.u32 %v1493, 4294901760
    %4000 = vmatprep.subr.mxu0 %v3999
    %v4001 = vand.u32 %v1492, 4294901760
    %4002 = vmatpush1.msra.mxu0 %v4001
    %v4003 = vand.u32 %v1491, 4294901760
    %4004 = vmatprep.subr.mxu0 %v4003
    %v4005 = vand.u32 %v1490, 4294901760
    %4006 = vmatpush1.msra.mxu0 %v4005
    %v4007 = vand.u32 %v1489, 4294901760
    %4008 = vmatprep.subr.mxu0 %v4007
    %v4009 = vand.u32 %v1488, 4294901760
    %4010 = vmatpush1.msra.mxu0 %v4009
    %v4011 = vand.u32 %v1487, 4294901760
    %4012 = vmatprep.subr.mxu0 %v4011
    %v4013 = vand.u32 %v1486, 4294901760
    %4014 = vmatpush1.msra.mxu0 %v4013
    %v4015 = vand.u32 %v1485, 4294901760
    %4016 = vmatprep.subr.mxu0 %v4015
    %v4017 = vand.u32 %v1484, 4294901760
    %4018 = vmatpush1.msra.mxu0 %v4017
    %v4019 = vand.u32 %v1483, 4294901760
    %4020 = vmatprep.subr.mxu0 %v4019
    %v4021 = vand.u32 %v1482, 4294901760
    %4022 = vmatpush1.msra.mxu0 %v4021
    %v4023 = vand.u32 %v1481, 4294901760
    %4024 = vmatprep.subr.mxu0 %v4023
    %v4025 = vand.u32 %v1480, 4294901760
    %4026 = vmatpush1.msra.mxu0 %v4025
    %v4027 = vand.u32 %v1479, 4294901760
    %4028 = vmatprep.subr.mxu0 %v4027
    %v4029 = vand.u32 %v1478, 4294901760
    %4030 = vmatpush1.msra.mxu0 %v4029
    %v4031 = vand.u32 %v1477, 4294901760
    %4032 = vmatprep.subr.mxu0 %v4031
    %v4033 = vand.u32 %v1476, 4294901760
    %4034 = vmatpush1.msra.mxu0 %v4033
    %v4035 = vand.u32 %v1539, 4294901760
    %4036 = vmatprep.subr.mxu0 %v4035
    %v4037 = vand.u32 %v1538, 4294901760
    %4038 = vmatpush2.msra.mxu0 %v4037
    %v4039 = vand.u32 %v1537, 4294901760
    %4040 = vmatprep.subr.mxu0 %v4039
    %v4041 = vand.u32 %v1536, 4294901760
    %4042 = vmatpush2.msra.mxu0 %v4041
    %v4043 = vand.u32 %v1535, 4294901760
    %4044 = vmatprep.subr.mxu0 %v4043
    %v4045 = vand.u32 %v1534, 4294901760
    %4046 = vmatpush2.msra.mxu0 %v4045
    %v4047 = vand.u32 %v1533, 4294901760
    %4048 = vmatprep.subr.mxu0 %v4047
    %v4049 = vand.u32 %v1532, 4294901760
    %4050 = vmatpush2.msra.mxu0 %v4049
    %v4051 = vand.u32 %v1531, 4294901760
    %4052 = vmatprep.subr.mxu0 %v4051
    %v4053 = vand.u32 %v1530, 4294901760
    %4054 = vmatpush2.msra.mxu0 %v4053
    %v4055 = vand.u32 %v1529, 4294901760
    %4056 = vmatprep.subr.mxu0 %v4055
    %v4057 = vand.u32 %v1528, 4294901760
    %4058 = vmatpush2.msra.mxu0 %v4057
    %v4059 = vand.u32 %v1527, 4294901760
    %4060 = vmatprep.subr.mxu0 %v4059
    %v4061 = vand.u32 %v1526, 4294901760
    %4062 = vmatpush2.msra.mxu0 %v4061
    %v4063 = vand.u32 %v1525, 4294901760
    %4064 = vmatprep.subr.mxu0 %v4063
    %v4065 = vand.u32 %v1524, 4294901760
    %4066 = vmatpush2.msra.mxu0 %v4065
    %v4067 = vand.u32 %v1523, 4294901760
    %4068 = vmatprep.subr.mxu0 %v4067
    %v4069 = vand.u32 %v1522, 4294901760
    %4070 = vmatpush2.msra.mxu0 %v4069
    %v4071 = vand.u32 %v1521, 4294901760
    %4072 = vmatprep.subr.mxu0 %v4071
    %v4073 = vand.u32 %v1520, 4294901760
    %4074 = vmatpush2.msra.mxu0 %v4073
    %v4075 = vand.u32 %v1519, 4294901760
    %4076 = vmatprep.subr.mxu0 %v4075
    %v4077 = vand.u32 %v1518, 4294901760
    %4078 = vmatpush2.msra.mxu0 %v4077
    %v4079 = vand.u32 %v1517, 4294901760
    %4080 = vmatprep.subr.mxu0 %v4079
    %v4081 = vand.u32 %v1516, 4294901760
    %4082 = vmatpush2.msra.mxu0 %v4081
    %v4083 = vand.u32 %v1515, 4294901760
    %4084 = vmatprep.subr.mxu0 %v4083
    %v4085 = vand.u32 %v1514, 4294901760
    %4086 = vmatpush2.msra.mxu0 %v4085
    %v4087 = vand.u32 %v1513, 4294901760
    %4088 = vmatprep.subr.mxu0 %v4087
    %v4089 = vand.u32 %v1512, 4294901760
    %4090 = vmatpush2.msra.mxu0 %v4089
    %v4091 = vand.u32 %v1511, 4294901760
    %4092 = vmatprep.subr.mxu0 %v4091
    %v4093 = vand.u32 %v1510, 4294901760
    %4094 = vmatpush2.msra.mxu0 %v4093
    %v4095 = vand.u32 %v1509, 4294901760
    %4096 = vmatprep.subr.mxu0 %v4095
    %v4097 = vand.u32 %v1508, 4294901760
    %4098 = vmatpush2.msra.mxu0 %v4097
    %v4099 = vand.u32 %v1409, 4294901760
    %4100 = vmatprep.mubr.f32.mxu0 %v4099
    %v4101 = vand.u32 %v1408, 4294901760
    %4102 = vmatmul.mubr.f32.gmra.mxu0 %v4101
    %v4103 = vpop.f32.mrf.mxu0
    %v4104 = vadd.f32 %v3967, %v4103
    %v4105 = vpop.f32.mrf.mxu0
    %v4106 = vadd.f32 %v3969, %v4105
    %4107 = vdwg.mxu0
    %v4108 = vxor.u32 %v4104, 2147483648
    %v4109 = vxor.u32 %v4106, 2147483648
    %v4110 = vmul.f32 %v4108, 1.442695
    %v4111 = vpow.pop %v4110
    %v4112 = vmul.f32 %v4109, 1.442695
    %v4113 = vpow.pop %v4112
    %v4114 = vadd.f32 %v4111, 1.0
    %v4115 = vadd.f32 %v4113, 1.0
    %v4116 = vrcp.pop %v4114
    %v4117 = vmul.f32 1.0, %v4116
    %v4118 = vrcp.pop %v4115
    %v4119 = vmul.f32 1.0, %v4118
    %v4122 = vcombine.low %v4117, %v4119
    %v4124 = vunpack.c.l.s4 1966171168
    %v4125 = vunpack.c.0.s8 %v4124
    %v4126 = vlaneseq
    %v4127 = vshrl.u32 %v4126, 7
    %v4128 = vsub.s32 %v4125, %v4127
    %v4129 = vrot.slane %v4122, %v4128
    %v4130 = vcombine.high %v4129, %v4129
    %v4132 = vunpack.c.l.s4 1966171168
    %v4133 = vunpack.c.0.s8 %v4132
    %v4134 = vlaneseq
    %v4135 = vshrl.u32 %v4134, 7
    %v4136 = vsub.s32 %v4133, %v4135
    %v4137 = vrot.slane %v4129, %v4136
    %v4139 = vunpack.c.l.s4 1966171168
    %v4140 = vunpack.c.0.s8 %v4139
    %v4141 = vlaneseq
    %v4142 = vshrl.u32 %v4141, 7
    %v4143 = vsub.s32 %v4140, %v4142
    %v4144 = vrot.slane %v4130, %v4143
    %v4145 = vlaneseq
    %v4146 = vshrl.u32 %v4145, 7
    %v4147 = vsub.s32 0, %v4146
    %v4148 = vrot.slane %v4137, %v4147
    %v4149 = vlaneseq
    %v4150 = vshrl.u32 %v4149, 7
    %v4151 = vsub.s32 1, %v4150
    %v4152 = vrot.slane %v4137, %v4151
    %v4153 = vlaneseq
    %v4154 = vshrl.u32 %v4153, 7
    %v4155 = vsub.s32 0, %v4154
    %v4156 = vrot.slane %v4144, %v4155
    %v4157 = vlaneseq
    %v4158 = vshrl.u32 %v4157, 7
    %v4159 = vsub.s32 1, %v4158
    %v4160 = vrot.slane %v4144, %v4159
    %v4165 = vmul.f32 %v1303, %v4148
    %v4166 = vmul.f32 %v1304, %v4152
    %v4167 = vmul.f32 %v1305, %v4148
    %v4168 = vmul.f32 %v1306, %v4152
    %v4169 = vmul.f32 %v1307, %v4148
    %v4170 = vmul.f32 %v1308, %v4152
    %v4171 = vmul.f32 %v1309, %v4148
    %v4172 = vmul.f32 %v1310, %v4152
    %v4173 = vmul.f32 %v1311, %v4156
    %v4174 = vmul.f32 %v1312, %v4160
    %v4175 = vmul.f32 %v1313, %v4156
    %v4176 = vmul.f32 %v1314, %v4160
    %v4177 = vmul.f32 %v1315, %v4156
    %v4178 = vmul.f32 %v1316, %v4160
    %v4179 = vmul.f32 %v1317, %v4156
    %v4180 = vmul.f32 %v1318, %v4160
    %4181 = vst [vmem:[#allocation7] sm:$0xff] %v4165
    %4182 = vst [vmem:[#allocation7 + $0x8] sm:$0xff] %v4166
    %4183 = vst [vmem:[#allocation7 + $0x10] sm:$0xff] %v4167
    %4184 = vst [vmem:[#allocation7 + $0x18] sm:$0xff] %v4168
    %4185 = vst [vmem:[#allocation7 + $0x20] sm:$0xff] %v4169
    %4186 = vst [vmem:[#allocation7 + $0x28] sm:$0xff] %v4170
    %4187 = vst [vmem:[#allocation7 + $0x30] sm:$0xff] %v4171
    %4188 = vst [vmem:[#allocation7 + $0x38] sm:$0xff] %v4172
    %4189 = vst [vmem:[#allocation7 + $0x40] sm:$0xff] %v4173
    %4190 = vst [vmem:[#allocation7 + $0x48] sm:$0xff] %v4174
    %4191 = vst [vmem:[#allocation7 + $0x50] sm:$0xff] %v4175
    %4192 = vst [vmem:[#allocation7 + $0x58] sm:$0xff] %v4176
    %4193 = vst [vmem:[#allocation7 + $0x60] sm:$0xff] %v4177
    %4194 = vst [vmem:[#allocation7 + $0x68] sm:$0xff] %v4178
    %4195 = vst [vmem:[#allocation7 + $0x70] sm:$0xff] %v4179
    %4196 = vst [vmem:[#allocation7 + $0x78] sm:$0xff] %v4180
    // Predicated region
    $region26: #{tpu_custom_call.1} parent=1 // pred_check
      _
    $region27: #{tpu_custom_call.1} parent=1 // pred_check_branch
      %4198 = sbr.rel (0) target = $region29
    $region28: #{tpu_custom_call.1} parent=1 // pred_region
      %s4200 = ssub.s32 2048, 2048
      %4201 = vsyncadd [#allocation4], %s4200
      %s4202 = sshll.u32 [#allocation7], 4
      %s4203 = int_to_ptr.vmem [resolvable:$true] %s4202
      %4208 = dma.vmem_to_hbm [thread:$0]  %s4203, 2048, %s4, [#allocation4], 256, 256, 16
    $region29: #{tpu_custom_call.1} parent=1 // pred_fallthru
      _
    // Predicated region
    $region30: #{tpu_custom_call.1} parent=1 // pred_check
      _
    $region31: #{tpu_custom_call.1} parent=1 // pred_check_branch
      %4210 = sbr.rel (0) target = $region33
    $region32: #{tpu_custom_call.1} parent=1 // pred_region
      %4211 = dma.done [#allocation4], 2048
    $region33: #{tpu_custom_call.1} parent=1 // pred_fallthru
      _
    %4212 = vsyncpa [#allocation3], 1
    %4213 = vsyncpa [#allocation6], 1
    %4214 = vsyncpa [#allocation4], 1

</llo_original>
